<compile_context>
chip_gen: v7x
topology: tpu7x:2x2x1
jax: 0.10.0
libtpu: 0.0.40
codegen_flags: <defaults>
</compile_context>

<pallas_src>
import jax
import jax.numpy as jnp
from jax.experimental import pallas as pl
from jax.experimental.pallas import tpu as pltpu


# --------------------------------------------------------------------------
# Fully fused forward kernel
# --------------------------------------------------------------------------
def _ae_fused_kernel(x_ref,
                     ew1, eb1, eg1, ebe1,
                     ew2, eb2, eg2, ebe2,
                     ew3, eb3,
                     dw1, db1, dg1, dbe1,
                     dw2, db2, dg2, dbe2,
                     dw3, db3,
                     o_ref):
    def linear(x_f32, w_ref, b_ref):
        # bf16 MXU matmul, f32 accumulation, f32 bias add.
        y = jnp.dot(x_f32.astype(jnp.bfloat16), w_ref[...],
                    preferred_element_type=jnp.float32)
        return y + b_ref[...]

    def ln_relu(y, g_ref, beta_ref):
        # One-pass LayerNorm stats: sum and sum-of-squares together.
        n = y.shape[-1]
        inv_n = 1.0 / n
        s1 = jnp.sum(y, axis=-1, keepdims=True)
        s2 = jnp.sum(y * y, axis=-1, keepdims=True)
        mean = s1 * inv_n
        var = jnp.maximum(s2 * inv_n - mean * mean, 0.0)
        # Fold gamma into the rsqrt scale -> single multiply-add affine.
        scale = g_ref[...] * jax.lax.rsqrt(var + 1e-5)
        return jnp.maximum((y - mean) * scale + beta_ref[...], 0.0)

    x = x_ref[...]
    # ---- encoder ----
    h = ln_relu(linear(x, ew1, eb1), eg1, ebe1)
    h = ln_relu(linear(h, ew2, eb2), eg2, ebe2)
    z = jnp.tanh(linear(h, ew3, eb3))            # latent stays VMEM-internal
    # ---- decoder ----
    h = ln_relu(linear(z, dw1, db1), dg1, dbe1)
    h = ln_relu(linear(h, dw2, db2), dg2, dbe2)
    o_ref[...] = jnp.tanh(linear(h, dw3, db3))


# --------------------------------------------------------------------------
# Wrapper: one pallas_call for the whole network
# --------------------------------------------------------------------------
_PARAM_ORDER = (
    "enc_w1", "enc_b1", "enc_g1", "enc_be1",
    "enc_w2", "enc_b2", "enc_g2", "enc_be2",
    "enc_w3", "enc_b3",
    "dec_w1", "dec_b1", "dec_g1", "dec_be1",
    "dec_w2", "dec_b2", "dec_g2", "dec_be2",
    "dec_w3", "dec_b3",
)


def ae_forward_fused(params, x):
    B, input_dim = x.shape

    # Batch tiling: single block for small batches, 256-row tiles otherwise
    # (keeps per-block activations far under v7x's 64 MiB VMEM budget).
    tile_b = 256 if (B > 256 and B % 256 == 0) else B
    grid = (B // tile_b,)

    def act_spec(n):
        return pl.BlockSpec((tile_b, n), lambda i: (i, 0))

    def param_spec(arr):
        # Constant block index -> weights stay resident across grid steps.
        return pl.BlockSpec(arr.shape, lambda i, _nd=arr.ndim: (0,) * _nd)

    ordered = [params[name] for name in _PARAM_ORDER]
    in_specs = [act_spec(input_dim)] + [param_spec(a) for a in ordered]

    return pl.pallas_call(
        _ae_fused_kernel,
        out_shape=jax.ShapeDtypeStruct((B, input_dim), jnp.float32),
        grid=grid,
        in_specs=in_specs,
        out_specs=act_spec(input_dim),
        compiler_params=pltpu.CompilerParams(
            dimension_semantics=("parallel",),
        ),
    )(x, *ordered)


# --------------------------------------------------------------------------
# Parameter construction (deterministic, synthetic; PyTorch-default init)
# --------------------------------------------------------------------------
def _linear_params(key, fan_in, fan_out):
    kw, kb = jax.random.split(key)
    scale = 1.0 / jnp.sqrt(fan_in)
    w = jax.random.uniform(kw, (fan_in, fan_out), jnp.float32, -scale, scale)
    b = jax.random.uniform(kb, (1, fan_out), jnp.float32, -scale, scale)
    return w.astype(jnp.bfloat16), b          # bf16 weights, f32 bias


def _ln_params(dim):
    return jnp.ones((1, dim), jnp.float32), jnp.zeros((1, dim), jnp.float32)


def init_ae_params(key, input_dim, hidden_dim, latent_dim):
    keys = jax.random.split(key, 6)
    p = {}
    # encoder
    p["enc_w1"], p["enc_b1"] = _linear_params(keys[0], input_dim, 1024)
    p["enc_g1"], p["enc_be1"] = _ln_params(1024)
    p["enc_w2"], p["enc_b2"] = _linear_params(keys[1], 1024, hidden_dim)
    p["enc_g2"], p["enc_be2"] = _ln_params(hidden_dim)
    p["enc_w3"], p["enc_b3"] = _linear_params(keys[2], hidden_dim, latent_dim)
    # decoder
    p["dec_w1"], p["dec_b1"] = _linear_params(keys[3], latent_dim, hidden_dim)
    p["dec_g1"], p["dec_be1"] = _ln_params(hidden_dim)
    p["dec_w2"], p["dec_b2"] = _linear_params(keys[4], hidden_dim, 1024)
    p["dec_g2"], p["dec_be2"] = _ln_params(1024)
    p["dec_w3"], p["dec_b3"] = _linear_params(keys[5], 1024, input_dim)
    return p


@jax.jit
def ae_forward(params, x):
    return ae_forward_fused(params, x)


# --------------------------------------------------------------------------
# Pure-JAX reference (same bf16-weight math) for a correctness sanity check
# --------------------------------------------------------------------------
def _ref_forward(p, x):
    def lin(a, w, b):
        return jnp.dot(a.astype(jnp.bfloat16), w,
                       preferred_element_type=jnp.float32) + b

    def ln_relu(y, g, be):
        m = y.mean(-1, keepdims=True)
        v = ((y - m) ** 2).mean(-1, keepdims=True)
        return jnp.maximum((y - m) * jax.lax.rsqrt(v + 1e-5) * g + be, 0.0)

    h = ln_relu(lin(x, p["enc_w1"], p["enc_b1"]), p["enc_g1"], p["enc_be1"])
    h = ln_relu(lin(h, p["enc_w2"], p["enc_b2"]), p["enc_g2"], p["enc_be2"])
    z = jnp.tanh(lin(h, p["enc_w3"], p["enc_b3"]))
    h = ln_relu(lin(z, p["dec_w1"], p["dec_b1"]), p["dec_g1"], p["dec_be1"])
    h = ln_relu(lin(h, p["dec_w2"], p["dec_b2"]), p["dec_g2"], p["dec_be2"])
    return jnp.tanh(lin(h, p["dec_w3"], p["dec_b3"]))


# --------------------------------------------------------------------------
if __name__ == "__main__":
    INPUT_DIM = 256
    HIDDEN_DIM = 128
    LATENT_DIM = 64
    BATCH = 8

    key = jax.random.PRNGKey(0)
    k_params, k_x = jax.random.split(key)

    params = init_ae_params(k_params, INPUT_DIM, HIDDEN_DIM, LATENT_DIM)
    x = jax.random.normal(k_x, (BATCH, INPUT_DIM), jnp.float32)

    out = ae_forward(params, x)
    out = jax.block_until_ready(out)

    ref = _ref_forward(params, x)
    assert out.shape == (BATCH, INPUT_DIM)
    assert jnp.allclose(out, ref, atol=2e-3, rtol=2e-3), "mismatch vs reference"

    # TODO(synk): Dropout layers are identity in inference mode and omitted.
    print("KERNEL_OK")
</pallas_src>

<mosaic_0001>
module attributes {stable_mosaic.version = 11 : i64} {
  func.func @_ae_fused_kernel(%arg0: i32, %arg1: memref<8x256xf32, #tpu.memory_space<vmem>>, %arg2: memref<256x1024xbf16, #tpu.memory_space<vmem>>, %arg3: memref<1x1024xf32, #tpu.memory_space<vmem>>, %arg4: memref<1x1024xf32, #tpu.memory_space<vmem>>, %arg5: memref<1x1024xf32, #tpu.memory_space<vmem>>, %arg6: memref<1024x128xbf16, #tpu.memory_space<vmem>>, %arg7: memref<1x128xf32, #tpu.memory_space<vmem>>, %arg8: memref<1x128xf32, #tpu.memory_space<vmem>>, %arg9: memref<1x128xf32, #tpu.memory_space<vmem>>, %arg10: memref<128x64xbf16, #tpu.memory_space<vmem>>, %arg11: memref<1x64xf32, #tpu.memory_space<vmem>>, %arg12: memref<64x128xbf16, #tpu.memory_space<vmem>>, %arg13: memref<1x128xf32, #tpu.memory_space<vmem>>, %arg14: memref<1x128xf32, #tpu.memory_space<vmem>>, %arg15: memref<1x128xf32, #tpu.memory_space<vmem>>, %arg16: memref<128x1024xbf16, #tpu.memory_space<vmem>>, %arg17: memref<1x1024xf32, #tpu.memory_space<vmem>>, %arg18: memref<1x1024xf32, #tpu.memory_space<vmem>>, %arg19: memref<1x1024xf32, #tpu.memory_space<vmem>>, %arg20: memref<1024x256xbf16, #tpu.memory_space<vmem>>, %arg21: memref<1x256xf32, #tpu.memory_space<vmem>>, %arg22: memref<8x256xf32, #tpu.memory_space<vmem>>) attributes {dimension_semantics = [#tpu.dimension_semantics<parallel>], iteration_bounds = array<i64: 1>, scalar_prefetch = 0 : i64, scratch_operands = 0 : i64, tpu.core_type = #tpu.core_type<tc>, window_params = [{transform_indices = @transform_0, window_bounds = array<i64: 8, 256>}, {pipeline_mode = #tpu.pipeline_mode<synchronous>, transform_indices = @transform_1, window_bounds = array<i64: 256, 1024>}, {pipeline_mode = #tpu.pipeline_mode<synchronous>, transform_indices = @transform_2, window_bounds = array<i64: 1, 1024>}, {pipeline_mode = #tpu.pipeline_mode<synchronous>, transform_indices = @transform_3, window_bounds = array<i64: 1, 1024>}, {pipeline_mode = #tpu.pipeline_mode<synchronous>, transform_indices = @transform_4, window_bounds = array<i64: 1, 1024>}, {pipeline_mode = #tpu.pipeline_mode<synchronous>, transform_indices = @transform_5, window_bounds = array<i64: 1024, 128>}, {pipeline_mode = #tpu.pipeline_mode<synchronous>, transform_indices = @transform_6, window_bounds = array<i64: 1, 128>}, {pipeline_mode = #tpu.pipeline_mode<synchronous>, transform_indices = @transform_7, window_bounds = array<i64: 1, 128>}, {pipeline_mode = #tpu.pipeline_mode<synchronous>, transform_indices = @transform_8, window_bounds = array<i64: 1, 128>}, {pipeline_mode = #tpu.pipeline_mode<synchronous>, transform_indices = @transform_9, window_bounds = array<i64: 128, 64>}, {pipeline_mode = #tpu.pipeline_mode<synchronous>, transform_indices = @transform_10, window_bounds = array<i64: 1, 64>}, {pipeline_mode = #tpu.pipeline_mode<synchronous>, transform_indices = @transform_11, window_bounds = array<i64: 64, 128>}, {pipeline_mode = #tpu.pipeline_mode<synchronous>, transform_indices = @transform_12, window_bounds = array<i64: 1, 128>}, {pipeline_mode = #tpu.pipeline_mode<synchronous>, transform_indices = @transform_13, window_bounds = array<i64: 1, 128>}, {pipeline_mode = #tpu.pipeline_mode<synchronous>, transform_indices = @transform_14, window_bounds = array<i64: 1, 128>}, {pipeline_mode = #tpu.pipeline_mode<synchronous>, transform_indices = @transform_15, window_bounds = array<i64: 128, 1024>}, {pipeline_mode = #tpu.pipeline_mode<synchronous>, transform_indices = @transform_16, window_bounds = array<i64: 1, 1024>}, {pipeline_mode = #tpu.pipeline_mode<synchronous>, transform_indices = @transform_17, window_bounds = array<i64: 1, 1024>}, {pipeline_mode = #tpu.pipeline_mode<synchronous>, transform_indices = @transform_18, window_bounds = array<i64: 1, 1024>}, {pipeline_mode = #tpu.pipeline_mode<synchronous>, transform_indices = @transform_19, window_bounds = array<i64: 1024, 256>}, {pipeline_mode = #tpu.pipeline_mode<synchronous>, transform_indices = @transform_20, window_bounds = array<i64: 1, 256>}, {transform_indices = @transform_21, window_bounds = array<i64: 8, 256>}]} {
    %c0 = arith.constant 0 : index
    %c0_0 = arith.constant 0 : index
    %0 = vector.load %arg1[%c0, %c0_0] : memref<8x256xf32, #tpu.memory_space<vmem>>, vector<8x256xf32>
    %1 = arith.truncf %0 : vector<8x256xf32> to vector<8x256xbf16>
    %c0_1 = arith.constant 0 : index
    %c0_2 = arith.constant 0 : index
    %2 = vector.load %arg2[%c0_1, %c0_2] : memref<256x1024xbf16, #tpu.memory_space<vmem>>, vector<256x1024xbf16>
    %cst = arith.constant dense<0.000000e+00> : vector<8x1024xf32>
    %3 = tpu.matmul %1, %2, %cst {dimension_numbers = #tpu.dot_dimension_numbers<[1], [0], [0], [1], [0, 0, 1, 1], [], []>} : vector<8x256xbf16>, vector<256x1024xbf16>, vector<8x1024xf32> -> vector<8x1024xf32>
    %c0_3 = arith.constant 0 : index
    %c0_4 = arith.constant 0 : index
    %4 = vector.load %arg3[%c0_3, %c0_4] : memref<1x1024xf32, #tpu.memory_space<vmem>>, vector<1x1024xf32>
    %5 = vector.broadcast %4 : vector<1x1024xf32> to vector<8x1024xf32>
    %6 = arith.addf %3, %5 : vector<8x1024xf32>
    %cst_5 = arith.constant dense<0.000000e+00> : vector<8xf32>
    %7 = vector.multi_reduction <add>, %6, %cst_5 [1] : vector<8x1024xf32> to vector<8xf32>
    %8 = vector.shape_cast %7 : vector<8xf32> to vector<8x1xf32>
    %9 = arith.mulf %6, %6 : vector<8x1024xf32>
    %cst_6 = arith.constant dense<0.000000e+00> : vector<8xf32>
    %10 = vector.multi_reduction <add>, %9, %cst_6 [1] : vector<8x1024xf32> to vector<8xf32>
    %11 = vector.shape_cast %10 : vector<8xf32> to vector<8x1xf32>
    %cst_7 = arith.constant 9.765625E-4 : f32
    %12 = vector.broadcast %cst_7 : f32 to vector<8x1xf32>
    %13 = arith.mulf %8, %12 : vector<8x1xf32>
    %cst_8 = arith.constant 9.765625E-4 : f32
    %14 = vector.broadcast %cst_8 : f32 to vector<8x1xf32>
    %15 = arith.mulf %11, %14 : vector<8x1xf32>
    %16 = arith.mulf %13, %13 : vector<8x1xf32>
    %17 = arith.subf %15, %16 : vector<8x1xf32>
    %cst_9 = arith.constant 0.000000e+00 : f32
    %18 = vector.broadcast %cst_9 : f32 to vector<8x1xf32>
    %19 = arith.maximumf %17, %18 : vector<8x1xf32>
    %c0_10 = arith.constant 0 : index
    %c0_11 = arith.constant 0 : index
    %20 = vector.load %arg4[%c0_10, %c0_11] : memref<1x1024xf32, #tpu.memory_space<vmem>>, vector<1x1024xf32>
    %cst_12 = arith.constant 9.99999974E-6 : f32
    %21 = vector.broadcast %cst_12 : f32 to vector<8x1xf32>
    %22 = arith.addf %19, %21 : vector<8x1xf32>
    %23 = math.rsqrt %22 : vector<8x1xf32>
    %24 = vector.broadcast %20 : vector<1x1024xf32> to vector<8x1024xf32>
    %25 = vector.broadcast %23 : vector<8x1xf32> to vector<8x1024xf32>
    %26 = arith.mulf %24, %25 : vector<8x1024xf32>
    %27 = vector.broadcast %13 : vector<8x1xf32> to vector<8x1024xf32>
    %28 = arith.subf %6, %27 : vector<8x1024xf32>
    %29 = arith.mulf %28, %26 : vector<8x1024xf32>
    %c0_13 = arith.constant 0 : index
    %c0_14 = arith.constant 0 : index
    %30 = vector.load %arg5[%c0_13, %c0_14] : memref<1x1024xf32, #tpu.memory_space<vmem>>, vector<1x1024xf32>
    %31 = vector.broadcast %30 : vector<1x1024xf32> to vector<8x1024xf32>
    %32 = arith.addf %29, %31 : vector<8x1024xf32>
    %cst_15 = arith.constant 0.000000e+00 : f32
    %33 = vector.broadcast %cst_15 : f32 to vector<8x1024xf32>
    %34 = arith.maximumf %32, %33 : vector<8x1024xf32>
    %35 = arith.truncf %34 : vector<8x1024xf32> to vector<8x1024xbf16>
    %c0_16 = arith.constant 0 : index
    %c0_17 = arith.constant 0 : index
    %36 = vector.load %arg6[%c0_16, %c0_17] : memref<1024x128xbf16, #tpu.memory_space<vmem>>, vector<1024x128xbf16>
    %cst_18 = arith.constant dense<0.000000e+00> : vector<8x128xf32>
    %37 = tpu.matmul %35, %36, %cst_18 {dimension_numbers = #tpu.dot_dimension_numbers<[1], [0], [0], [1], [0, 0, 1, 1], [], []>} : vector<8x1024xbf16>, vector<1024x128xbf16>, vector<8x128xf32> -> vector<8x128xf32>
    %c0_19 = arith.constant 0 : index
    %c0_20 = arith.constant 0 : index
    %38 = vector.load %arg7[%c0_19, %c0_20] : memref<1x128xf32, #tpu.memory_space<vmem>>, vector<1x128xf32>
    %39 = vector.broadcast %38 : vector<1x128xf32> to vector<8x128xf32>
    %40 = arith.addf %37, %39 : vector<8x128xf32>
    %cst_21 = arith.constant dense<0.000000e+00> : vector<8xf32>
    %41 = vector.multi_reduction <add>, %40, %cst_21 [1] : vector<8x128xf32> to vector<8xf32>
    %42 = vector.shape_cast %41 : vector<8xf32> to vector<8x1xf32>
    %43 = arith.mulf %40, %40 : vector<8x128xf32>
    %cst_22 = arith.constant dense<0.000000e+00> : vector<8xf32>
    %44 = vector.multi_reduction <add>, %43, %cst_22 [1] : vector<8x128xf32> to vector<8xf32>
    %45 = vector.shape_cast %44 : vector<8xf32> to vector<8x1xf32>
    %cst_23 = arith.constant 7.812500e-03 : f32
    %46 = vector.broadcast %cst_23 : f32 to vector<8x1xf32>
    %47 = arith.mulf %42, %46 : vector<8x1xf32>
    %cst_24 = arith.constant 7.812500e-03 : f32
    %48 = vector.broadcast %cst_24 : f32 to vector<8x1xf32>
    %49 = arith.mulf %45, %48 : vector<8x1xf32>
    %50 = arith.mulf %47, %47 : vector<8x1xf32>
    %51 = arith.subf %49, %50 : vector<8x1xf32>
    %cst_25 = arith.constant 0.000000e+00 : f32
    %52 = vector.broadcast %cst_25 : f32 to vector<8x1xf32>
    %53 = arith.maximumf %51, %52 : vector<8x1xf32>
    %c0_26 = arith.constant 0 : index
    %c0_27 = arith.constant 0 : index
    %54 = vector.load %arg8[%c0_26, %c0_27] : memref<1x128xf32, #tpu.memory_space<vmem>>, vector<1x128xf32>
    %cst_28 = arith.constant 9.99999974E-6 : f32
    %55 = vector.broadcast %cst_28 : f32 to vector<8x1xf32>
    %56 = arith.addf %53, %55 : vector<8x1xf32>
    %57 = math.rsqrt %56 : vector<8x1xf32>
    %58 = vector.broadcast %54 : vector<1x128xf32> to vector<8x128xf32>
    %59 = vector.broadcast %57 : vector<8x1xf32> to vector<8x128xf32>
    %60 = arith.mulf %58, %59 : vector<8x128xf32>
    %61 = vector.broadcast %47 : vector<8x1xf32> to vector<8x128xf32>
    %62 = arith.subf %40, %61 : vector<8x128xf32>
    %63 = arith.mulf %62, %60 : vector<8x128xf32>
    %c0_29 = arith.constant 0 : index
    %c0_30 = arith.constant 0 : index
    %64 = vector.load %arg9[%c0_29, %c0_30] : memref<1x128xf32, #tpu.memory_space<vmem>>, vector<1x128xf32>
    %65 = vector.broadcast %64 : vector<1x128xf32> to vector<8x128xf32>
    %66 = arith.addf %63, %65 : vector<8x128xf32>
    %cst_31 = arith.constant 0.000000e+00 : f32
    %67 = vector.broadcast %cst_31 : f32 to vector<8x128xf32>
    %68 = arith.maximumf %66, %67 : vector<8x128xf32>
    %69 = arith.truncf %68 : vector<8x128xf32> to vector<8x128xbf16>
    %c0_32 = arith.constant 0 : index
    %c0_33 = arith.constant 0 : index
    %70 = vector.load %arg10[%c0_32, %c0_33] : memref<128x64xbf16, #tpu.memory_space<vmem>>, vector<128x64xbf16>
    %cst_34 = arith.constant dense<0.000000e+00> : vector<8x64xf32>
    %71 = tpu.matmul %69, %70, %cst_34 {dimension_numbers = #tpu.dot_dimension_numbers<[1], [0], [0], [1], [0, 0, 1, 1], [], []>} : vector<8x128xbf16>, vector<128x64xbf16>, vector<8x64xf32> -> vector<8x64xf32>
    %c0_35 = arith.constant 0 : index
    %c0_36 = arith.constant 0 : index
    %72 = vector.load %arg11[%c0_35, %c0_36] : memref<1x64xf32, #tpu.memory_space<vmem>>, vector<1x64xf32>
    %73 = vector.broadcast %72 : vector<1x64xf32> to vector<8x64xf32>
    %74 = arith.addf %71, %73 : vector<8x64xf32>
    %75 = math.tanh %74 : vector<8x64xf32>
    %76 = arith.truncf %75 : vector<8x64xf32> to vector<8x64xbf16>
    %c0_37 = arith.constant 0 : index
    %c0_38 = arith.constant 0 : index
    %77 = vector.load %arg12[%c0_37, %c0_38] : memref<64x128xbf16, #tpu.memory_space<vmem>>, vector<64x128xbf16>
    %cst_39 = arith.constant dense<0.000000e+00> : vector<8x128xf32>
    %78 = tpu.matmul %76, %77, %cst_39 {dimension_numbers = #tpu.dot_dimension_numbers<[1], [0], [0], [1], [0, 0, 1, 1], [], []>} : vector<8x64xbf16>, vector<64x128xbf16>, vector<8x128xf32> -> vector<8x128xf32>
    %c0_40 = arith.constant 0 : index
    %c0_41 = arith.constant 0 : index
    %79 = vector.load %arg13[%c0_40, %c0_41] : memref<1x128xf32, #tpu.memory_space<vmem>>, vector<1x128xf32>
    %80 = vector.broadcast %79 : vector<1x128xf32> to vector<8x128xf32>
    %81 = arith.addf %78, %80 : vector<8x128xf32>
    %cst_42 = arith.constant dense<0.000000e+00> : vector<8xf32>
    %82 = vector.multi_reduction <add>, %81, %cst_42 [1] : vector<8x128xf32> to vector<8xf32>
    %83 = vector.shape_cast %82 : vector<8xf32> to vector<8x1xf32>
    %84 = arith.mulf %81, %81 : vector<8x128xf32>
    %cst_43 = arith.constant dense<0.000000e+00> : vector<8xf32>
    %85 = vector.multi_reduction <add>, %84, %cst_43 [1] : vector<8x128xf32> to vector<8xf32>
    %86 = vector.shape_cast %85 : vector<8xf32> to vector<8x1xf32>
    %cst_44 = arith.constant 7.812500e-03 : f32
    %87 = vector.broadcast %cst_44 : f32 to vector<8x1xf32>
    %88 = arith.mulf %83, %87 : vector<8x1xf32>
    %cst_45 = arith.constant 7.812500e-03 : f32
    %89 = vector.broadcast %cst_45 : f32 to vector<8x1xf32>
    %90 = arith.mulf %86, %89 : vector<8x1xf32>
    %91 = arith.mulf %88, %88 : vector<8x1xf32>
    %92 = arith.subf %90, %91 : vector<8x1xf32>
    %cst_46 = arith.constant 0.000000e+00 : f32
    %93 = vector.broadcast %cst_46 : f32 to vector<8x1xf32>
    %94 = arith.maximumf %92, %93 : vector<8x1xf32>
    %c0_47 = arith.constant 0 : index
    %c0_48 = arith.constant 0 : index
    %95 = vector.load %arg14[%c0_47, %c0_48] : memref<1x128xf32, #tpu.memory_space<vmem>>, vector<1x128xf32>
    %cst_49 = arith.constant 9.99999974E-6 : f32
    %96 = vector.broadcast %cst_49 : f32 to vector<8x1xf32>
    %97 = arith.addf %94, %96 : vector<8x1xf32>
    %98 = math.rsqrt %97 : vector<8x1xf32>
    %99 = vector.broadcast %95 : vector<1x128xf32> to vector<8x128xf32>
    %100 = vector.broadcast %98 : vector<8x1xf32> to vector<8x128xf32>
    %101 = arith.mulf %99, %100 : vector<8x128xf32>
    %102 = vector.broadcast %88 : vector<8x1xf32> to vector<8x128xf32>
    %103 = arith.subf %81, %102 : vector<8x128xf32>
    %104 = arith.mulf %103, %101 : vector<8x128xf32>
    %c0_50 = arith.constant 0 : index
    %c0_51 = arith.constant 0 : index
    %105 = vector.load %arg15[%c0_50, %c0_51] : memref<1x128xf32, #tpu.memory_space<vmem>>, vector<1x128xf32>
    %106 = vector.broadcast %105 : vector<1x128xf32> to vector<8x128xf32>
    %107 = arith.addf %104, %106 : vector<8x128xf32>
    %cst_52 = arith.constant 0.000000e+00 : f32
    %108 = vector.broadcast %cst_52 : f32 to vector<8x128xf32>
    %109 = arith.maximumf %107, %108 : vector<8x128xf32>
    %110 = arith.truncf %109 : vector<8x128xf32> to vector<8x128xbf16>
    %c0_53 = arith.constant 0 : index
    %c0_54 = arith.constant 0 : index
    %111 = vector.load %arg16[%c0_53, %c0_54] : memref<128x1024xbf16, #tpu.memory_space<vmem>>, vector<128x1024xbf16>
    %cst_55 = arith.constant dense<0.000000e+00> : vector<8x1024xf32>
    %112 = tpu.matmul %110, %111, %cst_55 {dimension_numbers = #tpu.dot_dimension_numbers<[1], [0], [0], [1], [0, 0, 1, 1], [], []>} : vector<8x128xbf16>, vector<128x1024xbf16>, vector<8x1024xf32> -> vector<8x1024xf32>
    %c0_56 = arith.constant 0 : index
    %c0_57 = arith.constant 0 : index
    %113 = vector.load %arg17[%c0_56, %c0_57] : memref<1x1024xf32, #tpu.memory_space<vmem>>, vector<1x1024xf32>
    %114 = vector.broadcast %113 : vector<1x1024xf32> to vector<8x1024xf32>
    %115 = arith.addf %112, %114 : vector<8x1024xf32>
    %cst_58 = arith.constant dense<0.000000e+00> : vector<8xf32>
    %116 = vector.multi_reduction <add>, %115, %cst_58 [1] : vector<8x1024xf32> to vector<8xf32>
    %117 = vector.shape_cast %116 : vector<8xf32> to vector<8x1xf32>
    %118 = arith.mulf %115, %115 : vector<8x1024xf32>
    %cst_59 = arith.constant dense<0.000000e+00> : vector<8xf32>
    %119 = vector.multi_reduction <add>, %118, %cst_59 [1] : vector<8x1024xf32> to vector<8xf32>
    %120 = vector.shape_cast %119 : vector<8xf32> to vector<8x1xf32>
    %cst_60 = arith.constant 9.765625E-4 : f32
    %121 = vector.broadcast %cst_60 : f32 to vector<8x1xf32>
    %122 = arith.mulf %117, %121 : vector<8x1xf32>
    %cst_61 = arith.constant 9.765625E-4 : f32
    %123 = vector.broadcast %cst_61 : f32 to vector<8x1xf32>
    %124 = arith.mulf %120, %123 : vector<8x1xf32>
    %125 = arith.mulf %122, %122 : vector<8x1xf32>
    %126 = arith.subf %124, %125 : vector<8x1xf32>
    %cst_62 = arith.constant 0.000000e+00 : f32
    %127 = vector.broadcast %cst_62 : f32 to vector<8x1xf32>
    %128 = arith.maximumf %126, %127 : vector<8x1xf32>
    %c0_63 = arith.constant 0 : index
    %c0_64 = arith.constant 0 : index
    %129 = vector.load %arg18[%c0_63, %c0_64] : memref<1x1024xf32, #tpu.memory_space<vmem>>, vector<1x1024xf32>
    %cst_65 = arith.constant 9.99999974E-6 : f32
    %130 = vector.broadcast %cst_65 : f32 to vector<8x1xf32>
    %131 = arith.addf %128, %130 : vector<8x1xf32>
    %132 = math.rsqrt %131 : vector<8x1xf32>
    %133 = vector.broadcast %129 : vector<1x1024xf32> to vector<8x1024xf32>
    %134 = vector.broadcast %132 : vector<8x1xf32> to vector<8x1024xf32>
    %135 = arith.mulf %133, %134 : vector<8x1024xf32>
    %136 = vector.broadcast %122 : vector<8x1xf32> to vector<8x1024xf32>
    %137 = arith.subf %115, %136 : vector<8x1024xf32>
    %138 = arith.mulf %137, %135 : vector<8x1024xf32>
    %c0_66 = arith.constant 0 : index
    %c0_67 = arith.constant 0 : index
    %139 = vector.load %arg19[%c0_66, %c0_67] : memref<1x1024xf32, #tpu.memory_space<vmem>>, vector<1x1024xf32>
    %140 = vector.broadcast %139 : vector<1x1024xf32> to vector<8x1024xf32>
    %141 = arith.addf %138, %140 : vector<8x1024xf32>
    %cst_68 = arith.constant 0.000000e+00 : f32
    %142 = vector.broadcast %cst_68 : f32 to vector<8x1024xf32>
    %143 = arith.maximumf %141, %142 : vector<8x1024xf32>
    %144 = arith.truncf %143 : vector<8x1024xf32> to vector<8x1024xbf16>
    %c0_69 = arith.constant 0 : index
    %c0_70 = arith.constant 0 : index
    %145 = vector.load %arg20[%c0_69, %c0_70] : memref<1024x256xbf16, #tpu.memory_space<vmem>>, vector<1024x256xbf16>
    %cst_71 = arith.constant dense<0.000000e+00> : vector<8x256xf32>
    %146 = tpu.matmul %144, %145, %cst_71 {dimension_numbers = #tpu.dot_dimension_numbers<[1], [0], [0], [1], [0, 0, 1, 1], [], []>} : vector<8x1024xbf16>, vector<1024x256xbf16>, vector<8x256xf32> -> vector<8x256xf32>
    %c0_72 = arith.constant 0 : index
    %c0_73 = arith.constant 0 : index
    %147 = vector.load %arg21[%c0_72, %c0_73] : memref<1x256xf32, #tpu.memory_space<vmem>>, vector<1x256xf32>
    %148 = vector.broadcast %147 : vector<1x256xf32> to vector<8x256xf32>
    %149 = arith.addf %146, %148 : vector<8x256xf32>
    %150 = math.tanh %149 : vector<8x256xf32>
    %c0_74 = arith.constant 0 : index
    %c0_75 = arith.constant 0 : index
    %151 = vector.load %arg22[%c0_74, %c0_75] : memref<8x256xf32, #tpu.memory_space<vmem>>, vector<8x256xf32>
    tpu.vector_store %arg22[%c0_74, %c0_75], %150 {strides = array<i32>} : memref<8x256xf32, #tpu.memory_space<vmem>>, vector<8x256xf32>,
    return
  }
  func.func @transform_0(%arg0: i32) -> (i32, i32) {
    %c0_i32 = arith.constant 0 : i32
    %c0_i32_0 = arith.constant 0 : i32
    return %arg0, %c0_i32 : i32, i32
  }
  func.func @transform_1(%arg0: i32) -> (i32, i32) {
    %c0_i32 = arith.constant 0 : i32
    %c0_i32_0 = arith.constant 0 : i32
    %c0_i32_1 = arith.constant 0 : i32
    return %c0_i32, %c0_i32_0 : i32, i32
  }
  func.func @transform_2(%arg0: i32) -> (i32, i32) {
    %c0_i32 = arith.constant 0 : i32
    %c0_i32_0 = arith.constant 0 : i32
    %c0_i32_1 = arith.constant 0 : i32
    return %c0_i32, %c0_i32_0 : i32, i32
  }
  func.func @transform_3(%arg0: i32) -> (i32, i32) {
    %c0_i32 = arith.constant 0 : i32
    %c0_i32_0 = arith.constant 0 : i32
    %c0_i32_1 = arith.constant 0 : i32
    return %c0_i32, %c0_i32_0 : i32, i32
  }
  func.func @transform_4(%arg0: i32) -> (i32, i32) {
    %c0_i32 = arith.constant 0 : i32
    %c0_i32_0 = arith.constant 0 : i32
    %c0_i32_1 = arith.constant 0 : i32
    return %c0_i32, %c0_i32_0 : i32, i32
  }
  func.func @transform_5(%arg0: i32) -> (i32, i32) {
    %c0_i32 = arith.constant 0 : i32
    %c0_i32_0 = arith.constant 0 : i32
    %c0_i32_1 = arith.constant 0 : i32
    return %c0_i32, %c0_i32_0 : i32, i32
  }
  func.func @transform_6(%arg0: i32) -> (i32, i32) {
    %c0_i32 = arith.constant 0 : i32
    %c0_i32_0 = arith.constant 0 : i32
    %c0_i32_1 = arith.constant 0 : i32
    return %c0_i32, %c0_i32_0 : i32, i32
  }
  func.func @transform_7(%arg0: i32) -> (i32, i32) {
    %c0_i32 = arith.constant 0 : i32
    %c0_i32_0 = arith.constant 0 : i32
    %c0_i32_1 = arith.constant 0 : i32
    return %c0_i32, %c0_i32_0 : i32, i32
  }
  func.func @transform_8(%arg0: i32) -> (i32, i32) {
    %c0_i32 = arith.constant 0 : i32
    %c0_i32_0 = arith.constant 0 : i32
    %c0_i32_1 = arith.constant 0 : i32
    return %c0_i32, %c0_i32_0 : i32, i32
  }
  func.func @transform_9(%arg0: i32) -> (i32, i32) {
    %c0_i32 = arith.constant 0 : i32
    %c0_i32_0 = arith.constant 0 : i32
    %c0_i32_1 = arith.constant 0 : i32
    return %c0_i32, %c0_i32_0 : i32, i32
  }
  func.func @transform_10(%arg0: i32) -> (i32, i32) {
    %c0_i32 = arith.constant 0 : i32
    %c0_i32_0 = arith.constant 0 : i32
    %c0_i32_1 = arith.constant 0 : i32
    return %c0_i32, %c0_i32_0 : i32, i32
  }
  func.func @transform_11(%arg0: i32) -> (i32, i32) {
    %c0_i32 = arith.constant 0 : i32
    %c0_i32_0 = arith.constant 0 : i32
    %c0_i32_1 = arith.constant 0 : i32
    return %c0_i32, %c0_i32_0 : i32, i32
  }
  func.func @transform_12(%arg0: i32) -> (i32, i32) {
    %c0_i32 = arith.constant 0 : i32
    %c0_i32_0 = arith.constant 0 : i32
    %c0_i32_1 = arith.constant 0 : i32
    return %c0_i32, %c0_i32_0 : i32, i32
  }
  func.func @transform_13(%arg0: i32) -> (i32, i32) {
    %c0_i32 = arith.constant 0 : i32
    %c0_i32_0 = arith.constant 0 : i32
    %c0_i32_1 = arith.constant 0 : i32
    return %c0_i32, %c0_i32_0 : i32, i32
  }
  func.func @transform_14(%arg0: i32) -> (i32, i32) {
    %c0_i32 = arith.constant 0 : i32
    %c0_i32_0 = arith.constant 0 : i32
    %c0_i32_1 = arith.constant 0 : i32
    return %c0_i32, %c0_i32_0 : i32, i32
  }
  func.func @transform_15(%arg0: i32) -> (i32, i32) {
    %c0_i32 = arith.constant 0 : i32
    %c0_i32_0 = arith.constant 0 : i32
    %c0_i32_1 = arith.constant 0 : i32
    return %c0_i32, %c0_i32_0 : i32, i32
  }
  func.func @transform_16(%arg0: i32) -> (i32, i32) {
    %c0_i32 = arith.constant 0 : i32
    %c0_i32_0 = arith.constant 0 : i32
    %c0_i32_1 = arith.constant 0 : i32
    return %c0_i32, %c0_i32_0 : i32, i32
  }
  func.func @transform_17(%arg0: i32) -> (i32, i32) {
    %c0_i32 = arith.constant 0 : i32
    %c0_i32_0 = arith.constant 0 : i32
    %c0_i32_1 = arith.constant 0 : i32
    return %c0_i32, %c0_i32_0 : i32, i32
  }
  func.func @transform_18(%arg0: i32) -> (i32, i32) {
    %c0_i32 = arith.constant 0 : i32
    %c0_i32_0 = arith.constant 0 : i32
    %c0_i32_1 = arith.constant 0 : i32
    return %c0_i32, %c0_i32_0 : i32, i32
  }
  func.func @transform_19(%arg0: i32) -> (i32, i32) {
    %c0_i32 = arith.constant 0 : i32
    %c0_i32_0 = arith.constant 0 : i32
    %c0_i32_1 = arith.constant 0 : i32
    return %c0_i32, %c0_i32_0 : i32, i32
  }
  func.func @transform_20(%arg0: i32) -> (i32, i32) {
    %c0_i32 = arith.constant 0 : i32
    %c0_i32_0 = arith.constant 0 : i32
    %c0_i32_1 = arith.constant 0 : i32
    return %c0_i32, %c0_i32_0 : i32, i32
  }
  func.func @transform_21(%arg0: i32) -> (i32, i32) {
    %c0_i32 = arith.constant 0 : i32
    %c0_i32_0 = arith.constant 0 : i32
    return %arg0, %c0_i32 : i32, i32
  }
}

</mosaic_0001>

<llo_original>
// kernel: ae_forward.1
$region0: #{ae_forward.1}
  #allocation0 [shape = 'u32[]', space=smem, size = 0x4, offset = 0x4, fixed_abs, tag = 'smem constant byte address 0x4 - core index']
  #allocation1 [shape = 'u32[144,128]{1,0:T(1,128)}', space=vmem, size = 0x12000, scoped, tag = 'internal scratch']
  %s0 = inlined_call_operand.vmem [shape: f32[8,256], index: 0, kind: input, shape index: {}]
  %s1 = inlined_call_operand.hbm [shape: bf16[256,1024], index: 1, kind: input, shape index: {}]
  %s2 = inlined_call_operand.vmem [shape: f32[1,1024], index: 2, kind: input, shape index: {}]
  %s3 = inlined_call_operand.vmem [shape: f32[1,1024], index: 3, kind: input, shape index: {}]
  %s4 = inlined_call_operand.vmem [shape: f32[1,1024], index: 4, kind: input, shape index: {}]
  %s5 = inlined_call_operand.hbm [shape: bf16[1024,128], index: 5, kind: input, shape index: {}]
  %s6 = inlined_call_operand.vmem [shape: f32[1,128], index: 6, kind: input, shape index: {}]
  %s7 = inlined_call_operand.vmem [shape: f32[1,128], index: 7, kind: input, shape index: {}]
  %s8 = inlined_call_operand.vmem [shape: f32[1,128], index: 8, kind: input, shape index: {}]
  %s9 = inlined_call_operand.vmem [shape: bf16[128,64], index: 9, kind: input, shape index: {}]
  %s10 = inlined_call_operand.vmem [shape: f32[1,64], index: 10, kind: input, shape index: {}]
  %s11 = inlined_call_operand.vmem [shape: bf16[64,128], index: 11, kind: input, shape index: {}]
  %s12 = inlined_call_operand.hbm [shape: f32[1,128], index: 12, kind: input, shape index: {}]
  %s13 = inlined_call_operand.vmem [shape: f32[1,128], index: 13, kind: input, shape index: {}]
  %s14 = inlined_call_operand.vmem [shape: f32[1,128], index: 14, kind: input, shape index: {}]
  %s15 = inlined_call_operand.hbm [shape: bf16[128,1024], index: 15, kind: input, shape index: {}]
  %s16 = inlined_call_operand.vmem [shape: f32[1,1024], index: 16, kind: input, shape index: {}]
  %s17 = inlined_call_operand.vmem [shape: f32[1,1024], index: 17, kind: input, shape index: {}]
  %s18 = inlined_call_operand.vmem [shape: f32[1,1024], index: 18, kind: input, shape index: {}]
  %s19 = inlined_call_operand.hbm [shape: bf16[1024,256], index: 19, kind: input, shape index: {}]
  %s20 = inlined_call_operand.vmem [shape: f32[1,256], index: 20, kind: input, shape index: {}]
  %s21 = inlined_call_operand.hbm [shape: f32[8,256], index: 21, kind: output, shape index: {}]
  %s22 = sld [smem:[#allocation0]]
  $region114: #{ae_forward.1} parent=0
    _
  %s24 = ssub.s32 1, %s22
  %s25 = scalar_select 0, %s24, %s22
  $region1: #{ae_forward.1} parent=0
    #allocation2 [shape = 'u8[524288]{0}', space=vmem, size = 0x80000, scoped, tag = 'input window, operand 1, single buffered']
    #allocation3 [shape = 's32[1]{0}', space=sflag, size = 0x4, scoped, tag = 'scoped memory for ae_forward.1']
    #allocation4 [shape = 's32[1]{0}', space=sflag, size = 0x4, scoped, tag = 'scoped memory for ae_forward.1']
    #allocation5 [shape = 'u8[262144]{0}', space=vmem, size = 0x40000, scoped, tag = 'input window, operand 5, single buffered']
    #allocation6 [shape = 's32[1]{0}', space=sflag, size = 0x4, scoped, tag = 'scoped memory for ae_forward.1']
    #allocation7 [shape = 'u8[512]{0}', space=vmem, size = 0x400, scoped, tag = 'input window, operand 12, single buffered']
    #allocation8 [shape = 'u8[262144]{0}', space=vmem, size = 0x40000, scoped, tag = 'input window, operand 15, single buffered']
    #allocation9 [shape = 's32[1]{0}', space=sflag, size = 0x4, scoped, tag = 'scoped memory for ae_forward.1']
    #allocation10 [shape = 'u8[524288]{0}', space=vmem, size = 0x80000, scoped, tag = 'input window, operand 19, single buffered']
    #allocation11 [shape = 'u8[8192]{0}', space=vmem, size = 0x2000, scoped, tag = 'output window, operand 0, single buffered']
    %26 = vsyncpa [#allocation3], 0
    %27 = vsyncpa [#allocation6], 0
    %28 = vsyncpa [#allocation9], 0
    %29 = vsyncpa [#allocation4], 0
    // Predicated region
    $region2: #{ae_forward.1} parent=1 // pred_check
      _
    $region3: #{ae_forward.1} parent=1 // pred_check_branch
      %31 = sbr.rel (0) target = $region5
    $region4: #{ae_forward.1} parent=1 // pred_region
      _
    $region5: #{ae_forward.1} parent=1 // pred_fallthru
      _
    // Predicated region
    $region6: #{ae_forward.1} parent=1 // pred_check
      _
    $region7: #{ae_forward.1} parent=1 // pred_check_branch
      %33 = sbr.rel (0) target = $region9
    $region8: #{ae_forward.1} parent=1 // pred_region
      %s35 = ssub.s32 16384, 16384
      %36 = vsyncadd [#allocation3], %s35
      %s37 = sshll.u32 [#allocation2], 4
      %s38 = int_to_ptr.vmem [resolvable:$true] %s37
      %43 = dma.hbm_to_vmem [thread:$0]  %s1, 16384, %s38, [#allocation3], 512, 512, 32
    $region9: #{ae_forward.1} parent=1 // pred_fallthru
      _
    // Predicated region
    $region10: #{ae_forward.1} parent=1 // pred_check
      _
    $region11: #{ae_forward.1} parent=1 // pred_check_branch
      %45 = sbr.rel (0) target = $region13
    $region12: #{ae_forward.1} parent=1 // pred_region
      _
    $region13: #{ae_forward.1} parent=1 // pred_fallthru
      _
    // Predicated region
    $region14: #{ae_forward.1} parent=1 // pred_check
      _
    $region15: #{ae_forward.1} parent=1 // pred_check_branch
      %47 = sbr.rel (0) target = $region17
    $region16: #{ae_forward.1} parent=1 // pred_region
      _
    $region17: #{ae_forward.1} parent=1 // pred_fallthru
      _
    // Predicated region
    $region18: #{ae_forward.1} parent=1 // pred_check
      _
    $region19: #{ae_forward.1} parent=1 // pred_check_branch
      %49 = sbr.rel (0) target = $region21
    $region20: #{ae_forward.1} parent=1 // pred_region
      _
    $region21: #{ae_forward.1} parent=1 // pred_fallthru
      _
    // Predicated region
    $region22: #{ae_forward.1} parent=1 // pred_check
      _
    $region23: #{ae_forward.1} parent=1 // pred_check_branch
      %51 = sbr.rel (0) target = $region25
    $region24: #{ae_forward.1} parent=1 // pred_region
      %s53 = ssub.s32 8192, 8192
      %54 = vsyncadd [#allocation6], %s53
      %s55 = sshll.u32 [#allocation5], 4
      %s56 = int_to_ptr.vmem [resolvable:$true] %s55
      %61 = dma.hbm_to_vmem [thread:$0]  %s5, 8192, %s56, [#allocation6], 64, 64, 4
    $region25: #{ae_forward.1} parent=1 // pred_fallthru
      _
    // Predicated region
    $region26: #{ae_forward.1} parent=1 // pred_check
      _
    $region27: #{ae_forward.1} parent=1 // pred_check_branch
      %63 = sbr.rel (0) target = $region29
    $region28: #{ae_forward.1} parent=1 // pred_region
      _
    $region29: #{ae_forward.1} parent=1 // pred_fallthru
      _
    // Predicated region
    $region30: #{ae_forward.1} parent=1 // pred_check
      _
    $region31: #{ae_forward.1} parent=1 // pred_check_branch
      %65 = sbr.rel (0) target = $region33
    $region32: #{ae_forward.1} parent=1 // pred_region
      _
    $region33: #{ae_forward.1} parent=1 // pred_fallthru
      _
    // Predicated region
    $region34: #{ae_forward.1} parent=1 // pred_check
      _
    $region35: #{ae_forward.1} parent=1 // pred_check_branch
      %67 = sbr.rel (0) target = $region37
    $region36: #{ae_forward.1} parent=1 // pred_region
      _
    $region37: #{ae_forward.1} parent=1 // pred_fallthru
      _
    // Predicated region
    $region38: #{ae_forward.1} parent=1 // pred_check
      _
    $region39: #{ae_forward.1} parent=1 // pred_check_branch
      %69 = sbr.rel (0) target = $region41
    $region40: #{ae_forward.1} parent=1 // pred_region
      _
    $region41: #{ae_forward.1} parent=1 // pred_fallthru
      _
    // Predicated region
    $region42: #{ae_forward.1} parent=1 // pred_check
      _
    $region43: #{ae_forward.1} parent=1 // pred_check_branch
      %71 = sbr.rel (0) target = $region45
    $region44: #{ae_forward.1} parent=1 // pred_region
      _
    $region45: #{ae_forward.1} parent=1 // pred_fallthru
      _
    // Predicated region
    $region46: #{ae_forward.1} parent=1 // pred_check
      _
    $region47: #{ae_forward.1} parent=1 // pred_check_branch
      %73 = sbr.rel (0) target = $region49
    $region48: #{ae_forward.1} parent=1 // pred_region
      _
    $region49: #{ae_forward.1} parent=1 // pred_fallthru
      _
    // Predicated region
    $region50: #{ae_forward.1} parent=1 // pred_check
      _
    $region51: #{ae_forward.1} parent=1 // pred_check_branch
      %75 = sbr.rel (0) target = $region53
    $region52: #{ae_forward.1} parent=1 // pred_region
      %s77 = ssub.s32 16, 16
      %78 = vsyncadd [#allocation6], %s77
      %s80 = sshll.u32 [#allocation7], 4
      %s81 = int_to_ptr.vmem [resolvable:$true] %s80
      %83 = dma.hbm_to_vmem [thread:$0]  %s12, 16, %s81, [#allocation6]
    $region53: #{ae_forward.1} parent=1 // pred_fallthru
      _
    // Predicated region
    $region54: #{ae_forward.1} parent=1 // pred_check
      _
    $region55: #{ae_forward.1} parent=1 // pred_check_branch
      %85 = sbr.rel (0) target = $region57
    $region56: #{ae_forward.1} parent=1 // pred_region
      _
    $region57: #{ae_forward.1} parent=1 // pred_fallthru
      _
    // Predicated region
    $region58: #{ae_forward.1} parent=1 // pred_check
      _
    $region59: #{ae_forward.1} parent=1 // pred_check_branch
      %87 = sbr.rel (0) target = $region61
    $region60: #{ae_forward.1} parent=1 // pred_region
      _
    $region61: #{ae_forward.1} parent=1 // pred_fallthru
      _
    // Predicated region
    $region62: #{ae_forward.1} parent=1 // pred_check
      _
    $region63: #{ae_forward.1} parent=1 // pred_check_branch
      %89 = sbr.rel (0) target = $region65
    $region64: #{ae_forward.1} parent=1 // pred_region
      %s91 = ssub.s32 8192, 8192
      %92 = vsyncadd [#allocation9], %s91
      %s93 = sshll.u32 [#allocation8], 4
      %s94 = int_to_ptr.vmem [resolvable:$true] %s93
      %99 = dma.hbm_to_vmem [thread:$0]  %s15, 8192, %s94, [#allocation9], 512, 512, 32
    $region65: #{ae_forward.1} parent=1 // pred_fallthru
      _
    // Predicated region
    $region66: #{ae_forward.1} parent=1 // pred_check
      _
    $region67: #{ae_forward.1} parent=1 // pred_check_branch
      %101 = sbr.rel (0) target = $region69
    $region68: #{ae_forward.1} parent=1 // pred_region
      _
    $region69: #{ae_forward.1} parent=1 // pred_fallthru
      _
    // Predicated region
    $region70: #{ae_forward.1} parent=1 // pred_check
      _
    $region71: #{ae_forward.1} parent=1 // pred_check_branch
      %103 = sbr.rel (0) target = $region73
    $region72: #{ae_forward.1} parent=1 // pred_region
      _
    $region73: #{ae_forward.1} parent=1 // pred_fallthru
      _
    // Predicated region
    $region74: #{ae_forward.1} parent=1 // pred_check
      _
    $region75: #{ae_forward.1} parent=1 // pred_check_branch
      %105 = sbr.rel (0) target = $region77
    $region76: #{ae_forward.1} parent=1 // pred_region
      _
    $region77: #{ae_forward.1} parent=1 // pred_fallthru
      _
    // Predicated region
    $region78: #{ae_forward.1} parent=1 // pred_check
      _
    $region79: #{ae_forward.1} parent=1 // pred_check_branch
      %107 = sbr.rel (0) target = $region81
    $region80: #{ae_forward.1} parent=1 // pred_region
      %s109 = ssub.s32 16384, 16384
      %110 = vsyncadd [#allocation9], %s109
      %s111 = sshll.u32 [#allocation10], 4
      %s112 = int_to_ptr.vmem [resolvable:$true] %s111
      %117 = dma.hbm_to_vmem [thread:$0]  %s19, 16384, %s112, [#allocation9], 128, 128, 8
    $region81: #{ae_forward.1} parent=1 // pred_fallthru
      _
    // Predicated region
    $region82: #{ae_forward.1} parent=1 // pred_check
      _
    $region83: #{ae_forward.1} parent=1 // pred_check_branch
      %119 = sbr.rel (0) target = $region85
    $region84: #{ae_forward.1} parent=1 // pred_region
      _
    $region85: #{ae_forward.1} parent=1 // pred_fallthru
      _
    // Predicated region
    $region86: #{ae_forward.1} parent=1 // pred_check
      _
    $region87: #{ae_forward.1} parent=1 // pred_check_branch
      %121 = sbr.rel (0) target = $region89
    $region88: #{ae_forward.1} parent=1 // pred_region
      %122 = dma.done [#allocation3], 16384
    $region89: #{ae_forward.1} parent=1 // pred_fallthru
      _
    // Predicated region
    $region90: #{ae_forward.1} parent=1 // pred_check
      _
    $region91: #{ae_forward.1} parent=1 // pred_check_branch
      %124 = sbr.rel (0) target = $region93
    $region92: #{ae_forward.1} parent=1 // pred_region
      %125 = dma.done [#allocation6], 8192
    $region93: #{ae_forward.1} parent=1 // pred_fallthru
      _
    // Predicated region
    $region94: #{ae_forward.1} parent=1 // pred_check
      _
    $region95: #{ae_forward.1} parent=1 // pred_check_branch
      %127 = sbr.rel (0) target = $region97
    $region96: #{ae_forward.1} parent=1 // pred_region
      %128 = dma.done [#allocation6], 16
    $region97: #{ae_forward.1} parent=1 // pred_fallthru
      _
    // Predicated region
    $region98: #{ae_forward.1} parent=1 // pred_check
      _
    $region99: #{ae_forward.1} parent=1 // pred_check_branch
      %130 = sbr.rel (0) target = $region101
    $region100: #{ae_forward.1} parent=1 // pred_region
      %131 = dma.done [#allocation9], 8192
    $region101: #{ae_forward.1} parent=1 // pred_fallthru
      _
    // Predicated region
    $region102: #{ae_forward.1} parent=1 // pred_check
      _
    $region103: #{ae_forward.1} parent=1 // pred_check_branch
      %133 = sbr.rel (0) target = $region105
    $region104: #{ae_forward.1} parent=1 // pred_region
      %134 = dma.done [#allocation9], 16384
    $region105: #{ae_forward.1} parent=1 // pred_fallthru
      _
    %v136 = vld [vmem:[%s0] sm:$0xff]
    %v137 = vld [vmem:[%s0 + $0x8] sm:$0xff]
    %v138 = vpack.c.bf16 %v136, %v136
    %v139 = vpack.c.bf16 %v137, %v137
    %v140 = vld [vmem:[#allocation2] sm:$0xff]
    %v141 = vld [vmem:[#allocation2 + $0x8] sm:$0xff]
    %v142 = vld [vmem:[#allocation2 + $0x10] sm:$0xff]
    %v143 = vld [vmem:[#allocation2 + $0x18] sm:$0xff]
    %v144 = vld [vmem:[#allocation2 + $0x20] sm:$0xff]
    %v145 = vld [vmem:[#allocation2 + $0x28] sm:$0xff]
    %v146 = vld [vmem:[#allocation2 + $0x30] sm:$0xff]
    %v147 = vld [vmem:[#allocation2 + $0x38] sm:$0xff]
    %v148 = vld [vmem:[#allocation2 + $0x40] sm:$0xff]
    %v149 = vld [vmem:[#allocation2 + $0x48] sm:$0xff]
    %v150 = vld [vmem:[#allocation2 + $0x50] sm:$0xff]
    %v151 = vld [vmem:[#allocation2 + $0x58] sm:$0xff]
    %v152 = vld [vmem:[#allocation2 + $0x60] sm:$0xff]
    %v153 = vld [vmem:[#allocation2 + $0x68] sm:$0xff]
    %v154 = vld [vmem:[#allocation2 + $0x70] sm:$0xff]
    %v155 = vld [vmem:[#allocation2 + $0x78] sm:$0xff]
    %v156 = vld [vmem:[#allocation2 + $0x80] sm:$0xff]
    %v157 = vld [vmem:[#allocation2 + $0x88] sm:$0xff]
    %v158 = vld [vmem:[#allocation2 + $0x90] sm:$0xff]
    %v159 = vld [vmem:[#allocation2 + $0x98] sm:$0xff]
    %v160 = vld [vmem:[#allocation2 + $0xa0] sm:$0xff]
    %v161 = vld [vmem:[#allocation2 + $0xa8] sm:$0xff]
    %v162 = vld [vmem:[#allocation2 + $0xb0] sm:$0xff]
    %v163 = vld [vmem:[#allocation2 + $0xb8] sm:$0xff]
    %v164 = vld [vmem:[#allocation2 + $0xc0] sm:$0xff]
    %v165 = vld [vmem:[#allocation2 + $0xc8] sm:$0xff]
    %v166 = vld [vmem:[#allocation2 + $0xd0] sm:$0xff]
    %v167 = vld [vmem:[#allocation2 + $0xd8] sm:$0xff]
    %v168 = vld [vmem:[#allocation2 + $0xe0] sm:$0xff]
    %v169 = vld [vmem:[#allocation2 + $0xe8] sm:$0xff]
    %v170 = vld [vmem:[#allocation2 + $0xf0] sm:$0xff]
    %v171 = vld [vmem:[#allocation2 + $0xf8] sm:$0xff]
    %v172 = vld [vmem:[#allocation2 + $0x100] sm:$0xff]
    %v173 = vld [vmem:[#allocation2 + $0x108] sm:$0xff]
    %v174 = vld [vmem:[#allocation2 + $0x110] sm:$0xff]
    %v175 = vld [vmem:[#allocation2 + $0x118] sm:$0xff]
    %v176 = vld [vmem:[#allocation2 + $0x120] sm:$0xff]
    %v177 = vld [vmem:[#allocation2 + $0x128] sm:$0xff]
    %v178 = vld [vmem:[#allocation2 + $0x130] sm:$0xff]
    %v179 = vld [vmem:[#allocation2 + $0x138] sm:$0xff]
    %v180 = vld [vmem:[#allocation2 + $0x140] sm:$0xff]
    %v181 = vld [vmem:[#allocation2 + $0x148] sm:$0xff]
    %v182 = vld [vmem:[#allocation2 + $0x150] sm:$0xff]
    %v183 = vld [vmem:[#allocation2 + $0x158] sm:$0xff]
    %v184 = vld [vmem:[#allocation2 + $0x160] sm:$0xff]
    %v185 = vld [vmem:[#allocation2 + $0x168] sm:$0xff]
    %v186 = vld [vmem:[#allocation2 + $0x170] sm:$0xff]
    %v187 = vld [vmem:[#allocation2 + $0x178] sm:$0xff]
    %v188 = vld [vmem:[#allocation2 + $0x180] sm:$0xff]
    %v189 = vld [vmem:[#allocation2 + $0x188] sm:$0xff]
    %v190 = vld [vmem:[#allocation2 + $0x190] sm:$0xff]
    %v191 = vld [vmem:[#allocation2 + $0x198] sm:$0xff]
    %v192 = vld [vmem:[#allocation2 + $0x1a0] sm:$0xff]
    %v193 = vld [vmem:[#allocation2 + $0x1a8] sm:$0xff]
    %v194 = vld [vmem:[#allocation2 + $0x1b0] sm:$0xff]
    %v195 = vld [vmem:[#allocation2 + $0x1b8] sm:$0xff]
    %v196 = vld [vmem:[#allocation2 + $0x1c0] sm:$0xff]
    %v197 = vld [vmem:[#allocation2 + $0x1c8] sm:$0xff]
    %v198 = vld [vmem:[#allocation2 + $0x1d0] sm:$0xff]
    %v199 = vld [vmem:[#allocation2 + $0x1d8] sm:$0xff]
    %v200 = vld [vmem:[#allocation2 + $0x1e0] sm:$0xff]
    %v201 = vld [vmem:[#allocation2 + $0x1e8] sm:$0xff]
    %v202 = vld [vmem:[#allocation2 + $0x1f0] sm:$0xff]
    %v203 = vld [vmem:[#allocation2 + $0x1f8] sm:$0xff]
    %v204 = vld [vmem:[#allocation2 + $0x200] sm:$0xff]
    %v205 = vld [vmem:[#allocation2 + $0x208] sm:$0xff]
    %v206 = vld [vmem:[#allocation2 + $0x210] sm:$0xff]
    %v207 = vld [vmem:[#allocation2 + $0x218] sm:$0xff]
    %v208 = vld [vmem:[#allocation2 + $0x220] sm:$0xff]
    %v209 = vld [vmem:[#allocation2 + $0x228] sm:$0xff]
    %v210 = vld [vmem:[#allocation2 + $0x230] sm:$0xff]
    %v211 = vld [vmem:[#allocation2 + $0x238] sm:$0xff]
    %v212 = vld [vmem:[#allocation2 + $0x240] sm:$0xff]
    %v213 = vld [vmem:[#allocation2 + $0x248] sm:$0xff]
    %v214 = vld [vmem:[#allocation2 + $0x250] sm:$0xff]
    %v215 = vld [vmem:[#allocation2 + $0x258] sm:$0xff]
    %v216 = vld [vmem:[#allocation2 + $0x260] sm:$0xff]
    %v217 = vld [vmem:[#allocation2 + $0x268] sm:$0xff]
    %v218 = vld [vmem:[#allocation2 + $0x270] sm:$0xff]
    %v219 = vld [vmem:[#allocation2 + $0x278] sm:$0xff]
    %v220 = vld [vmem:[#allocation2 + $0x280] sm:$0xff]
    %v221 = vld [vmem:[#allocation2 + $0x288] sm:$0xff]
    %v222 = vld [vmem:[#allocation2 + $0x290] sm:$0xff]
    %v223 = vld [vmem:[#allocation2 + $0x298] sm:$0xff]
    %v224 = vld [vmem:[#allocation2 + $0x2a0] sm:$0xff]
    %v225 = vld [vmem:[#allocation2 + $0x2a8] sm:$0xff]
    %v226 = vld [vmem:[#allocation2 + $0x2b0] sm:$0xff]
    %v227 = vld [vmem:[#allocation2 + $0x2b8] sm:$0xff]
    %v228 = vld [vmem:[#allocation2 + $0x2c0] sm:$0xff]
    %v229 = vld [vmem:[#allocation2 + $0x2c8] sm:$0xff]
    %v230 = vld [vmem:[#allocation2 + $0x2d0] sm:$0xff]
    %v231 = vld [vmem:[#allocation2 + $0x2d8] sm:$0xff]
    %v232 = vld [vmem:[#allocation2 + $0x2e0] sm:$0xff]
    %v233 = vld [vmem:[#allocation2 + $0x2e8] sm:$0xff]
    %v234 = vld [vmem:[#allocation2 + $0x2f0] sm:$0xff]
    %v235 = vld [vmem:[#allocation2 + $0x2f8] sm:$0xff]
    %v236 = vld [vmem:[#allocation2 + $0x300] sm:$0xff]
    %v237 = vld [vmem:[#allocation2 + $0x308] sm:$0xff]
    %v238 = vld [vmem:[#allocation2 + $0x310] sm:$0xff]
    %v239 = vld [vmem:[#allocation2 + $0x318] sm:$0xff]
    %v240 = vld [vmem:[#allocation2 + $0x320] sm:$0xff]
    %v241 = vld [vmem:[#allocation2 + $0x328] sm:$0xff]
    %v242 = vld [vmem:[#allocation2 + $0x330] sm:$0xff]
    %v243 = vld [vmem:[#allocation2 + $0x338] sm:$0xff]
    %v244 = vld [vmem:[#allocation2 + $0x340] sm:$0xff]
    %v245 = vld [vmem:[#allocation2 + $0x348] sm:$0xff]
    %v246 = vld [vmem:[#allocation2 + $0x350] sm:$0xff]
    %v247 = vld [vmem:[#allocation2 + $0x358] sm:$0xff]
    %v248 = vld [vmem:[#allocation2 + $0x360] sm:$0xff]
    %v249 = vld [vmem:[#allocation2 + $0x368] sm:$0xff]
    %v250 = vld [vmem:[#allocation2 + $0x370] sm:$0xff]
    %v251 = vld [vmem:[#allocation2 + $0x378] sm:$0xff]
    %v252 = vld [vmem:[#allocation2 + $0x380] sm:$0xff]
    %v253 = vld [vmem:[#allocation2 + $0x388] sm:$0xff]
    %v254 = vld [vmem:[#allocation2 + $0x390] sm:$0xff]
    %v255 = vld [vmem:[#allocation2 + $0x398] sm:$0xff]
    %v256 = vld [vmem:[#allocation2 + $0x3a0] sm:$0xff]
    %v257 = vld [vmem:[#allocation2 + $0x3a8] sm:$0xff]
    %v258 = vld [vmem:[#allocation2 + $0x3b0] sm:$0xff]
    %v259 = vld [vmem:[#allocation2 + $0x3b8] sm:$0xff]
    %v260 = vld [vmem:[#allocation2 + $0x3c0] sm:$0xff]
    %v261 = vld [vmem:[#allocation2 + $0x3c8] sm:$0xff]
    %v262 = vld [vmem:[#allocation2 + $0x3d0] sm:$0xff]
    %v263 = vld [vmem:[#allocation2 + $0x3d8] sm:$0xff]
    %v264 = vld [vmem:[#allocation2 + $0x3e0] sm:$0xff]
    %v265 = vld [vmem:[#allocation2 + $0x3e8] sm:$0xff]
    %v266 = vld [vmem:[#allocation2 + $0x3f0] sm:$0xff]
    %v267 = vld [vmem:[#allocation2 + $0x3f8] sm:$0xff]
    %v268 = vld [vmem:[%s2] sm:$0xff]
    %v270 = vlaneseq
    %v271 = vshrl.u32 %v270, 7
    %v272 = vsub.s32 0, %v271
    %v273 = vrot.slane %v268, %v272
    %v274 = vlaneseq
    %v275 = vshrl.u32 %v274, 7
    %v276 = vsub.s32 1, %v275
    %v277 = vrot.slane %v268, %v276
    %v278 = vlaneseq
    %v279 = vshrl.u32 %v278, 7
    %v280 = vsub.s32 2, %v279
    %v281 = vrot.slane %v268, %v280
    %v282 = vlaneseq
    %v283 = vshrl.u32 %v282, 7
    %v284 = vsub.s32 3, %v283
    %v285 = vrot.slane %v268, %v284
    %v286 = vlaneseq
    %v287 = vshrl.u32 %v286, 7
    %v288 = vsub.s32 4, %v287
    %v289 = vrot.slane %v268, %v288
    %v290 = vlaneseq
    %v291 = vshrl.u32 %v290, 7
    %v292 = vsub.s32 5, %v291
    %v293 = vrot.slane %v268, %v292
    %v294 = vlaneseq
    %v295 = vshrl.u32 %v294, 7
    %v296 = vsub.s32 6, %v295
    %v297 = vrot.slane %v268, %v296
    %v298 = vlaneseq
    %v299 = vshrl.u32 %v298, 7
    %v300 = vsub.s32 7, %v299
    %v301 = vrot.slane %v268, %v300
    %v438 = vunpack.c.l.b16 %v140
    %v439 = vunpack.c.h.b16 %v140
    %v440 = vunpack.c.l.b16 %v141
    %v441 = vunpack.c.h.b16 %v141
    %v442 = vunpack.c.l.b16 %v142
    %v443 = vunpack.c.h.b16 %v142
    %v444 = vunpack.c.l.b16 %v143
    %v445 = vunpack.c.h.b16 %v143
    %v446 = vunpack.c.l.b16 %v144
    %v447 = vunpack.c.h.b16 %v144
    %v448 = vunpack.c.l.b16 %v145
    %v449 = vunpack.c.h.b16 %v145
    %v450 = vunpack.c.l.b16 %v146
    %v451 = vunpack.c.h.b16 %v146
    %v452 = vunpack.c.l.b16 %v147
    %v453 = vunpack.c.h.b16 %v147
    %v454 = vunpack.c.l.b16 %v148
    %v455 = vunpack.c.h.b16 %v148
    %v456 = vunpack.c.l.b16 %v149
    %v457 = vunpack.c.h.b16 %v149
    %v458 = vunpack.c.l.b16 %v150
    %v459 = vunpack.c.h.b16 %v150
    %v460 = vunpack.c.l.b16 %v151
    %v461 = vunpack.c.h.b16 %v151
    %v462 = vunpack.c.l.b16 %v152
    %v463 = vunpack.c.h.b16 %v152
    %v464 = vunpack.c.l.b16 %v153
    %v465 = vunpack.c.h.b16 %v153
    %v466 = vunpack.c.l.b16 %v154
    %v467 = vunpack.c.h.b16 %v154
    %v468 = vunpack.c.l.b16 %v155
    %v469 = vunpack.c.h.b16 %v155
    %v470 = vunpack.c.l.b16 %v156
    %v471 = vunpack.c.h.b16 %v156
    %v472 = vunpack.c.l.b16 %v157
    %v473 = vunpack.c.h.b16 %v157
    %v474 = vunpack.c.l.b16 %v158
    %v475 = vunpack.c.h.b16 %v158
    %v476 = vunpack.c.l.b16 %v159
    %v477 = vunpack.c.h.b16 %v159
    %v478 = vunpack.c.l.b16 %v160
    %v479 = vunpack.c.h.b16 %v160
    %v480 = vunpack.c.l.b16 %v161
    %v481 = vunpack.c.h.b16 %v161
    %v482 = vunpack.c.l.b16 %v162
    %v483 = vunpack.c.h.b16 %v162
    %v484 = vunpack.c.l.b16 %v163
    %v485 = vunpack.c.h.b16 %v163
    %v486 = vunpack.c.l.b16 %v164
    %v487 = vunpack.c.h.b16 %v164
    %v488 = vunpack.c.l.b16 %v165
    %v489 = vunpack.c.h.b16 %v165
    %v490 = vunpack.c.l.b16 %v166
    %v491 = vunpack.c.h.b16 %v166
    %v492 = vunpack.c.l.b16 %v167
    %v493 = vunpack.c.h.b16 %v167
    %v494 = vunpack.c.l.b16 %v168
    %v495 = vunpack.c.h.b16 %v168
    %v496 = vunpack.c.l.b16 %v169
    %v497 = vunpack.c.h.b16 %v169
    %v498 = vunpack.c.l.b16 %v170
    %v499 = vunpack.c.h.b16 %v170
    %v500 = vunpack.c.l.b16 %v171
    %v501 = vunpack.c.h.b16 %v171
    %v502 = vunpack.c.l.b16 %v172
    %v503 = vunpack.c.h.b16 %v172
    %v504 = vunpack.c.l.b16 %v173
    %v505 = vunpack.c.h.b16 %v173
    %v506 = vunpack.c.l.b16 %v174
    %v507 = vunpack.c.h.b16 %v174
    %v508 = vunpack.c.l.b16 %v175
    %v509 = vunpack.c.h.b16 %v175
    %v510 = vunpack.c.l.b16 %v176
    %v511 = vunpack.c.h.b16 %v176
    %v512 = vunpack.c.l.b16 %v177
    %v513 = vunpack.c.h.b16 %v177
    %v514 = vunpack.c.l.b16 %v178
    %v515 = vunpack.c.h.b16 %v178
    %v516 = vunpack.c.l.b16 %v179
    %v517 = vunpack.c.h.b16 %v179
    %v518 = vunpack.c.l.b16 %v180
    %v519 = vunpack.c.h.b16 %v180
    %v520 = vunpack.c.l.b16 %v181
    %v521 = vunpack.c.h.b16 %v181
    %v522 = vunpack.c.l.b16 %v182
    %v523 = vunpack.c.h.b16 %v182
    %v524 = vunpack.c.l.b16 %v183
    %v525 = vunpack.c.h.b16 %v183
    %v526 = vunpack.c.l.b16 %v184
    %v527 = vunpack.c.h.b16 %v184
    %v528 = vunpack.c.l.b16 %v185
    %v529 = vunpack.c.h.b16 %v185
    %v530 = vunpack.c.l.b16 %v186
    %v531 = vunpack.c.h.b16 %v186
    %v532 = vunpack.c.l.b16 %v187
    %v533 = vunpack.c.h.b16 %v187
    %v534 = vunpack.c.l.b16 %v188
    %v535 = vunpack.c.h.b16 %v188
    %v536 = vunpack.c.l.b16 %v189
    %v537 = vunpack.c.h.b16 %v189
    %v538 = vunpack.c.l.b16 %v190
    %v539 = vunpack.c.h.b16 %v190
    %v540 = vunpack.c.l.b16 %v191
    %v541 = vunpack.c.h.b16 %v191
    %v542 = vunpack.c.l.b16 %v192
    %v543 = vunpack.c.h.b16 %v192
    %v544 = vunpack.c.l.b16 %v193
    %v545 = vunpack.c.h.b16 %v193
    %v546 = vunpack.c.l.b16 %v194
    %v547 = vunpack.c.h.b16 %v194
    %v548 = vunpack.c.l.b16 %v195
    %v549 = vunpack.c.h.b16 %v195
    %v550 = vunpack.c.l.b16 %v196
    %v551 = vunpack.c.h.b16 %v196
    %v552 = vunpack.c.l.b16 %v197
    %v553 = vunpack.c.h.b16 %v197
    %v554 = vunpack.c.l.b16 %v198
    %v555 = vunpack.c.h.b16 %v198
    %v556 = vunpack.c.l.b16 %v199
    %v557 = vunpack.c.h.b16 %v199
    %v558 = vunpack.c.l.b16 %v200
    %v559 = vunpack.c.h.b16 %v200
    %v560 = vunpack.c.l.b16 %v201
    %v561 = vunpack.c.h.b16 %v201
    %v562 = vunpack.c.l.b16 %v202
    %v563 = vunpack.c.h.b16 %v202
    %v564 = vunpack.c.l.b16 %v203
    %v565 = vunpack.c.h.b16 %v203
    %v566 = vunpack.c.l.b16 %v204
    %v567 = vunpack.c.h.b16 %v204
    %v568 = vunpack.c.l.b16 %v205
    %v569 = vunpack.c.h.b16 %v205
    %v570 = vunpack.c.l.b16 %v206
    %v571 = vunpack.c.h.b16 %v206
    %v572 = vunpack.c.l.b16 %v207
    %v573 = vunpack.c.h.b16 %v207
    %v574 = vunpack.c.l.b16 %v208
    %v575 = vunpack.c.h.b16 %v208
    %v576 = vunpack.c.l.b16 %v209
    %v577 = vunpack.c.h.b16 %v209
    %v578 = vunpack.c.l.b16 %v210
    %v579 = vunpack.c.h.b16 %v210
    %v580 = vunpack.c.l.b16 %v211
    %v581 = vunpack.c.h.b16 %v211
    %v582 = vunpack.c.l.b16 %v212
    %v583 = vunpack.c.h.b16 %v212
    %v584 = vunpack.c.l.b16 %v213
    %v585 = vunpack.c.h.b16 %v213
    %v586 = vunpack.c.l.b16 %v214
    %v587 = vunpack.c.h.b16 %v214
    %v588 = vunpack.c.l.b16 %v215
    %v589 = vunpack.c.h.b16 %v215
    %v590 = vunpack.c.l.b16 %v216
    %v591 = vunpack.c.h.b16 %v216
    %v592 = vunpack.c.l.b16 %v217
    %v593 = vunpack.c.h.b16 %v217
    %v594 = vunpack.c.l.b16 %v218
    %v595 = vunpack.c.h.b16 %v218
    %v596 = vunpack.c.l.b16 %v219
    %v597 = vunpack.c.h.b16 %v219
    %v598 = vunpack.c.l.b16 %v220
    %v599 = vunpack.c.h.b16 %v220
    %v600 = vunpack.c.l.b16 %v221
    %v601 = vunpack.c.h.b16 %v221
    %v602 = vunpack.c.l.b16 %v222
    %v603 = vunpack.c.h.b16 %v222
    %v604 = vunpack.c.l.b16 %v223
    %v605 = vunpack.c.h.b16 %v223
    %v606 = vunpack.c.l.b16 %v224
    %v607 = vunpack.c.h.b16 %v224
    %v608 = vunpack.c.l.b16 %v225
    %v609 = vunpack.c.h.b16 %v225
    %v610 = vunpack.c.l.b16 %v226
    %v611 = vunpack.c.h.b16 %v226
    %v612 = vunpack.c.l.b16 %v227
    %v613 = vunpack.c.h.b16 %v227
    %v614 = vunpack.c.l.b16 %v228
    %v615 = vunpack.c.h.b16 %v228
    %v616 = vunpack.c.l.b16 %v229
    %v617 = vunpack.c.h.b16 %v229
    %v618 = vunpack.c.l.b16 %v230
    %v619 = vunpack.c.h.b16 %v230
    %v620 = vunpack.c.l.b16 %v231
    %v621 = vunpack.c.h.b16 %v231
    %v622 = vunpack.c.l.b16 %v232
    %v623 = vunpack.c.h.b16 %v232
    %v624 = vunpack.c.l.b16 %v233
    %v625 = vunpack.c.h.b16 %v233
    %v626 = vunpack.c.l.b16 %v234
    %v627 = vunpack.c.h.b16 %v234
    %v628 = vunpack.c.l.b16 %v235
    %v629 = vunpack.c.h.b16 %v235
    %v630 = vunpack.c.l.b16 %v236
    %v631 = vunpack.c.h.b16 %v236
    %v632 = vunpack.c.l.b16 %v237
    %v633 = vunpack.c.h.b16 %v237
    %v634 = vunpack.c.l.b16 %v238
    %v635 = vunpack.c.h.b16 %v238
    %v636 = vunpack.c.l.b16 %v239
    %v637 = vunpack.c.h.b16 %v239
    %v638 = vunpack.c.l.b16 %v240
    %v639 = vunpack.c.h.b16 %v240
    %v640 = vunpack.c.l.b16 %v241
    %v641 = vunpack.c.h.b16 %v241
    %v642 = vunpack.c.l.b16 %v242
    %v643 = vunpack.c.h.b16 %v242
    %v644 = vunpack.c.l.b16 %v243
    %v645 = vunpack.c.h.b16 %v243
    %v646 = vunpack.c.l.b16 %v244
    %v647 = vunpack.c.h.b16 %v244
    %v648 = vunpack.c.l.b16 %v245
    %v649 = vunpack.c.h.b16 %v245
    %v650 = vunpack.c.l.b16 %v246
    %v651 = vunpack.c.h.b16 %v246
    %v652 = vunpack.c.l.b16 %v247
    %v653 = vunpack.c.h.b16 %v247
    %v654 = vunpack.c.l.b16 %v248
    %v655 = vunpack.c.h.b16 %v248
    %v656 = vunpack.c.l.b16 %v249
    %v657 = vunpack.c.h.b16 %v249
    %v658 = vunpack.c.l.b16 %v250
    %v659 = vunpack.c.h.b16 %v250
    %v660 = vunpack.c.l.b16 %v251
    %v661 = vunpack.c.h.b16 %v251
    %v662 = vunpack.c.l.b16 %v252
    %v663 = vunpack.c.h.b16 %v252
    %v664 = vunpack.c.l.b16 %v253
    %v665 = vunpack.c.h.b16 %v253
    %v666 = vunpack.c.l.b16 %v254
    %v667 = vunpack.c.h.b16 %v254
    %v668 = vunpack.c.l.b16 %v255
    %v669 = vunpack.c.h.b16 %v255
    %v670 = vunpack.c.l.b16 %v256
    %v671 = vunpack.c.h.b16 %v256
    %v672 = vunpack.c.l.b16 %v257
    %v673 = vunpack.c.h.b16 %v257
    %v674 = vunpack.c.l.b16 %v258
    %v675 = vunpack.c.h.b16 %v258
    %v676 = vunpack.c.l.b16 %v259
    %v677 = vunpack.c.h.b16 %v259
    %v678 = vunpack.c.l.b16 %v260
    %v679 = vunpack.c.h.b16 %v260
    %v680 = vunpack.c.l.b16 %v261
    %v681 = vunpack.c.h.b16 %v261
    %v682 = vunpack.c.l.b16 %v262
    %v683 = vunpack.c.h.b16 %v262
    %v684 = vunpack.c.l.b16 %v263
    %v685 = vunpack.c.h.b16 %v263
    %v686 = vunpack.c.l.b16 %v264
    %v687 = vunpack.c.h.b16 %v264
    %v688 = vunpack.c.l.b16 %v265
    %v689 = vunpack.c.h.b16 %v265
    %v690 = vunpack.c.l.b16 %v266
    %v691 = vunpack.c.h.b16 %v266
    %v692 = vunpack.c.l.b16 %v267
    %v693 = vunpack.c.h.b16 %v267
    %v694 = vpack.c.b16 %v446, %v438
    %v695 = vpack.c.b16 %v447, %v439
    %v696 = vpack.c.b16 %v448, %v440
    %v697 = vpack.c.b16 %v449, %v441
    %v698 = vpack.c.b16 %v450, %v442
    %v699 = vpack.c.b16 %v451, %v443
    %v700 = vpack.c.b16 %v452, %v444
    %v701 = vpack.c.b16 %v453, %v445
    %v702 = vpack.c.b16 %v462, %v454
    %v703 = vpack.c.b16 %v463, %v455
    %v704 = vpack.c.b16 %v464, %v456
    %v705 = vpack.c.b16 %v465, %v457
    %v706 = vpack.c.b16 %v466, %v458
    %v707 = vpack.c.b16 %v467, %v459
    %v708 = vpack.c.b16 %v468, %v460
    %v709 = vpack.c.b16 %v469, %v461
    %v710 = vpack.c.b16 %v478, %v470
    %v711 = vpack.c.b16 %v479, %v471
    %v712 = vpack.c.b16 %v480, %v472
    %v713 = vpack.c.b16 %v481, %v473
    %v714 = vpack.c.b16 %v482, %v474
    %v715 = vpack.c.b16 %v483, %v475
    %v716 = vpack.c.b16 %v484, %v476
    %v717 = vpack.c.b16 %v485, %v477
    %v718 = vpack.c.b16 %v494, %v486
    %v719 = vpack.c.b16 %v495, %v487
    %v720 = vpack.c.b16 %v496, %v488
    %v721 = vpack.c.b16 %v497, %v489
    %v722 = vpack.c.b16 %v498, %v490
    %v723 = vpack.c.b16 %v499, %v491
    %v724 = vpack.c.b16 %v500, %v492
    %v725 = vpack.c.b16 %v501, %v493
    %v726 = vpack.c.b16 %v510, %v502
    %v727 = vpack.c.b16 %v511, %v503
    %v728 = vpack.c.b16 %v512, %v504
    %v729 = vpack.c.b16 %v513, %v505
    %v730 = vpack.c.b16 %v514, %v506
    %v731 = vpack.c.b16 %v515, %v507
    %v732 = vpack.c.b16 %v516, %v508
    %v733 = vpack.c.b16 %v517, %v509
    %v734 = vpack.c.b16 %v526, %v518
    %v735 = vpack.c.b16 %v527, %v519
    %v736 = vpack.c.b16 %v528, %v520
    %v737 = vpack.c.b16 %v529, %v521
    %v738 = vpack.c.b16 %v530, %v522
    %v739 = vpack.c.b16 %v531, %v523
    %v740 = vpack.c.b16 %v532, %v524
    %v741 = vpack.c.b16 %v533, %v525
    %v742 = vpack.c.b16 %v542, %v534
    %v743 = vpack.c.b16 %v543, %v535
    %v744 = vpack.c.b16 %v544, %v536
    %v745 = vpack.c.b16 %v545, %v537
    %v746 = vpack.c.b16 %v546, %v538
    %v747 = vpack.c.b16 %v547, %v539
    %v748 = vpack.c.b16 %v548, %v540
    %v749 = vpack.c.b16 %v549, %v541
    %v750 = vpack.c.b16 %v558, %v550
    %v751 = vpack.c.b16 %v559, %v551
    %v752 = vpack.c.b16 %v560, %v552
    %v753 = vpack.c.b16 %v561, %v553
    %v754 = vpack.c.b16 %v562, %v554
    %v755 = vpack.c.b16 %v563, %v555
    %v756 = vpack.c.b16 %v564, %v556
    %v757 = vpack.c.b16 %v565, %v557
    %v758 = vpack.c.b16 %v574, %v566
    %v759 = vpack.c.b16 %v575, %v567
    %v760 = vpack.c.b16 %v576, %v568
    %v761 = vpack.c.b16 %v577, %v569
    %v762 = vpack.c.b16 %v578, %v570
    %v763 = vpack.c.b16 %v579, %v571
    %v764 = vpack.c.b16 %v580, %v572
    %v765 = vpack.c.b16 %v581, %v573
    %v766 = vpack.c.b16 %v590, %v582
    %v767 = vpack.c.b16 %v591, %v583
    %v768 = vpack.c.b16 %v592, %v584
    %v769 = vpack.c.b16 %v593, %v585
    %v770 = vpack.c.b16 %v594, %v586
    %v771 = vpack.c.b16 %v595, %v587
    %v772 = vpack.c.b16 %v596, %v588
    %v773 = vpack.c.b16 %v597, %v589
    %v774 = vpack.c.b16 %v606, %v598
    %v775 = vpack.c.b16 %v607, %v599
    %v776 = vpack.c.b16 %v608, %v600
    %v777 = vpack.c.b16 %v609, %v601
    %v778 = vpack.c.b16 %v610, %v602
    %v779 = vpack.c.b16 %v611, %v603
    %v780 = vpack.c.b16 %v612, %v604
    %v781 = vpack.c.b16 %v613, %v605
    %v782 = vpack.c.b16 %v622, %v614
    %v783 = vpack.c.b16 %v623, %v615
    %v784 = vpack.c.b16 %v624, %v616
    %v785 = vpack.c.b16 %v625, %v617
    %v786 = vpack.c.b16 %v626, %v618
    %v787 = vpack.c.b16 %v627, %v619
    %v788 = vpack.c.b16 %v628, %v620
    %v789 = vpack.c.b16 %v629, %v621
    %v790 = vpack.c.b16 %v638, %v630
    %v791 = vpack.c.b16 %v639, %v631
    %v792 = vpack.c.b16 %v640, %v632
    %v793 = vpack.c.b16 %v641, %v633
    %v794 = vpack.c.b16 %v642, %v634
    %v795 = vpack.c.b16 %v643, %v635
    %v796 = vpack.c.b16 %v644, %v636
    %v797 = vpack.c.b16 %v645, %v637
    %v798 = vpack.c.b16 %v654, %v646
    %v799 = vpack.c.b16 %v655, %v647
    %v800 = vpack.c.b16 %v656, %v648
    %v801 = vpack.c.b16 %v657, %v649
    %v802 = vpack.c.b16 %v658, %v650
    %v803 = vpack.c.b16 %v659, %v651
    %v804 = vpack.c.b16 %v660, %v652
    %v805 = vpack.c.b16 %v661, %v653
    %v806 = vpack.c.b16 %v670, %v662
    %v807 = vpack.c.b16 %v671, %v663
    %v808 = vpack.c.b16 %v672, %v664
    %v809 = vpack.c.b16 %v673, %v665
    %v810 = vpack.c.b16 %v674, %v666
    %v811 = vpack.c.b16 %v675, %v667
    %v812 = vpack.c.b16 %v676, %v668
    %v813 = vpack.c.b16 %v677, %v669
    %v814 = vpack.c.b16 %v686, %v678
    %v815 = vpack.c.b16 %v687, %v679
    %v816 = vpack.c.b16 %v688, %v680
    %v817 = vpack.c.b16 %v689, %v681
    %v818 = vpack.c.b16 %v690, %v682
    %v819 = vpack.c.b16 %v691, %v683
    %v820 = vpack.c.b16 %v692, %v684
    %v821 = vpack.c.b16 %v693, %v685
    %950 = vmatprep.subr.bf16.mxu0 %v695
    %951 = vmatpush1.bf16.msra.mxu0 %v694
    %952 = vmatprep.subr.bf16.mxu0 %v703
    %953 = vmatpush1.bf16.msra.mxu0 %v702
    %954 = vmatprep.subr.bf16.mxu0 %v711
    %955 = vmatpush1.bf16.msra.mxu0 %v710
    %956 = vmatprep.subr.bf16.mxu0 %v719
    %957 = vmatpush1.bf16.msra.mxu0 %v718
    %958 = vmatprep.subr.bf16.mxu0 %v727
    %959 = vmatpush1.bf16.msra.mxu0 %v726
    %960 = vmatprep.subr.bf16.mxu0 %v735
    %961 = vmatpush1.bf16.msra.mxu0 %v734
    %962 = vmatprep.subr.bf16.mxu0 %v743
    %963 = vmatpush1.bf16.msra.mxu0 %v742
    %964 = vmatprep.subr.bf16.mxu0 %v751
    %965 = vmatpush1.bf16.msra.mxu0 %v750
    %966 = vmatprep.subr.bf16.mxu0 %v759
    %967 = vmatpush1.bf16.msra.mxu0 %v758
    %968 = vmatprep.subr.bf16.mxu0 %v767
    %969 = vmatpush1.bf16.msra.mxu0 %v766
    %970 = vmatprep.subr.bf16.mxu0 %v775
    %971 = vmatpush1.bf16.msra.mxu0 %v774
    %972 = vmatprep.subr.bf16.mxu0 %v783
    %973 = vmatpush1.bf16.msra.mxu0 %v782
    %974 = vmatprep.subr.bf16.mxu0 %v791
    %975 = vmatpush1.bf16.msra.mxu0 %v790
    %976 = vmatprep.subr.bf16.mxu0 %v799
    %977 = vmatpush1.bf16.msra.mxu0 %v798
    %978 = vmatprep.subr.bf16.mxu0 %v807
    %979 = vmatpush1.bf16.msra.mxu0 %v806
    %980 = vmatprep.subr.bf16.mxu0 %v815
    %981 = vmatpush1.bf16.msra.mxu0 %v814
    %982 = vmatprep.mubr.bf16.mxu0 %v139
    %983 = vmatmul.mubr.bf16.gmra.mrb[0].mxu0 %v138
    %v984 = vpop.f32.mrb[0].mxu0
    %v985 = vadd.f32 %v273, %v984
    %v986 = vpop.f32.mrb[0].mxu0
    %v987 = vadd.f32 %v277, %v986
    %v988 = vpop.f32.mrb[0].mxu0
    %v989 = vpop.f32.mrb[0].mxu0
    %990 = vdwg.mxu0
    %991 = vmatprep.subr.bf16.mxu0 %v697
    %992 = vmatpush1.bf16.msra.mxu0 %v696
    %993 = vmatprep.subr.bf16.mxu0 %v705
    %994 = vmatpush1.bf16.msra.mxu0 %v704
    %995 = vmatprep.subr.bf16.mxu0 %v713
    %996 = vmatpush1.bf16.msra.mxu0 %v712
    %997 = vmatprep.subr.bf16.mxu0 %v721
    %998 = vmatpush1.bf16.msra.mxu0 %v720
    %999 = vmatprep.subr.bf16.mxu0 %v729
    %1000 = vmatpush1.bf16.msra.mxu0 %v728
    %1001 = vmatprep.subr.bf16.mxu0 %v737
    %1002 = vmatpush1.bf16.msra.mxu0 %v736
    %1003 = vmatprep.subr.bf16.mxu0 %v745
    %1004 = vmatpush1.bf16.msra.mxu0 %v744
    %1005 = vmatprep.subr.bf16.mxu0 %v753
    %1006 = vmatpush1.bf16.msra.mxu0 %v752
    %1007 = vmatprep.subr.bf16.mxu0 %v761
    %1008 = vmatpush1.bf16.msra.mxu0 %v760
    %1009 = vmatprep.subr.bf16.mxu0 %v769
    %1010 = vmatpush1.bf16.msra.mxu0 %v768
    %1011 = vmatprep.subr.bf16.mxu0 %v777
    %1012 = vmatpush1.bf16.msra.mxu0 %v776
    %1013 = vmatprep.subr.bf16.mxu0 %v785
    %1014 = vmatpush1.bf16.msra.mxu0 %v784
    %1015 = vmatprep.subr.bf16.mxu0 %v793
    %1016 = vmatpush1.bf16.msra.mxu0 %v792
    %1017 = vmatprep.subr.bf16.mxu0 %v801
    %1018 = vmatpush1.bf16.msra.mxu0 %v800
    %1019 = vmatprep.subr.bf16.mxu0 %v809
    %1020 = vmatpush1.bf16.msra.mxu0 %v808
    %1021 = vmatprep.subr.bf16.mxu0 %v817
    %1022 = vmatpush1.bf16.msra.mxu0 %v816
    %1023 = vmatprep.mubr.bf16.mxu0 %v139
    %1024 = vmatmul.mubr.bf16.gmra.mrb[0].mxu0 %v138
    %v1025 = vpop.f32.mrb[0].mxu0
    %v1026 = vadd.f32 %v281, %v1025
    %v1027 = vpop.f32.mrb[0].mxu0
    %v1028 = vadd.f32 %v285, %v1027
    %v1029 = vpop.f32.mrb[0].mxu0
    %v1030 = vpop.f32.mrb[0].mxu0
    %1031 = vdwg.mxu0
    %1032 = vmatprep.subr.bf16.mxu0 %v699
    %1033 = vmatpush1.bf16.msra.mxu0 %v698
    %1034 = vmatprep.subr.bf16.mxu0 %v707
    %1035 = vmatpush1.bf16.msra.mxu0 %v706
    %1036 = vmatprep.subr.bf16.mxu0 %v715
    %1037 = vmatpush1.bf16.msra.mxu0 %v714
    %1038 = vmatprep.subr.bf16.mxu0 %v723
    %1039 = vmatpush1.bf16.msra.mxu0 %v722
    %1040 = vmatprep.subr.bf16.mxu0 %v731
    %1041 = vmatpush1.bf16.msra.mxu0 %v730
    %1042 = vmatprep.subr.bf16.mxu0 %v739
    %1043 = vmatpush1.bf16.msra.mxu0 %v738
    %1044 = vmatprep.subr.bf16.mxu0 %v747
    %1045 = vmatpush1.bf16.msra.mxu0 %v746
    %1046 = vmatprep.subr.bf16.mxu0 %v755
    %1047 = vmatpush1.bf16.msra.mxu0 %v754
    %1048 = vmatprep.subr.bf16.mxu0 %v763
    %1049 = vmatpush1.bf16.msra.mxu0 %v762
    %1050 = vmatprep.subr.bf16.mxu0 %v771
    %1051 = vmatpush1.bf16.msra.mxu0 %v770
    %1052 = vmatprep.subr.bf16.mxu0 %v779
    %1053 = vmatpush1.bf16.msra.mxu0 %v778
    %1054 = vmatprep.subr.bf16.mxu0 %v787
    %1055 = vmatpush1.bf16.msra.mxu0 %v786
    %1056 = vmatprep.subr.bf16.mxu0 %v795
    %1057 = vmatpush1.bf16.msra.mxu0 %v794
    %1058 = vmatprep.subr.bf16.mxu0 %v803
    %1059 = vmatpush1.bf16.msra.mxu0 %v802
    %1060 = vmatprep.subr.bf16.mxu0 %v811
    %1061 = vmatpush1.bf16.msra.mxu0 %v810
    %1062 = vmatprep.subr.bf16.mxu0 %v819
    %1063 = vmatpush1.bf16.msra.mxu0 %v818
    %1064 = vmatprep.mubr.bf16.mxu0 %v139
    %1065 = vmatmul.mubr.bf16.gmra.mrb[0].mxu0 %v138
    %v1066 = vpop.f32.mrb[0].mxu0
    %v1067 = vadd.f32 %v289, %v1066
    %v1068 = vpop.f32.mrb[0].mxu0
    %v1069 = vadd.f32 %v293, %v1068
    %v1070 = vpop.f32.mrb[0].mxu0
    %v1071 = vpop.f32.mrb[0].mxu0
    %1072 = vdwg.mxu0
    %1073 = vmatprep.subr.bf16.mxu0 %v701
    %1074 = vmatpush1.bf16.msra.mxu0 %v700
    %1075 = vmatprep.subr.bf16.mxu0 %v709
    %1076 = vmatpush1.bf16.msra.mxu0 %v708
    %1077 = vmatprep.subr.bf16.mxu0 %v717
    %1078 = vmatpush1.bf16.msra.mxu0 %v716
    %1079 = vmatprep.subr.bf16.mxu0 %v725
    %1080 = vmatpush1.bf16.msra.mxu0 %v724
    %1081 = vmatprep.subr.bf16.mxu0 %v733
    %1082 = vmatpush1.bf16.msra.mxu0 %v732
    %1083 = vmatprep.subr.bf16.mxu0 %v741
    %1084 = vmatpush1.bf16.msra.mxu0 %v740
    %1085 = vmatprep.subr.bf16.mxu0 %v749
    %1086 = vmatpush1.bf16.msra.mxu0 %v748
    %1087 = vmatprep.subr.bf16.mxu0 %v757
    %1088 = vmatpush1.bf16.msra.mxu0 %v756
    %1089 = vmatprep.subr.bf16.mxu0 %v765
    %1090 = vmatpush1.bf16.msra.mxu0 %v764
    %1091 = vmatprep.subr.bf16.mxu0 %v773
    %1092 = vmatpush1.bf16.msra.mxu0 %v772
    %1093 = vmatprep.subr.bf16.mxu0 %v781
    %1094 = vmatpush1.bf16.msra.mxu0 %v780
    %1095 = vmatprep.subr.bf16.mxu0 %v789
    %1096 = vmatpush1.bf16.msra.mxu0 %v788
    %1097 = vmatprep.subr.bf16.mxu0 %v797
    %1098 = vmatpush1.bf16.msra.mxu0 %v796
    %1099 = vmatprep.subr.bf16.mxu0 %v805
    %1100 = vmatpush1.bf16.msra.mxu0 %v804
    %1101 = vmatprep.subr.bf16.mxu0 %v813
    %1102 = vmatpush1.bf16.msra.mxu0 %v812
    %1103 = vmatprep.subr.bf16.mxu0 %v821
    %1104 = vmatpush1.bf16.msra.mxu0 %v820
    %1105 = vmatprep.mubr.bf16.mxu0 %v139
    %1106 = vmatmul.mubr.bf16.gmra.mrb[0].mxu0 %v138
    %v1107 = vpop.f32.mrb[0].mxu0
    %v1108 = vadd.f32 %v297, %v1107
    %v1109 = vpop.f32.mrb[0].mxu0
    %v1110 = vadd.f32 %v301, %v1109
    %v1111 = vpop.f32.mrb[0].mxu0
    %v1112 = vpop.f32.mrb[0].mxu0
    %1113 = vdwg.mxu0
    %v1114 = vadd.f32 %v985, %v987
    %v1115 = vadd.f32 %v1114, %v1026
    %v1116 = vadd.f32 %v1115, %v1028
    %v1117 = vadd.f32 %v1116, %v1067
    %v1118 = vadd.f32 %v1117, %v1069
    %v1119 = vadd.f32 %v1118, %v1108
    %v1120 = vadd.f32 %v1119, %v1110
    %1121 = vadd.xlane.f32.xlu0 %v1120
    %v1122 = vpop.xlane.xlu0 %1121
    %v1123 = vmul.f32 %v985, %v985
    %v1124 = vmul.f32 %v987, %v987
    %v1125 = vmul.f32 %v1026, %v1026
    %v1126 = vmul.f32 %v1028, %v1028
    %v1127 = vmul.f32 %v1067, %v1067
    %v1128 = vmul.f32 %v1069, %v1069
    %v1129 = vmul.f32 %v1108, %v1108
    %v1130 = vmul.f32 %v1110, %v1110
    %v1131 = vadd.f32 %v1123, %v1124
    %v1132 = vadd.f32 %v1131, %v1125
    %v1133 = vadd.f32 %v1132, %v1126
    %v1134 = vadd.f32 %v1133, %v1127
    %v1135 = vadd.f32 %v1134, %v1128
    %v1136 = vadd.f32 %v1135, %v1129
    %v1137 = vadd.f32 %v1136, %v1130
    %1138 = vadd.xlane.f32.xlu0 %v1137
    %v1139 = vpop.xlane.xlu0 %1138
    %v1140 = vmul.f32 %v1122, 0.0009765625
    %v1141 = vmul.f32 %v1139, 0.0009765625
    %v1142 = vmul.f32 %v1140, %v1140
    %v1143 = vsub.f32 %v1141, %v1142
    %v1144 = vmax.f32 %v1143, 0.0
    %v1145 = vld [vmem:[%s3] sm:$0xff]
    %v1146 = vadd.f32 %v1144, 1e-05
    %v1147 = vrsqrt.pop %v1146
    %v1149 = vlaneseq
    %v1150 = vshrl.u32 %v1149, 7
    %v1151 = vsub.s32 0, %v1150
    %v1152 = vrot.slane %v1145, %v1151
    %v1153 = vlaneseq
    %v1154 = vshrl.u32 %v1153, 7
    %v1155 = vsub.s32 1, %v1154
    %v1156 = vrot.slane %v1145, %v1155
    %v1157 = vlaneseq
    %v1158 = vshrl.u32 %v1157, 7
    %v1159 = vsub.s32 2, %v1158
    %v1160 = vrot.slane %v1145, %v1159
    %v1161 = vlaneseq
    %v1162 = vshrl.u32 %v1161, 7
    %v1163 = vsub.s32 3, %v1162
    %v1164 = vrot.slane %v1145, %v1163
    %v1165 = vlaneseq
    %v1166 = vshrl.u32 %v1165, 7
    %v1167 = vsub.s32 4, %v1166
    %v1168 = vrot.slane %v1145, %v1167
    %v1169 = vlaneseq
    %v1170 = vshrl.u32 %v1169, 7
    %v1171 = vsub.s32 5, %v1170
    %v1172 = vrot.slane %v1145, %v1171
    %v1173 = vlaneseq
    %v1174 = vshrl.u32 %v1173, 7
    %v1175 = vsub.s32 6, %v1174
    %v1176 = vrot.slane %v1145, %v1175
    %v1177 = vlaneseq
    %v1178 = vshrl.u32 %v1177, 7
    %v1179 = vsub.s32 7, %v1178
    %v1180 = vrot.slane %v1145, %v1179
    %v1189 = vmul.f32 %v1152, %v1147
    %v1190 = vmul.f32 %v1156, %v1147
    %v1191 = vmul.f32 %v1160, %v1147
    %v1192 = vmul.f32 %v1164, %v1147
    %v1193 = vmul.f32 %v1168, %v1147
    %v1194 = vmul.f32 %v1172, %v1147
    %v1195 = vmul.f32 %v1176, %v1147
    %v1196 = vmul.f32 %v1180, %v1147
    %v1197 = vsub.f32 %v985, %v1140
    %v1198 = vsub.f32 %v987, %v1140
    %v1199 = vsub.f32 %v1026, %v1140
    %v1200 = vsub.f32 %v1028, %v1140
    %v1201 = vsub.f32 %v1067, %v1140
    %v1202 = vsub.f32 %v1069, %v1140
    %v1203 = vsub.f32 %v1108, %v1140
    %v1204 = vsub.f32 %v1110, %v1140
    %v1205 = vmul.f32 %v1197, %v1189
    %v1206 = vmul.f32 %v1198, %v1190
    %v1207 = vmul.f32 %v1199, %v1191
    %v1208 = vmul.f32 %v1200, %v1192
    %v1209 = vmul.f32 %v1201, %v1193
    %v1210 = vmul.f32 %v1202, %v1194
    %v1211 = vmul.f32 %v1203, %v1195
    %v1212 = vmul.f32 %v1204, %v1196
    %v1213 = vld [vmem:[%s4] sm:$0xff]
    %v1215 = vlaneseq
    %v1216 = vshrl.u32 %v1215, 7
    %v1217 = vsub.s32 0, %v1216
    %v1218 = vrot.slane %v1213, %v1217
    %v1219 = vlaneseq
    %v1220 = vshrl.u32 %v1219, 7
    %v1221 = vsub.s32 1, %v1220
    %v1222 = vrot.slane %v1213, %v1221
    %v1223 = vlaneseq
    %v1224 = vshrl.u32 %v1223, 7
    %v1225 = vsub.s32 2, %v1224
    %v1226 = vrot.slane %v1213, %v1225
    %v1227 = vlaneseq
    %v1228 = vshrl.u32 %v1227, 7
    %v1229 = vsub.s32 3, %v1228
    %v1230 = vrot.slane %v1213, %v1229
    %v1231 = vlaneseq
    %v1232 = vshrl.u32 %v1231, 7
    %v1233 = vsub.s32 4, %v1232
    %v1234 = vrot.slane %v1213, %v1233
    %v1235 = vlaneseq
    %v1236 = vshrl.u32 %v1235, 7
    %v1237 = vsub.s32 5, %v1236
    %v1238 = vrot.slane %v1213, %v1237
    %v1239 = vlaneseq
    %v1240 = vshrl.u32 %v1239, 7
    %v1241 = vsub.s32 6, %v1240
    %v1242 = vrot.slane %v1213, %v1241
    %v1243 = vlaneseq
    %v1244 = vshrl.u32 %v1243, 7
    %v1245 = vsub.s32 7, %v1244
    %v1246 = vrot.slane %v1213, %v1245
    %v1255 = vadd.f32 %v1205, %v1218
    %v1256 = vadd.f32 %v1206, %v1222
    %v1257 = vadd.f32 %v1207, %v1226
    %v1258 = vadd.f32 %v1208, %v1230
    %v1259 = vadd.f32 %v1209, %v1234
    %v1260 = vadd.f32 %v1210, %v1238
    %v1261 = vadd.f32 %v1211, %v1242
    %v1262 = vadd.f32 %v1212, %v1246
    %v1263 = vmax.f32 %v1255, 0.0
    %v1264 = vmax.f32 %v1256, 0.0
    %v1265 = vmax.f32 %v1257, 0.0
    %v1266 = vmax.f32 %v1258, 0.0
    %v1267 = vmax.f32 %v1259, 0.0
    %v1268 = vmax.f32 %v1260, 0.0
    %v1269 = vmax.f32 %v1261, 0.0
    %v1270 = vmax.f32 %v1262, 0.0
    %v1271 = vpack.c.bf16 %v1263, %v1263
    %v1272 = vpack.c.bf16 %v1264, %v1264
    %v1273 = vpack.c.bf16 %v1265, %v1265
    %v1274 = vpack.c.bf16 %v1266, %v1266
    %v1275 = vpack.c.bf16 %v1267, %v1267
    %v1276 = vpack.c.bf16 %v1268, %v1268
    %v1277 = vpack.c.bf16 %v1269, %v1269
    %v1278 = vpack.c.bf16 %v1270, %v1270
    %v1279 = vld [vmem:[#allocation5] sm:$0xf]
    %v1280 = vld [vmem:[#allocation5 + $0x4] sm:$0xf]
    %v1281 = vld [vmem:[#allocation5 + $0x8] sm:$0xf]
    %v1282 = vld [vmem:[#allocation5 + $0xc] sm:$0xf]
    %v1283 = vld [vmem:[#allocation5 + $0x10] sm:$0xf]
    %v1284 = vld [vmem:[#allocation5 + $0x14] sm:$0xf]
    %v1285 = vld [vmem:[#allocation5 + $0x18] sm:$0xf]
    %v1286 = vld [vmem:[#allocation5 + $0x1c] sm:$0xf]
    %v1287 = vld [vmem:[#allocation5 + $0x20] sm:$0xf]
    %v1288 = vld [vmem:[#allocation5 + $0x24] sm:$0xf]
    %v1289 = vld [vmem:[#allocation5 + $0x28] sm:$0xf]
    %v1290 = vld [vmem:[#allocation5 + $0x2c] sm:$0xf]
    %v1291 = vld [vmem:[#allocation5 + $0x30] sm:$0xf]
    %v1292 = vld [vmem:[#allocation5 + $0x34] sm:$0xf]
    %v1293 = vld [vmem:[#allocation5 + $0x38] sm:$0xf]
    %v1294 = vld [vmem:[#allocation5 + $0x3c] sm:$0xf]
    %v1295 = vld [vmem:[#allocation5 + $0x40] sm:$0xf]
    %v1296 = vld [vmem:[#allocation5 + $0x44] sm:$0xf]
    %v1297 = vld [vmem:[#allocation5 + $0x48] sm:$0xf]
    %v1298 = vld [vmem:[#allocation5 + $0x4c] sm:$0xf]
    %v1299 = vld [vmem:[#allocation5 + $0x50] sm:$0xf]
    %v1300 = vld [vmem:[#allocation5 + $0x54] sm:$0xf]
    %v1301 = vld [vmem:[#allocation5 + $0x58] sm:$0xf]
    %v1302 = vld [vmem:[#allocation5 + $0x5c] sm:$0xf]
    %v1303 = vld [vmem:[#allocation5 + $0x60] sm:$0xf]
    %v1304 = vld [vmem:[#allocation5 + $0x64] sm:$0xf]
    %v1305 = vld [vmem:[#allocation5 + $0x68] sm:$0xf]
    %v1306 = vld [vmem:[#allocation5 + $0x6c] sm:$0xf]
    %v1307 = vld [vmem:[#allocation5 + $0x70] sm:$0xf]
    %v1308 = vld [vmem:[#allocation5 + $0x74] sm:$0xf]
    %v1309 = vld [vmem:[#allocation5 + $0x78] sm:$0xf]
    %v1310 = vld [vmem:[#allocation5 + $0x7c] sm:$0xf]
    %v1311 = vld [vmem:[#allocation5 + $0x80] sm:$0xf]
    %v1312 = vld [vmem:[#allocation5 + $0x84] sm:$0xf]
    %v1313 = vld [vmem:[#allocation5 + $0x88] sm:$0xf]
    %v1314 = vld [vmem:[#allocation5 + $0x8c] sm:$0xf]
    %v1315 = vld [vmem:[#allocation5 + $0x90] sm:$0xf]
    %v1316 = vld [vmem:[#allocation5 + $0x94] sm:$0xf]
    %v1317 = vld [vmem:[#allocation5 + $0x98] sm:$0xf]
    %v1318 = vld [vmem:[#allocation5 + $0x9c] sm:$0xf]
    %v1319 = vld [vmem:[#allocation5 + $0xa0] sm:$0xf]
    %v1320 = vld [vmem:[#allocation5 + $0xa4] sm:$0xf]
    %v1321 = vld [vmem:[#allocation5 + $0xa8] sm:$0xf]
    %v1322 = vld [vmem:[#allocation5 + $0xac] sm:$0xf]
    %v1323 = vld [vmem:[#allocation5 + $0xb0] sm:$0xf]
    %v1324 = vld [vmem:[#allocation5 + $0xb4] sm:$0xf]
    %v1325 = vld [vmem:[#allocation5 + $0xb8] sm:$0xf]
    %v1326 = vld [vmem:[#allocation5 + $0xbc] sm:$0xf]
    %v1327 = vld [vmem:[#allocation5 + $0xc0] sm:$0xf]
    %v1328 = vld [vmem:[#allocation5 + $0xc4] sm:$0xf]
    %v1329 = vld [vmem:[#allocation5 + $0xc8] sm:$0xf]
    %v1330 = vld [vmem:[#allocation5 + $0xcc] sm:$0xf]
    %v1331 = vld [vmem:[#allocation5 + $0xd0] sm:$0xf]
    %v1332 = vld [vmem:[#allocation5 + $0xd4] sm:$0xf]
    %v1333 = vld [vmem:[#allocation5 + $0xd8] sm:$0xf]
    %v1334 = vld [vmem:[#allocation5 + $0xdc] sm:$0xf]
    %v1335 = vld [vmem:[#allocation5 + $0xe0] sm:$0xf]
    %v1336 = vld [vmem:[#allocation5 + $0xe4] sm:$0xf]
    %v1337 = vld [vmem:[#allocation5 + $0xe8] sm:$0xf]
    %v1338 = vld [vmem:[#allocation5 + $0xec] sm:$0xf]
    %v1339 = vld [vmem:[#allocation5 + $0xf0] sm:$0xf]
    %v1340 = vld [vmem:[#allocation5 + $0xf4] sm:$0xf]
    %v1341 = vld [vmem:[#allocation5 + $0xf8] sm:$0xf]
    %v1342 = vld [vmem:[#allocation5 + $0xfc] sm:$0xf]
    %v1343 = vld [vmem:[#allocation5 + $0x100] sm:$0xf]
    %v1344 = vld [vmem:[#allocation5 + $0x104] sm:$0xf]
    %v1345 = vld [vmem:[#allocation5 + $0x108] sm:$0xf]
    %v1346 = vld [vmem:[#allocation5 + $0x10c] sm:$0xf]
    %v1347 = vld [vmem:[#allocation5 + $0x110] sm:$0xf]
    %v1348 = vld [vmem:[#allocation5 + $0x114] sm:$0xf]
    %v1349 = vld [vmem:[#allocation5 + $0x118] sm:$0xf]
    %v1350 = vld [vmem:[#allocation5 + $0x11c] sm:$0xf]
    %v1351 = vld [vmem:[#allocation5 + $0x120] sm:$0xf]
    %v1352 = vld [vmem:[#allocation5 + $0x124] sm:$0xf]
    %v1353 = vld [vmem:[#allocation5 + $0x128] sm:$0xf]
    %v1354 = vld [vmem:[#allocation5 + $0x12c] sm:$0xf]
    %v1355 = vld [vmem:[#allocation5 + $0x130] sm:$0xf]
    %v1356 = vld [vmem:[#allocation5 + $0x134] sm:$0xf]
    %v1357 = vld [vmem:[#allocation5 + $0x138] sm:$0xf]
    %v1358 = vld [vmem:[#allocation5 + $0x13c] sm:$0xf]
    %v1359 = vld [vmem:[#allocation5 + $0x140] sm:$0xf]
    %v1360 = vld [vmem:[#allocation5 + $0x144] sm:$0xf]
    %v1361 = vld [vmem:[#allocation5 + $0x148] sm:$0xf]
    %v1362 = vld [vmem:[#allocation5 + $0x14c] sm:$0xf]
    %v1363 = vld [vmem:[#allocation5 + $0x150] sm:$0xf]
    %v1364 = vld [vmem:[#allocation5 + $0x154] sm:$0xf]
    %v1365 = vld [vmem:[#allocation5 + $0x158] sm:$0xf]
    %v1366 = vld [vmem:[#allocation5 + $0x15c] sm:$0xf]
    %v1367 = vld [vmem:[#allocation5 + $0x160] sm:$0xf]
    %v1368 = vld [vmem:[#allocation5 + $0x164] sm:$0xf]
    %v1369 = vld [vmem:[#allocation5 + $0x168] sm:$0xf]
    %v1370 = vld [vmem:[#allocation5 + $0x16c] sm:$0xf]
    %v1371 = vld [vmem:[#allocation5 + $0x170] sm:$0xf]
    %v1372 = vld [vmem:[#allocation5 + $0x174] sm:$0xf]
    %v1373 = vld [vmem:[#allocation5 + $0x178] sm:$0xf]
    %v1374 = vld [vmem:[#allocation5 + $0x17c] sm:$0xf]
    %v1375 = vld [vmem:[#allocation5 + $0x180] sm:$0xf]
    %v1376 = vld [vmem:[#allocation5 + $0x184] sm:$0xf]
    %v1377 = vld [vmem:[#allocation5 + $0x188] sm:$0xf]
    %v1378 = vld [vmem:[#allocation5 + $0x18c] sm:$0xf]
    %v1379 = vld [vmem:[#allocation5 + $0x190] sm:$0xf]
    %v1380 = vld [vmem:[#allocation5 + $0x194] sm:$0xf]
    %v1381 = vld [vmem:[#allocation5 + $0x198] sm:$0xf]
    %v1382 = vld [vmem:[#allocation5 + $0x19c] sm:$0xf]
    %v1383 = vld [vmem:[#allocation5 + $0x1a0] sm:$0xf]
    %v1384 = vld [vmem:[#allocation5 + $0x1a4] sm:$0xf]
    %v1385 = vld [vmem:[#allocation5 + $0x1a8] sm:$0xf]
    %v1386 = vld [vmem:[#allocation5 + $0x1ac] sm:$0xf]
    %v1387 = vld [vmem:[#allocation5 + $0x1b0] sm:$0xf]
    %v1388 = vld [vmem:[#allocation5 + $0x1b4] sm:$0xf]
    %v1389 = vld [vmem:[#allocation5 + $0x1b8] sm:$0xf]
    %v1390 = vld [vmem:[#allocation5 + $0x1bc] sm:$0xf]
    %v1391 = vld [vmem:[#allocation5 + $0x1c0] sm:$0xf]
    %v1392 = vld [vmem:[#allocation5 + $0x1c4] sm:$0xf]
    %v1393 = vld [vmem:[#allocation5 + $0x1c8] sm:$0xf]
    %v1394 = vld [vmem:[#allocation5 + $0x1cc] sm:$0xf]
    %v1395 = vld [vmem:[#allocation5 + $0x1d0] sm:$0xf]
    %v1396 = vld [vmem:[#allocation5 + $0x1d4] sm:$0xf]
    %v1397 = vld [vmem:[#allocation5 + $0x1d8] sm:$0xf]
    %v1398 = vld [vmem:[#allocation5 + $0x1dc] sm:$0xf]
    %v1399 = vld [vmem:[#allocation5 + $0x1e0] sm:$0xf]
    %v1400 = vld [vmem:[#allocation5 + $0x1e4] sm:$0xf]
    %v1401 = vld [vmem:[#allocation5 + $0x1e8] sm:$0xf]
    %v1402 = vld [vmem:[#allocation5 + $0x1ec] sm:$0xf]
    %v1403 = vld [vmem:[#allocation5 + $0x1f0] sm:$0xf]
    %v1404 = vld [vmem:[#allocation5 + $0x1f4] sm:$0xf]
    %v1405 = vld [vmem:[#allocation5 + $0x1f8] sm:$0xf]
    %v1406 = vld [vmem:[#allocation5 + $0x1fc] sm:$0xf]
    %v1407 = vld [vmem:[%s6] sm:$0x1]
    %v1409 = vlaneseq
    %v1410 = vshrl.u32 %v1409, 7
    %v1411 = vsub.s32 0, %v1410
    %v1412 = vrot.slane %v1407, %v1411
    %v1542 = vunpack.c.l.b16 %v1279
    %v1543 = vunpack.c.l.b16 %v1280
    %v1544 = vunpack.c.l.b16 %v1281
    %v1545 = vunpack.c.l.b16 %v1282
    %v1546 = vunpack.c.l.b16 %v1283
    %v1547 = vunpack.c.l.b16 %v1284
    %v1548 = vunpack.c.l.b16 %v1285
    %v1549 = vunpack.c.l.b16 %v1286
    %v1550 = vunpack.c.l.b16 %v1287
    %v1551 = vunpack.c.l.b16 %v1288
    %v1552 = vunpack.c.l.b16 %v1289
    %v1553 = vunpack.c.l.b16 %v1290
    %v1554 = vunpack.c.l.b16 %v1291
    %v1555 = vunpack.c.l.b16 %v1292
    %v1556 = vunpack.c.l.b16 %v1293
    %v1557 = vunpack.c.l.b16 %v1294
    %v1558 = vunpack.c.l.b16 %v1295
    %v1559 = vunpack.c.l.b16 %v1296
    %v1560 = vunpack.c.l.b16 %v1297
    %v1561 = vunpack.c.l.b16 %v1298
    %v1562 = vunpack.c.l.b16 %v1299
    %v1563 = vunpack.c.l.b16 %v1300
    %v1564 = vunpack.c.l.b16 %v1301
    %v1565 = vunpack.c.l.b16 %v1302
    %v1566 = vunpack.c.l.b16 %v1303
    %v1567 = vunpack.c.l.b16 %v1304
    %v1568 = vunpack.c.l.b16 %v1305
    %v1569 = vunpack.c.l.b16 %v1306
    %v1570 = vunpack.c.l.b16 %v1307
    %v1571 = vunpack.c.l.b16 %v1308
    %v1572 = vunpack.c.l.b16 %v1309
    %v1573 = vunpack.c.l.b16 %v1310
    %v1574 = vunpack.c.l.b16 %v1311
    %v1575 = vunpack.c.l.b16 %v1312
    %v1576 = vunpack.c.l.b16 %v1313
    %v1577 = vunpack.c.l.b16 %v1314
    %v1578 = vunpack.c.l.b16 %v1315
    %v1579 = vunpack.c.l.b16 %v1316
    %v1580 = vunpack.c.l.b16 %v1317
    %v1581 = vunpack.c.l.b16 %v1318
    %v1582 = vunpack.c.l.b16 %v1319
    %v1583 = vunpack.c.l.b16 %v1320
    %v1584 = vunpack.c.l.b16 %v1321
    %v1585 = vunpack.c.l.b16 %v1322
    %v1586 = vunpack.c.l.b16 %v1323
    %v1587 = vunpack.c.l.b16 %v1324
    %v1588 = vunpack.c.l.b16 %v1325
    %v1589 = vunpack.c.l.b16 %v1326
    %v1590 = vunpack.c.l.b16 %v1327
    %v1591 = vunpack.c.l.b16 %v1328
    %v1592 = vunpack.c.l.b16 %v1329
    %v1593 = vunpack.c.l.b16 %v1330
    %v1594 = vunpack.c.l.b16 %v1331
    %v1595 = vunpack.c.l.b16 %v1332
    %v1596 = vunpack.c.l.b16 %v1333
    %v1597 = vunpack.c.l.b16 %v1334
    %v1598 = vunpack.c.l.b16 %v1335
    %v1599 = vunpack.c.l.b16 %v1336
    %v1600 = vunpack.c.l.b16 %v1337
    %v1601 = vunpack.c.l.b16 %v1338
    %v1602 = vunpack.c.l.b16 %v1339
    %v1603 = vunpack.c.l.b16 %v1340
    %v1604 = vunpack.c.l.b16 %v1341
    %v1605 = vunpack.c.l.b16 %v1342
    %v1606 = vunpack.c.l.b16 %v1343
    %v1607 = vunpack.c.l.b16 %v1344
    %v1608 = vunpack.c.l.b16 %v1345
    %v1609 = vunpack.c.l.b16 %v1346
    %v1610 = vunpack.c.l.b16 %v1347
    %v1611 = vunpack.c.l.b16 %v1348
    %v1612 = vunpack.c.l.b16 %v1349
    %v1613 = vunpack.c.l.b16 %v1350
    %v1614 = vunpack.c.l.b16 %v1351
    %v1615 = vunpack.c.l.b16 %v1352
    %v1616 = vunpack.c.l.b16 %v1353
    %v1617 = vunpack.c.l.b16 %v1354
    %v1618 = vunpack.c.l.b16 %v1355
    %v1619 = vunpack.c.l.b16 %v1356
    %v1620 = vunpack.c.l.b16 %v1357
    %v1621 = vunpack.c.l.b16 %v1358
    %v1622 = vunpack.c.l.b16 %v1359
    %v1623 = vunpack.c.l.b16 %v1360
    %v1624 = vunpack.c.l.b16 %v1361
    %v1625 = vunpack.c.l.b16 %v1362
    %v1626 = vunpack.c.l.b16 %v1363
    %v1627 = vunpack.c.l.b16 %v1364
    %v1628 = vunpack.c.l.b16 %v1365
    %v1629 = vunpack.c.l.b16 %v1366
    %v1630 = vunpack.c.l.b16 %v1367
    %v1631 = vunpack.c.l.b16 %v1368
    %v1632 = vunpack.c.l.b16 %v1369
    %v1633 = vunpack.c.l.b16 %v1370
    %v1634 = vunpack.c.l.b16 %v1371
    %v1635 = vunpack.c.l.b16 %v1372
    %v1636 = vunpack.c.l.b16 %v1373
    %v1637 = vunpack.c.l.b16 %v1374
    %v1638 = vunpack.c.l.b16 %v1375
    %v1639 = vunpack.c.l.b16 %v1376
    %v1640 = vunpack.c.l.b16 %v1377
    %v1641 = vunpack.c.l.b16 %v1378
    %v1642 = vunpack.c.l.b16 %v1379
    %v1643 = vunpack.c.l.b16 %v1380
    %v1644 = vunpack.c.l.b16 %v1381
    %v1645 = vunpack.c.l.b16 %v1382
    %v1646 = vunpack.c.l.b16 %v1383
    %v1647 = vunpack.c.l.b16 %v1384
    %v1648 = vunpack.c.l.b16 %v1385
    %v1649 = vunpack.c.l.b16 %v1386
    %v1650 = vunpack.c.l.b16 %v1387
    %v1651 = vunpack.c.l.b16 %v1388
    %v1652 = vunpack.c.l.b16 %v1389
    %v1653 = vunpack.c.l.b16 %v1390
    %v1654 = vunpack.c.l.b16 %v1391
    %v1655 = vunpack.c.l.b16 %v1392
    %v1656 = vunpack.c.l.b16 %v1393
    %v1657 = vunpack.c.l.b16 %v1394
    %v1658 = vunpack.c.l.b16 %v1395
    %v1659 = vunpack.c.l.b16 %v1396
    %v1660 = vunpack.c.l.b16 %v1397
    %v1661 = vunpack.c.l.b16 %v1398
    %v1662 = vunpack.c.l.b16 %v1399
    %v1663 = vunpack.c.l.b16 %v1400
    %v1664 = vunpack.c.l.b16 %v1401
    %v1665 = vunpack.c.l.b16 %v1402
    %v1666 = vunpack.c.l.b16 %v1403
    %v1667 = vunpack.c.l.b16 %v1404
    %v1668 = vunpack.c.l.b16 %v1405
    %v1669 = vunpack.c.l.b16 %v1406
    %v1670 = vpack.c.b16 %v1543, %v1542
    %v1671 = vpack.c.b16 %v1545, %v1544
    %v1672 = vpack.c.b16 %v1547, %v1546
    %v1673 = vpack.c.b16 %v1549, %v1548
    %v1674 = vpack.c.b16 %v1551, %v1550
    %v1675 = vpack.c.b16 %v1553, %v1552
    %v1676 = vpack.c.b16 %v1555, %v1554
    %v1677 = vpack.c.b16 %v1557, %v1556
    %v1678 = vpack.c.b16 %v1559, %v1558
    %v1679 = vpack.c.b16 %v1561, %v1560
    %v1680 = vpack.c.b16 %v1563, %v1562
    %v1681 = vpack.c.b16 %v1565, %v1564
    %v1682 = vpack.c.b16 %v1567, %v1566
    %v1683 = vpack.c.b16 %v1569, %v1568
    %v1684 = vpack.c.b16 %v1571, %v1570
    %v1685 = vpack.c.b16 %v1573, %v1572
    %v1686 = vpack.c.b16 %v1575, %v1574
    %v1687 = vpack.c.b16 %v1577, %v1576
    %v1688 = vpack.c.b16 %v1579, %v1578
    %v1689 = vpack.c.b16 %v1581, %v1580
    %v1690 = vpack.c.b16 %v1583, %v1582
    %v1691 = vpack.c.b16 %v1585, %v1584
    %v1692 = vpack.c.b16 %v1587, %v1586
    %v1693 = vpack.c.b16 %v1589, %v1588
    %v1694 = vpack.c.b16 %v1591, %v1590
    %v1695 = vpack.c.b16 %v1593, %v1592
    %v1696 = vpack.c.b16 %v1595, %v1594
    %v1697 = vpack.c.b16 %v1597, %v1596
    %v1698 = vpack.c.b16 %v1599, %v1598
    %v1699 = vpack.c.b16 %v1601, %v1600
    %v1700 = vpack.c.b16 %v1603, %v1602
    %v1701 = vpack.c.b16 %v1605, %v1604
    %v1702 = vpack.c.b16 %v1607, %v1606
    %v1703 = vpack.c.b16 %v1609, %v1608
    %v1704 = vpack.c.b16 %v1611, %v1610
    %v1705 = vpack.c.b16 %v1613, %v1612
    %v1706 = vpack.c.b16 %v1615, %v1614
    %v1707 = vpack.c.b16 %v1617, %v1616
    %v1708 = vpack.c.b16 %v1619, %v1618
    %v1709 = vpack.c.b16 %v1621, %v1620
    %v1710 = vpack.c.b16 %v1623, %v1622
    %v1711 = vpack.c.b16 %v1625, %v1624
    %v1712 = vpack.c.b16 %v1627, %v1626
    %v1713 = vpack.c.b16 %v1629, %v1628
    %v1714 = vpack.c.b16 %v1631, %v1630
    %v1715 = vpack.c.b16 %v1633, %v1632
    %v1716 = vpack.c.b16 %v1635, %v1634
    %v1717 = vpack.c.b16 %v1637, %v1636
    %v1718 = vpack.c.b16 %v1639, %v1638
    %v1719 = vpack.c.b16 %v1641, %v1640
    %v1720 = vpack.c.b16 %v1643, %v1642
    %v1721 = vpack.c.b16 %v1645, %v1644
    %v1722 = vpack.c.b16 %v1647, %v1646
    %v1723 = vpack.c.b16 %v1649, %v1648
    %v1724 = vpack.c.b16 %v1651, %v1650
    %v1725 = vpack.c.b16 %v1653, %v1652
    %v1726 = vpack.c.b16 %v1655, %v1654
    %v1727 = vpack.c.b16 %v1657, %v1656
    %v1728 = vpack.c.b16 %v1659, %v1658
    %v1729 = vpack.c.b16 %v1661, %v1660
    %v1730 = vpack.c.b16 %v1663, %v1662
    %v1731 = vpack.c.b16 %v1665, %v1664
    %v1732 = vpack.c.b16 %v1667, %v1666
    %v1733 = vpack.c.b16 %v1669, %v1668
    %1798 = vmatprep.subr.bf16.mxu0 0
    %1799 = vmatpush1.bf16.msra.mxu0 %v1670
    %1800 = vmatprep.subr.bf16.mxu0 0
    %1801 = vmatpush1.bf16.msra.mxu0 %v1671
    %1802 = vmatprep.subr.bf16.mxu0 0
    %1803 = vmatpush1.bf16.msra.mxu0 %v1672
    %1804 = vmatprep.subr.bf16.mxu0 0
    %1805 = vmatpush1.bf16.msra.mxu0 %v1673
    %1806 = vmatprep.subr.bf16.mxu0 0
    %1807 = vmatpush1.bf16.msra.mxu0 %v1674
    %1808 = vmatprep.subr.bf16.mxu0 0
    %1809 = vmatpush1.bf16.msra.mxu0 %v1675
    %1810 = vmatprep.subr.bf16.mxu0 0
    %1811 = vmatpush1.bf16.msra.mxu0 %v1676
    %1812 = vmatprep.subr.bf16.mxu0 0
    %1813 = vmatpush1.bf16.msra.mxu0 %v1677
    %1814 = vmatprep.subr.bf16.mxu0 0
    %1815 = vmatpush1.bf16.msra.mxu0 %v1678
    %1816 = vmatprep.subr.bf16.mxu0 0
    %1817 = vmatpush1.bf16.msra.mxu0 %v1679
    %1818 = vmatprep.subr.bf16.mxu0 0
    %1819 = vmatpush1.bf16.msra.mxu0 %v1680
    %1820 = vmatprep.subr.bf16.mxu0 0
    %1821 = vmatpush1.bf16.msra.mxu0 %v1681
    %1822 = vmatprep.subr.bf16.mxu0 0
    %1823 = vmatpush1.bf16.msra.mxu0 %v1682
    %1824 = vmatprep.subr.bf16.mxu0 0
    %1825 = vmatpush1.bf16.msra.mxu0 %v1683
    %1826 = vmatprep.subr.bf16.mxu0 0
    %1827 = vmatpush1.bf16.msra.mxu0 %v1684
    %1828 = vmatprep.subr.bf16.mxu0 0
    %1829 = vmatpush1.bf16.msra.mxu0 %v1685
    %1830 = vmatprep.mubr.bf16.mxu0 %v1272
    %1831 = vmatmul.mubr.bf16.gmra.mrb[0].mxu0 %v1271
    %v1832 = vpop.f32.mrb[0].mxu0
    %v1833 = vadd.f32 %v1412, %v1832
    %v1834 = vpop.f32.mrb[0].mxu0
    %v1835 = vpop.f32.mrb[0].mxu0
    %v1836 = vpop.f32.mrb[0].mxu0
    %1837 = vdwg.mxu0
    %1838 = vmatprep.subr.bf16.mxu0 0
    %1839 = vmatpush1.bf16.msra.mxu0 %v1686
    %1840 = vmatprep.subr.bf16.mxu0 0
    %1841 = vmatpush1.bf16.msra.mxu0 %v1687
    %1842 = vmatprep.subr.bf16.mxu0 0
    %1843 = vmatpush1.bf16.msra.mxu0 %v1688
    %1844 = vmatprep.subr.bf16.mxu0 0
    %1845 = vmatpush1.bf16.msra.mxu0 %v1689
    %1846 = vmatprep.subr.bf16.mxu0 0
    %1847 = vmatpush1.bf16.msra.mxu0 %v1690
    %1848 = vmatprep.subr.bf16.mxu0 0
    %1849 = vmatpush1.bf16.msra.mxu0 %v1691
    %1850 = vmatprep.subr.bf16.mxu0 0
    %1851 = vmatpush1.bf16.msra.mxu0 %v1692
    %1852 = vmatprep.subr.bf16.mxu0 0
    %1853 = vmatpush1.bf16.msra.mxu0 %v1693
    %1854 = vmatprep.subr.bf16.mxu0 0
    %1855 = vmatpush1.bf16.msra.mxu0 %v1694
    %1856 = vmatprep.subr.bf16.mxu0 0
    %1857 = vmatpush1.bf16.msra.mxu0 %v1695
    %1858 = vmatprep.subr.bf16.mxu0 0
    %1859 = vmatpush1.bf16.msra.mxu0 %v1696
    %1860 = vmatprep.subr.bf16.mxu0 0
    %1861 = vmatpush1.bf16.msra.mxu0 %v1697
    %1862 = vmatprep.subr.bf16.mxu0 0
    %1863 = vmatpush1.bf16.msra.mxu0 %v1698
    %1864 = vmatprep.subr.bf16.mxu0 0
    %1865 = vmatpush1.bf16.msra.mxu0 %v1699
    %1866 = vmatprep.subr.bf16.mxu0 0
    %1867 = vmatpush1.bf16.msra.mxu0 %v1700
    %1868 = vmatprep.subr.bf16.mxu0 0
    %1869 = vmatpush1.bf16.msra.mxu0 %v1701
    %1870 = vmatprep.mubr.bf16.mxu0 %v1274
    %1871 = vmatmul.mubr.bf16.gmra.mrb[0].mxu0 %v1273
    %v1872 = vpop.f32.mrb[0].mxu0
    %v1873 = vadd.f32 %v1833, %v1872
    %v1874 = vpop.f32.mrb[0].mxu0
    %v1875 = vpop.f32.mrb[0].mxu0
    %v1876 = vpop.f32.mrb[0].mxu0
    %1877 = vdwg.mxu0
    %1878 = vmatprep.subr.bf16.mxu0 0
    %1879 = vmatpush1.bf16.msra.mxu0 %v1702
    %1880 = vmatprep.subr.bf16.mxu0 0
    %1881 = vmatpush1.bf16.msra.mxu0 %v1703
    %1882 = vmatprep.subr.bf16.mxu0 0
    %1883 = vmatpush1.bf16.msra.mxu0 %v1704
    %1884 = vmatprep.subr.bf16.mxu0 0
    %1885 = vmatpush1.bf16.msra.mxu0 %v1705
    %1886 = vmatprep.subr.bf16.mxu0 0
    %1887 = vmatpush1.bf16.msra.mxu0 %v1706
    %1888 = vmatprep.subr.bf16.mxu0 0
    %1889 = vmatpush1.bf16.msra.mxu0 %v1707
    %1890 = vmatprep.subr.bf16.mxu0 0
    %1891 = vmatpush1.bf16.msra.mxu0 %v1708
    %1892 = vmatprep.subr.bf16.mxu0 0
    %1893 = vmatpush1.bf16.msra.mxu0 %v1709
    %1894 = vmatprep.subr.bf16.mxu0 0
    %1895 = vmatpush1.bf16.msra.mxu0 %v1710
    %1896 = vmatprep.subr.bf16.mxu0 0
    %1897 = vmatpush1.bf16.msra.mxu0 %v1711
    %1898 = vmatprep.subr.bf16.mxu0 0
    %1899 = vmatpush1.bf16.msra.mxu0 %v1712
    %1900 = vmatprep.subr.bf16.mxu0 0
    %1901 = vmatpush1.bf16.msra.mxu0 %v1713
    %1902 = vmatprep.subr.bf16.mxu0 0
    %1903 = vmatpush1.bf16.msra.mxu0 %v1714
    %1904 = vmatprep.subr.bf16.mxu0 0
    %1905 = vmatpush1.bf16.msra.mxu0 %v1715
    %1906 = vmatprep.subr.bf16.mxu0 0
    %1907 = vmatpush1.bf16.msra.mxu0 %v1716
    %1908 = vmatprep.subr.bf16.mxu0 0
    %1909 = vmatpush1.bf16.msra.mxu0 %v1717
    %1910 = vmatprep.mubr.bf16.mxu0 %v1276
    %1911 = vmatmul.mubr.bf16.gmra.mrb[0].mxu0 %v1275
    %v1912 = vpop.f32.mrb[0].mxu0
    %v1913 = vadd.f32 %v1873, %v1912
    %v1914 = vpop.f32.mrb[0].mxu0
    %v1915 = vpop.f32.mrb[0].mxu0
    %v1916 = vpop.f32.mrb[0].mxu0
    %1917 = vdwg.mxu0
    %1918 = vmatprep.subr.bf16.mxu0 0
    %1919 = vmatpush1.bf16.msra.mxu0 %v1718
    %1920 = vmatprep.subr.bf16.mxu0 0
    %1921 = vmatpush1.bf16.msra.mxu0 %v1719
    %1922 = vmatprep.subr.bf16.mxu0 0
    %1923 = vmatpush1.bf16.msra.mxu0 %v1720
    %1924 = vmatprep.subr.bf16.mxu0 0
    %1925 = vmatpush1.bf16.msra.mxu0 %v1721
    %1926 = vmatprep.subr.bf16.mxu0 0
    %1927 = vmatpush1.bf16.msra.mxu0 %v1722
    %1928 = vmatprep.subr.bf16.mxu0 0
    %1929 = vmatpush1.bf16.msra.mxu0 %v1723
    %1930 = vmatprep.subr.bf16.mxu0 0
    %1931 = vmatpush1.bf16.msra.mxu0 %v1724
    %1932 = vmatprep.subr.bf16.mxu0 0
    %1933 = vmatpush1.bf16.msra.mxu0 %v1725
    %1934 = vmatprep.subr.bf16.mxu0 0
    %1935 = vmatpush1.bf16.msra.mxu0 %v1726
    %1936 = vmatprep.subr.bf16.mxu0 0
    %1937 = vmatpush1.bf16.msra.mxu0 %v1727
    %1938 = vmatprep.subr.bf16.mxu0 0
    %1939 = vmatpush1.bf16.msra.mxu0 %v1728
    %1940 = vmatprep.subr.bf16.mxu0 0
    %1941 = vmatpush1.bf16.msra.mxu0 %v1729
    %1942 = vmatprep.subr.bf16.mxu0 0
    %1943 = vmatpush1.bf16.msra.mxu0 %v1730
    %1944 = vmatprep.subr.bf16.mxu0 0
    %1945 = vmatpush1.bf16.msra.mxu0 %v1731
    %1946 = vmatprep.subr.bf16.mxu0 0
    %1947 = vmatpush1.bf16.msra.mxu0 %v1732
    %1948 = vmatprep.subr.bf16.mxu0 0
    %1949 = vmatpush1.bf16.msra.mxu0 %v1733
    %1950 = vmatprep.mubr.bf16.mxu0 %v1278
    %1951 = vmatmul.mubr.bf16.gmra.mrb[0].mxu0 %v1277
    %v1952 = vpop.f32.mrb[0].mxu0
    %v1953 = vadd.f32 %v1913, %v1952
    %v1954 = vpop.f32.mrb[0].mxu0
    %v1955 = vpop.f32.mrb[0].mxu0
    %v1956 = vpop.f32.mrb[0].mxu0
    %1957 = vdwg.mxu0
    %1958 = vadd.xlane.f32.xlu0 %v1953
    %v1959 = vpop.xlane.xlu0 %1958
    %v1960 = vmul.f32 %v1953, %v1953
    %1961 = vadd.xlane.f32.xlu0 %v1960
    %v1962 = vpop.xlane.xlu0 %1961
    %v1963 = vmul.f32 %v1959, 0.0078125
    %v1964 = vmul.f32 %v1962, 0.0078125
    %v1965 = vmul.f32 %v1963, %v1963
    %v1966 = vsub.f32 %v1964, %v1965
    %v1967 = vmax.f32 %v1966, 0.0
    %v1968 = vld [vmem:[%s7] sm:$0x1]
    %v1969 = vadd.f32 %v1967, 1e-05
    %v1970 = vrsqrt.pop %v1969
    %v1972 = vlaneseq
    %v1973 = vshrl.u32 %v1972, 7
    %v1974 = vsub.s32 0, %v1973
    %v1975 = vrot.slane %v1968, %v1974
    %v1977 = vmul.f32 %v1975, %v1970
    %v1978 = vsub.f32 %v1953, %v1963
    %v1979 = vmul.f32 %v1978, %v1977
    %v1980 = vld [vmem:[%s8] sm:$0x1]
    %v1982 = vlaneseq
    %v1983 = vshrl.u32 %v1982, 7
    %v1984 = vsub.s32 0, %v1983
    %v1985 = vrot.slane %v1980, %v1984
    %v1987 = vadd.f32 %v1979, %v1985
    %v1988 = vmax.f32 %v1987, 0.0
    %v1989 = vpack.c.bf16 %v1988, %v1988
    %v1990 = vld [vmem:[%s9] sm:$0xf]
    %v1991 = vld [vmem:[%s9 + $0x4] sm:$0xf]
    %v1992 = vld [vmem:[%s9 + $0x8] sm:$0xf]
    %v1993 = vld [vmem:[%s9 + $0xc] sm:$0xf]
    %v1994 = vld [vmem:[%s9 + $0x10] sm:$0xf]
    %v1995 = vld [vmem:[%s9 + $0x14] sm:$0xf]
    %v1996 = vld [vmem:[%s9 + $0x18] sm:$0xf]
    %v1997 = vld [vmem:[%s9 + $0x1c] sm:$0xf]
    %v1998 = vld [vmem:[%s9 + $0x20] sm:$0xf]
    %v1999 = vld [vmem:[%s9 + $0x24] sm:$0xf]
    %v2000 = vld [vmem:[%s9 + $0x28] sm:$0xf]
    %v2001 = vld [vmem:[%s9 + $0x2c] sm:$0xf]
    %v2002 = vld [vmem:[%s9 + $0x30] sm:$0xf]
    %v2003 = vld [vmem:[%s9 + $0x34] sm:$0xf]
    %v2004 = vld [vmem:[%s9 + $0x38] sm:$0xf]
    %v2005 = vld [vmem:[%s9 + $0x3c] sm:$0xf]
    %v2006 = vld [vmem:[%s10] sm:$0x1]
    %v2008 = vlaneseq
    %v2009 = vshrl.u32 %v2008, 7
    %v2010 = vsub.s32 0, %v2009
    %v2011 = vrot.slane %v2006, %v2010
    %v2029 = vunpack.c.l.b16 %v1990
    %v2030 = vunpack.c.l.b16 %v1991
    %v2031 = vunpack.c.l.b16 %v1992
    %v2032 = vunpack.c.l.b16 %v1993
    %v2033 = vunpack.c.l.b16 %v1994
    %v2034 = vunpack.c.l.b16 %v1995
    %v2035 = vunpack.c.l.b16 %v1996
    %v2036 = vunpack.c.l.b16 %v1997
    %v2037 = vunpack.c.l.b16 %v1998
    %v2038 = vunpack.c.l.b16 %v1999
    %v2039 = vunpack.c.l.b16 %v2000
    %v2040 = vunpack.c.l.b16 %v2001
    %v2041 = vunpack.c.l.b16 %v2002
    %v2042 = vunpack.c.l.b16 %v2003
    %v2043 = vunpack.c.l.b16 %v2004
    %v2044 = vunpack.c.l.b16 %v2005
    %v2045 = vpack.c.b16 %v2030, %v2029
    %v2046 = vpack.c.b16 %v2032, %v2031
    %v2047 = vpack.c.b16 %v2034, %v2033
    %v2048 = vpack.c.b16 %v2036, %v2035
    %v2049 = vpack.c.b16 %v2038, %v2037
    %v2050 = vpack.c.b16 %v2040, %v2039
    %v2051 = vpack.c.b16 %v2042, %v2041
    %v2052 = vpack.c.b16 %v2044, %v2043
    %2061 = vmatprep.subr.bf16.mxu0 0
    %2062 = vmatpush1.bf16.msra.mxu0 %v2045
    %2063 = vmatprep.subr.bf16.mxu0 0
    %2064 = vmatpush1.bf16.msra.mxu0 %v2046
    %2065 = vmatprep.subr.bf16.mxu0 0
    %2066 = vmatpush1.bf16.msra.mxu0 %v2047
    %2067 = vmatprep.subr.bf16.mxu0 0
    %2068 = vmatpush1.bf16.msra.mxu0 %v2048
    %2069 = vmatprep.subr.bf16.mxu0 0
    %2070 = vmatpush1.bf16.msra.mxu0 %v2049
    %2071 = vmatprep.subr.bf16.mxu0 0
    %2072 = vmatpush1.bf16.msra.mxu0 %v2050
    %2073 = vmatprep.subr.bf16.mxu0 0
    %2074 = vmatpush1.bf16.msra.mxu0 %v2051
    %2075 = vmatprep.subr.bf16.mxu0 0
    %2076 = vmatpush1.bf16.msra.mxu0 %v2052
    %2077 = vmatprep.subr.bf16.mxu0 0
    %2078 = vmatpush1.bf16.msra.mxu0 0
    %2079 = vmatprep.subr.bf16.mxu0 0
    %2080 = vmatpush1.bf16.msra.mxu0 0
    %2081 = vmatprep.subr.bf16.mxu0 0
    %2082 = vmatpush1.bf16.msra.mxu0 0
    %2083 = vmatprep.subr.bf16.mxu0 0
    %2084 = vmatpush1.bf16.msra.mxu0 0
    %2085 = vmatprep.subr.bf16.mxu0 0
    %2086 = vmatpush1.bf16.msra.mxu0 0
    %2087 = vmatprep.subr.bf16.mxu0 0
    %2088 = vmatpush1.bf16.msra.mxu0 0
    %2089 = vmatprep.subr.bf16.mxu0 0
    %2090 = vmatpush1.bf16.msra.mxu0 0
    %2091 = vmatprep.subr.bf16.mxu0 0
    %2092 = vmatpush1.bf16.msra.mxu0 0
    %2093 = vmatprep.mubr.bf16.mxu0 0
    %2094 = vmatmul.mubr.bf16.gmra.mrb[0].mxu0 %v1989
    %v2095 = vpop.f32.mrb[0].mxu0
    %v2096 = vadd.f32 %v2011, %v2095
    %v2097 = vpop.f32.mrb[0].mxu0
    %v2098 = vpop.f32.mrb[0].mxu0
    %v2099 = vpop.f32.mrb[0].mxu0
    %2100 = vdwg.mxu0
    %v2101 = vtanh.pop %v2096
    %v2102 = vpack.c.bf16 %v2101, %v2101
    %v2103 = vld [vmem:[%s11] sm:$0xf]
    %v2104 = vld [vmem:[%s11 + $0x4] sm:$0xf]
    %v2105 = vld [vmem:[%s11 + $0x8] sm:$0xf]
    %v2106 = vld [vmem:[%s11 + $0xc] sm:$0xf]
    %v2107 = vld [vmem:[%s11 + $0x10] sm:$0xf]
    %v2108 = vld [vmem:[%s11 + $0x14] sm:$0xf]
    %v2109 = vld [vmem:[%s11 + $0x18] sm:$0xf]
    %v2110 = vld [vmem:[%s11 + $0x1c] sm:$0xf]
    %v2111 = vld [vmem:[#allocation7] sm:$0x1]
    %v2113 = vlaneseq
    %v2114 = vshrl.u32 %v2113, 7
    %v2115 = vsub.s32 0, %v2114
    %v2116 = vrot.slane %v2111, %v2115
    %v2126 = vunpack.c.l.b16 %v2103
    %v2127 = vunpack.c.l.b16 %v2104
    %v2128 = vunpack.c.l.b16 %v2105
    %v2129 = vunpack.c.l.b16 %v2106
    %v2130 = vunpack.c.l.b16 %v2107
    %v2131 = vunpack.c.l.b16 %v2108
    %v2132 = vunpack.c.l.b16 %v2109
    %v2133 = vunpack.c.l.b16 %v2110
    %v2134 = vpack.c.b16 %v2127, %v2126
    %v2135 = vpack.c.b16 %v2129, %v2128
    %v2136 = vpack.c.b16 %v2131, %v2130
    %v2137 = vpack.c.b16 %v2133, %v2132
    %vm2142 = vcmask 523264
    %v2144 = vsel %vm2142, %v2102, 0
    %2146 = vmatprep.subr.bf16.mxu0 0
    %2147 = vmatpush1.bf16.msra.mxu0 %v2134
    %2148 = vmatprep.subr.bf16.mxu0 0
    %2149 = vmatpush1.bf16.msra.mxu0 %v2135
    %2150 = vmatprep.subr.bf16.mxu0 0
    %2151 = vmatpush1.bf16.msra.mxu0 %v2136
    %2152 = vmatprep.subr.bf16.mxu0 0
    %2153 = vmatpush1.bf16.msra.mxu0 %v2137
    %2154 = vmatprep.subr.bf16.mxu0 0
    %2155 = vmatpush1.bf16.msra.mxu0 0
    %2156 = vmatprep.subr.bf16.mxu0 0
    %2157 = vmatpush1.bf16.msra.mxu0 0
    %2158 = vmatprep.subr.bf16.mxu0 0
    %2159 = vmatpush1.bf16.msra.mxu0 0
    %2160 = vmatprep.subr.bf16.mxu0 0
    %2161 = vmatpush1.bf16.msra.mxu0 0
    %2162 = vmatprep.subr.bf16.mxu0 0
    %2163 = vmatpush1.bf16.msra.mxu0 0
    %2164 = vmatprep.subr.bf16.mxu0 0
    %2165 = vmatpush1.bf16.msra.mxu0 0
    %2166 = vmatprep.subr.bf16.mxu0 0
    %2167 = vmatpush1.bf16.msra.mxu0 0
    %2168 = vmatprep.subr.bf16.mxu0 0
    %2169 = vmatpush1.bf16.msra.mxu0 0
    %2170 = vmatprep.subr.bf16.mxu0 0
    %2171 = vmatpush1.bf16.msra.mxu0 0
    %2172 = vmatprep.subr.bf16.mxu0 0
    %2173 = vmatpush1.bf16.msra.mxu0 0
    %2174 = vmatprep.subr.bf16.mxu0 0
    %2175 = vmatpush1.bf16.msra.mxu0 0
    %2176 = vmatprep.subr.bf16.mxu0 0
    %2177 = vmatpush1.bf16.msra.mxu0 0
    %2178 = vmatprep.mubr.bf16.mxu0 0
    %2179 = vmatmul.mubr.bf16.gmra.mrb[0].mxu0 %v2144
    %v2180 = vpop.f32.mrb[0].mxu0
    %v2181 = vadd.f32 %v2116, %v2180
    %v2182 = vpop.f32.mrb[0].mxu0
    %v2183 = vpop.f32.mrb[0].mxu0
    %v2184 = vpop.f32.mrb[0].mxu0
    %2185 = vdwg.mxu0
    %2186 = vadd.xlane.f32.xlu0 %v2181
    %v2187 = vpop.xlane.xlu0 %2186
    %v2188 = vmul.f32 %v2181, %v2181
    %2189 = vadd.xlane.f32.xlu0 %v2188
    %v2190 = vpop.xlane.xlu0 %2189
    %v2191 = vmul.f32 %v2187, 0.0078125
    %v2192 = vmul.f32 %v2190, 0.0078125
    %v2193 = vmul.f32 %v2191, %v2191
    %v2194 = vsub.f32 %v2192, %v2193
    %v2195 = vmax.f32 %v2194, 0.0
    %v2196 = vld [vmem:[%s13] sm:$0x1]
    %v2197 = vadd.f32 %v2195, 1e-05
    %v2198 = vrsqrt.pop %v2197
    %v2200 = vlaneseq
    %v2201 = vshrl.u32 %v2200, 7
    %v2202 = vsub.s32 0, %v2201
    %v2203 = vrot.slane %v2196, %v2202
    %v2205 = vmul.f32 %v2203, %v2198
    %v2206 = vsub.f32 %v2181, %v2191
    %v2207 = vmul.f32 %v2206, %v2205
    %v2208 = vld [vmem:[%s14] sm:$0x1]
    %v2210 = vlaneseq
    %v2211 = vshrl.u32 %v2210, 7
    %v2212 = vsub.s32 0, %v2211
    %v2213 = vrot.slane %v2208, %v2212
    %v2215 = vadd.f32 %v2207, %v2213
    %v2216 = vmax.f32 %v2215, 0.0
    %v2217 = vpack.c.bf16 %v2216, %v2216
    %v2218 = vld [vmem:[#allocation8] sm:$0xff]
    %v2219 = vld [vmem:[#allocation8 + $0x8] sm:$0xff]
    %v2220 = vld [vmem:[#allocation8 + $0x10] sm:$0xff]
    %v2221 = vld [vmem:[#allocation8 + $0x18] sm:$0xff]
    %v2222 = vld [vmem:[#allocation8 + $0x20] sm:$0xff]
    %v2223 = vld [vmem:[#allocation8 + $0x28] sm:$0xff]
    %v2224 = vld [vmem:[#allocation8 + $0x30] sm:$0xff]
    %v2225 = vld [vmem:[#allocation8 + $0x38] sm:$0xff]
    %v2226 = vld [vmem:[#allocation8 + $0x40] sm:$0xff]
    %v2227 = vld [vmem:[#allocation8 + $0x48] sm:$0xff]
    %v2228 = vld [vmem:[#allocation8 + $0x50] sm:$0xff]
    %v2229 = vld [vmem:[#allocation8 + $0x58] sm:$0xff]
    %v2230 = vld [vmem:[#allocation8 + $0x60] sm:$0xff]
    %v2231 = vld [vmem:[#allocation8 + $0x68] sm:$0xff]
    %v2232 = vld [vmem:[#allocation8 + $0x70] sm:$0xff]
    %v2233 = vld [vmem:[#allocation8 + $0x78] sm:$0xff]
    %v2234 = vld [vmem:[#allocation8 + $0x80] sm:$0xff]
    %v2235 = vld [vmem:[#allocation8 + $0x88] sm:$0xff]
    %v2236 = vld [vmem:[#allocation8 + $0x90] sm:$0xff]
    %v2237 = vld [vmem:[#allocation8 + $0x98] sm:$0xff]
    %v2238 = vld [vmem:[#allocation8 + $0xa0] sm:$0xff]
    %v2239 = vld [vmem:[#allocation8 + $0xa8] sm:$0xff]
    %v2240 = vld [vmem:[#allocation8 + $0xb0] sm:$0xff]
    %v2241 = vld [vmem:[#allocation8 + $0xb8] sm:$0xff]
    %v2242 = vld [vmem:[#allocation8 + $0xc0] sm:$0xff]
    %v2243 = vld [vmem:[#allocation8 + $0xc8] sm:$0xff]
    %v2244 = vld [vmem:[#allocation8 + $0xd0] sm:$0xff]
    %v2245 = vld [vmem:[#allocation8 + $0xd8] sm:$0xff]
    %v2246 = vld [vmem:[#allocation8 + $0xe0] sm:$0xff]
    %v2247 = vld [vmem:[#allocation8 + $0xe8] sm:$0xff]
    %v2248 = vld [vmem:[#allocation8 + $0xf0] sm:$0xff]
    %v2249 = vld [vmem:[#allocation8 + $0xf8] sm:$0xff]
    %v2250 = vld [vmem:[#allocation8 + $0x100] sm:$0xff]
    %v2251 = vld [vmem:[#allocation8 + $0x108] sm:$0xff]
    %v2252 = vld [vmem:[#allocation8 + $0x110] sm:$0xff]
    %v2253 = vld [vmem:[#allocation8 + $0x118] sm:$0xff]
    %v2254 = vld [vmem:[#allocation8 + $0x120] sm:$0xff]
    %v2255 = vld [vmem:[#allocation8 + $0x128] sm:$0xff]
    %v2256 = vld [vmem:[#allocation8 + $0x130] sm:$0xff]
    %v2257 = vld [vmem:[#allocation8 + $0x138] sm:$0xff]
    %v2258 = vld [vmem:[#allocation8 + $0x140] sm:$0xff]
    %v2259 = vld [vmem:[#allocation8 + $0x148] sm:$0xff]
    %v2260 = vld [vmem:[#allocation8 + $0x150] sm:$0xff]
    %v2261 = vld [vmem:[#allocation8 + $0x158] sm:$0xff]
    %v2262 = vld [vmem:[#allocation8 + $0x160] sm:$0xff]
    %v2263 = vld [vmem:[#allocation8 + $0x168] sm:$0xff]
    %v2264 = vld [vmem:[#allocation8 + $0x170] sm:$0xff]
    %v2265 = vld [vmem:[#allocation8 + $0x178] sm:$0xff]
    %v2266 = vld [vmem:[#allocation8 + $0x180] sm:$0xff]
    %v2267 = vld [vmem:[#allocation8 + $0x188] sm:$0xff]
    %v2268 = vld [vmem:[#allocation8 + $0x190] sm:$0xff]
    %v2269 = vld [vmem:[#allocation8 + $0x198] sm:$0xff]
    %v2270 = vld [vmem:[#allocation8 + $0x1a0] sm:$0xff]
    %v2271 = vld [vmem:[#allocation8 + $0x1a8] sm:$0xff]
    %v2272 = vld [vmem:[#allocation8 + $0x1b0] sm:$0xff]
    %v2273 = vld [vmem:[#allocation8 + $0x1b8] sm:$0xff]
    %v2274 = vld [vmem:[#allocation8 + $0x1c0] sm:$0xff]
    %v2275 = vld [vmem:[#allocation8 + $0x1c8] sm:$0xff]
    %v2276 = vld [vmem:[#allocation8 + $0x1d0] sm:$0xff]
    %v2277 = vld [vmem:[#allocation8 + $0x1d8] sm:$0xff]
    %v2278 = vld [vmem:[#allocation8 + $0x1e0] sm:$0xff]
    %v2279 = vld [vmem:[#allocation8 + $0x1e8] sm:$0xff]
    %v2280 = vld [vmem:[#allocation8 + $0x1f0] sm:$0xff]
    %v2281 = vld [vmem:[#allocation8 + $0x1f8] sm:$0xff]
    %v2282 = vld [vmem:[%s16] sm:$0xff]
    %v2284 = vlaneseq
    %v2285 = vshrl.u32 %v2284, 7
    %v2286 = vsub.s32 0, %v2285
    %v2287 = vrot.slane %v2282, %v2286
    %v2288 = vlaneseq
    %v2289 = vshrl.u32 %v2288, 7
    %v2290 = vsub.s32 1, %v2289
    %v2291 = vrot.slane %v2282, %v2290
    %v2292 = vlaneseq
    %v2293 = vshrl.u32 %v2292, 7
    %v2294 = vsub.s32 2, %v2293
    %v2295 = vrot.slane %v2282, %v2294
    %v2296 = vlaneseq
    %v2297 = vshrl.u32 %v2296, 7
    %v2298 = vsub.s32 3, %v2297
    %v2299 = vrot.slane %v2282, %v2298
    %v2300 = vlaneseq
    %v2301 = vshrl.u32 %v2300, 7
    %v2302 = vsub.s32 4, %v2301
    %v2303 = vrot.slane %v2282, %v2302
    %v2304 = vlaneseq
    %v2305 = vshrl.u32 %v2304, 7
    %v2306 = vsub.s32 5, %v2305
    %v2307 = vrot.slane %v2282, %v2306
    %v2308 = vlaneseq
    %v2309 = vshrl.u32 %v2308, 7
    %v2310 = vsub.s32 6, %v2309
    %v2311 = vrot.slane %v2282, %v2310
    %v2312 = vlaneseq
    %v2313 = vshrl.u32 %v2312, 7
    %v2314 = vsub.s32 7, %v2313
    %v2315 = vrot.slane %v2282, %v2314
    %v2388 = vunpack.c.l.b16 %v2218
    %v2389 = vunpack.c.h.b16 %v2218
    %v2390 = vunpack.c.l.b16 %v2219
    %v2391 = vunpack.c.h.b16 %v2219
    %v2392 = vunpack.c.l.b16 %v2220
    %v2393 = vunpack.c.h.b16 %v2220
    %v2394 = vunpack.c.l.b16 %v2221
    %v2395 = vunpack.c.h.b16 %v2221
    %v2396 = vunpack.c.l.b16 %v2222
    %v2397 = vunpack.c.h.b16 %v2222
    %v2398 = vunpack.c.l.b16 %v2223
    %v2399 = vunpack.c.h.b16 %v2223
    %v2400 = vunpack.c.l.b16 %v2224
    %v2401 = vunpack.c.h.b16 %v2224
    %v2402 = vunpack.c.l.b16 %v2225
    %v2403 = vunpack.c.h.b16 %v2225
    %v2404 = vunpack.c.l.b16 %v2226
    %v2405 = vunpack.c.h.b16 %v2226
    %v2406 = vunpack.c.l.b16 %v2227
    %v2407 = vunpack.c.h.b16 %v2227
    %v2408 = vunpack.c.l.b16 %v2228
    %v2409 = vunpack.c.h.b16 %v2228
    %v2410 = vunpack.c.l.b16 %v2229
    %v2411 = vunpack.c.h.b16 %v2229
    %v2412 = vunpack.c.l.b16 %v2230
    %v2413 = vunpack.c.h.b16 %v2230
    %v2414 = vunpack.c.l.b16 %v2231
    %v2415 = vunpack.c.h.b16 %v2231
    %v2416 = vunpack.c.l.b16 %v2232
    %v2417 = vunpack.c.h.b16 %v2232
    %v2418 = vunpack.c.l.b16 %v2233
    %v2419 = vunpack.c.h.b16 %v2233
    %v2420 = vunpack.c.l.b16 %v2234
    %v2421 = vunpack.c.h.b16 %v2234
    %v2422 = vunpack.c.l.b16 %v2235
    %v2423 = vunpack.c.h.b16 %v2235
    %v2424 = vunpack.c.l.b16 %v2236
    %v2425 = vunpack.c.h.b16 %v2236
    %v2426 = vunpack.c.l.b16 %v2237
    %v2427 = vunpack.c.h.b16 %v2237
    %v2428 = vunpack.c.l.b16 %v2238
    %v2429 = vunpack.c.h.b16 %v2238
    %v2430 = vunpack.c.l.b16 %v2239
    %v2431 = vunpack.c.h.b16 %v2239
    %v2432 = vunpack.c.l.b16 %v2240
    %v2433 = vunpack.c.h.b16 %v2240
    %v2434 = vunpack.c.l.b16 %v2241
    %v2435 = vunpack.c.h.b16 %v2241
    %v2436 = vunpack.c.l.b16 %v2242
    %v2437 = vunpack.c.h.b16 %v2242
    %v2438 = vunpack.c.l.b16 %v2243
    %v2439 = vunpack.c.h.b16 %v2243
    %v2440 = vunpack.c.l.b16 %v2244
    %v2441 = vunpack.c.h.b16 %v2244
    %v2442 = vunpack.c.l.b16 %v2245
    %v2443 = vunpack.c.h.b16 %v2245
    %v2444 = vunpack.c.l.b16 %v2246
    %v2445 = vunpack.c.h.b16 %v2246
    %v2446 = vunpack.c.l.b16 %v2247
    %v2447 = vunpack.c.h.b16 %v2247
    %v2448 = vunpack.c.l.b16 %v2248
    %v2449 = vunpack.c.h.b16 %v2248
    %v2450 = vunpack.c.l.b16 %v2249
    %v2451 = vunpack.c.h.b16 %v2249
    %v2452 = vunpack.c.l.b16 %v2250
    %v2453 = vunpack.c.h.b16 %v2250
    %v2454 = vunpack.c.l.b16 %v2251
    %v2455 = vunpack.c.h.b16 %v2251
    %v2456 = vunpack.c.l.b16 %v2252
    %v2457 = vunpack.c.h.b16 %v2252
    %v2458 = vunpack.c.l.b16 %v2253
    %v2459 = vunpack.c.h.b16 %v2253
    %v2460 = vunpack.c.l.b16 %v2254
    %v2461 = vunpack.c.h.b16 %v2254
    %v2462 = vunpack.c.l.b16 %v2255
    %v2463 = vunpack.c.h.b16 %v2255
    %v2464 = vunpack.c.l.b16 %v2256
    %v2465 = vunpack.c.h.b16 %v2256
    %v2466 = vunpack.c.l.b16 %v2257
    %v2467 = vunpack.c.h.b16 %v2257
    %v2468 = vunpack.c.l.b16 %v2258
    %v2469 = vunpack.c.h.b16 %v2258
    %v2470 = vunpack.c.l.b16 %v2259
    %v2471 = vunpack.c.h.b16 %v2259
    %v2472 = vunpack.c.l.b16 %v2260
    %v2473 = vunpack.c.h.b16 %v2260
    %v2474 = vunpack.c.l.b16 %v2261
    %v2475 = vunpack.c.h.b16 %v2261
    %v2476 = vunpack.c.l.b16 %v2262
    %v2477 = vunpack.c.h.b16 %v2262
    %v2478 = vunpack.c.l.b16 %v2263
    %v2479 = vunpack.c.h.b16 %v2263
    %v2480 = vunpack.c.l.b16 %v2264
    %v2481 = vunpack.c.h.b16 %v2264
    %v2482 = vunpack.c.l.b16 %v2265
    %v2483 = vunpack.c.h.b16 %v2265
    %v2484 = vunpack.c.l.b16 %v2266
    %v2485 = vunpack.c.h.b16 %v2266
    %v2486 = vunpack.c.l.b16 %v2267
    %v2487 = vunpack.c.h.b16 %v2267
    %v2488 = vunpack.c.l.b16 %v2268
    %v2489 = vunpack.c.h.b16 %v2268
    %v2490 = vunpack.c.l.b16 %v2269
    %v2491 = vunpack.c.h.b16 %v2269
    %v2492 = vunpack.c.l.b16 %v2270
    %v2493 = vunpack.c.h.b16 %v2270
    %v2494 = vunpack.c.l.b16 %v2271
    %v2495 = vunpack.c.h.b16 %v2271
    %v2496 = vunpack.c.l.b16 %v2272
    %v2497 = vunpack.c.h.b16 %v2272
    %v2498 = vunpack.c.l.b16 %v2273
    %v2499 = vunpack.c.h.b16 %v2273
    %v2500 = vunpack.c.l.b16 %v2274
    %v2501 = vunpack.c.h.b16 %v2274
    %v2502 = vunpack.c.l.b16 %v2275
    %v2503 = vunpack.c.h.b16 %v2275
    %v2504 = vunpack.c.l.b16 %v2276
    %v2505 = vunpack.c.h.b16 %v2276
    %v2506 = vunpack.c.l.b16 %v2277
    %v2507 = vunpack.c.h.b16 %v2277
    %v2508 = vunpack.c.l.b16 %v2278
    %v2509 = vunpack.c.h.b16 %v2278
    %v2510 = vunpack.c.l.b16 %v2279
    %v2511 = vunpack.c.h.b16 %v2279
    %v2512 = vunpack.c.l.b16 %v2280
    %v2513 = vunpack.c.h.b16 %v2280
    %v2514 = vunpack.c.l.b16 %v2281
    %v2515 = vunpack.c.h.b16 %v2281
    %v2516 = vpack.c.b16 %v2396, %v2388
    %v2517 = vpack.c.b16 %v2397, %v2389
    %v2518 = vpack.c.b16 %v2398, %v2390
    %v2519 = vpack.c.b16 %v2399, %v2391
    %v2520 = vpack.c.b16 %v2400, %v2392
    %v2521 = vpack.c.b16 %v2401, %v2393
    %v2522 = vpack.c.b16 %v2402, %v2394
    %v2523 = vpack.c.b16 %v2403, %v2395
    %v2524 = vpack.c.b16 %v2412, %v2404
    %v2525 = vpack.c.b16 %v2413, %v2405
    %v2526 = vpack.c.b16 %v2414, %v2406
    %v2527 = vpack.c.b16 %v2415, %v2407
    %v2528 = vpack.c.b16 %v2416, %v2408
    %v2529 = vpack.c.b16 %v2417, %v2409
    %v2530 = vpack.c.b16 %v2418, %v2410
    %v2531 = vpack.c.b16 %v2419, %v2411
    %v2532 = vpack.c.b16 %v2428, %v2420
    %v2533 = vpack.c.b16 %v2429, %v2421
    %v2534 = vpack.c.b16 %v2430, %v2422
    %v2535 = vpack.c.b16 %v2431, %v2423
    %v2536 = vpack.c.b16 %v2432, %v2424
    %v2537 = vpack.c.b16 %v2433, %v2425
    %v2538 = vpack.c.b16 %v2434, %v2426
    %v2539 = vpack.c.b16 %v2435, %v2427
    %v2540 = vpack.c.b16 %v2444, %v2436
    %v2541 = vpack.c.b16 %v2445, %v2437
    %v2542 = vpack.c.b16 %v2446, %v2438
    %v2543 = vpack.c.b16 %v2447, %v2439
    %v2544 = vpack.c.b16 %v2448, %v2440
    %v2545 = vpack.c.b16 %v2449, %v2441
    %v2546 = vpack.c.b16 %v2450, %v2442
    %v2547 = vpack.c.b16 %v2451, %v2443
    %v2548 = vpack.c.b16 %v2460, %v2452
    %v2549 = vpack.c.b16 %v2461, %v2453
    %v2550 = vpack.c.b16 %v2462, %v2454
    %v2551 = vpack.c.b16 %v2463, %v2455
    %v2552 = vpack.c.b16 %v2464, %v2456
    %v2553 = vpack.c.b16 %v2465, %v2457
    %v2554 = vpack.c.b16 %v2466, %v2458
    %v2555 = vpack.c.b16 %v2467, %v2459
    %v2556 = vpack.c.b16 %v2476, %v2468
    %v2557 = vpack.c.b16 %v2477, %v2469
    %v2558 = vpack.c.b16 %v2478, %v2470
    %v2559 = vpack.c.b16 %v2479, %v2471
    %v2560 = vpack.c.b16 %v2480, %v2472
    %v2561 = vpack.c.b16 %v2481, %v2473
    %v2562 = vpack.c.b16 %v2482, %v2474
    %v2563 = vpack.c.b16 %v2483, %v2475
    %v2564 = vpack.c.b16 %v2492, %v2484
    %v2565 = vpack.c.b16 %v2493, %v2485
    %v2566 = vpack.c.b16 %v2494, %v2486
    %v2567 = vpack.c.b16 %v2495, %v2487
    %v2568 = vpack.c.b16 %v2496, %v2488
    %v2569 = vpack.c.b16 %v2497, %v2489
    %v2570 = vpack.c.b16 %v2498, %v2490
    %v2571 = vpack.c.b16 %v2499, %v2491
    %v2572 = vpack.c.b16 %v2508, %v2500
    %v2573 = vpack.c.b16 %v2509, %v2501
    %v2574 = vpack.c.b16 %v2510, %v2502
    %v2575 = vpack.c.b16 %v2511, %v2503
    %v2576 = vpack.c.b16 %v2512, %v2504
    %v2577 = vpack.c.b16 %v2513, %v2505
    %v2578 = vpack.c.b16 %v2514, %v2506
    %v2579 = vpack.c.b16 %v2515, %v2507
    %2644 = vmatprep.subr.bf16.mxu0 %v2517
    %2645 = vmatpush1.bf16.msra.mxu0 %v2516
    %2646 = vmatprep.subr.bf16.mxu0 %v2525
    %2647 = vmatpush1.bf16.msra.mxu0 %v2524
    %2648 = vmatprep.subr.bf16.mxu0 %v2533
    %2649 = vmatpush1.bf16.msra.mxu0 %v2532
    %2650 = vmatprep.subr.bf16.mxu0 %v2541
    %2651 = vmatpush1.bf16.msra.mxu0 %v2540
    %2652 = vmatprep.subr.bf16.mxu0 %v2549
    %2653 = vmatpush1.bf16.msra.mxu0 %v2548
    %2654 = vmatprep.subr.bf16.mxu0 %v2557
    %2655 = vmatpush1.bf16.msra.mxu0 %v2556
    %2656 = vmatprep.subr.bf16.mxu0 %v2565
    %2657 = vmatpush1.bf16.msra.mxu0 %v2564
    %2658 = vmatprep.subr.bf16.mxu0 %v2573
    %2659 = vmatpush1.bf16.msra.mxu0 %v2572
    %2660 = vmatprep.subr.bf16.mxu0 0
    %2661 = vmatpush1.bf16.msra.mxu0 0
    %2662 = vmatprep.subr.bf16.mxu0 0
    %2663 = vmatpush1.bf16.msra.mxu0 0
    %2664 = vmatprep.subr.bf16.mxu0 0
    %2665 = vmatpush1.bf16.msra.mxu0 0
    %2666 = vmatprep.subr.bf16.mxu0 0
    %2667 = vmatpush1.bf16.msra.mxu0 0
    %2668 = vmatprep.subr.bf16.mxu0 0
    %2669 = vmatpush1.bf16.msra.mxu0 0
    %2670 = vmatprep.subr.bf16.mxu0 0
    %2671 = vmatpush1.bf16.msra.mxu0 0
    %2672 = vmatprep.subr.bf16.mxu0 0
    %2673 = vmatpush1.bf16.msra.mxu0 0
    %2674 = vmatprep.subr.bf16.mxu0 0
    %2675 = vmatpush1.bf16.msra.mxu0 0
    %2676 = vmatprep.mubr.bf16.mxu0 0
    %2677 = vmatmul.mubr.bf16.gmra.mrb[0].mxu0 %v2217
    %v2678 = vpop.f32.mrb[0].mxu0
    %v2679 = vadd.f32 %v2287, %v2678
    %v2680 = vpop.f32.mrb[0].mxu0
    %v2681 = vadd.f32 %v2291, %v2680
    %v2682 = vpop.f32.mrb[0].mxu0
    %v2683 = vpop.f32.mrb[0].mxu0
    %2684 = vdwg.mxu0
    %2685 = vmatprep.subr.bf16.mxu0 %v2519
    %2686 = vmatpush1.bf16.msra.mxu0 %v2518
    %2687 = vmatprep.subr.bf16.mxu0 %v2527
    %2688 = vmatpush1.bf16.msra.mxu0 %v2526
    %2689 = vmatprep.subr.bf16.mxu0 %v2535
    %2690 = vmatpush1.bf16.msra.mxu0 %v2534
    %2691 = vmatprep.subr.bf16.mxu0 %v2543
    %2692 = vmatpush1.bf16.msra.mxu0 %v2542
    %2693 = vmatprep.subr.bf16.mxu0 %v2551
    %2694 = vmatpush1.bf16.msra.mxu0 %v2550
    %2695 = vmatprep.subr.bf16.mxu0 %v2559
    %2696 = vmatpush1.bf16.msra.mxu0 %v2558
    %2697 = vmatprep.subr.bf16.mxu0 %v2567
    %2698 = vmatpush1.bf16.msra.mxu0 %v2566
    %2699 = vmatprep.subr.bf16.mxu0 %v2575
    %2700 = vmatpush1.bf16.msra.mxu0 %v2574
    %2701 = vmatprep.subr.bf16.mxu0 0
    %2702 = vmatpush1.bf16.msra.mxu0 0
    %2703 = vmatprep.subr.bf16.mxu0 0
    %2704 = vmatpush1.bf16.msra.mxu0 0
    %2705 = vmatprep.subr.bf16.mxu0 0
    %2706 = vmatpush1.bf16.msra.mxu0 0
    %2707 = vmatprep.subr.bf16.mxu0 0
    %2708 = vmatpush1.bf16.msra.mxu0 0
    %2709 = vmatprep.subr.bf16.mxu0 0
    %2710 = vmatpush1.bf16.msra.mxu0 0
    %2711 = vmatprep.subr.bf16.mxu0 0
    %2712 = vmatpush1.bf16.msra.mxu0 0
    %2713 = vmatprep.subr.bf16.mxu0 0
    %2714 = vmatpush1.bf16.msra.mxu0 0
    %2715 = vmatprep.subr.bf16.mxu0 0
    %2716 = vmatpush1.bf16.msra.mxu0 0
    %2717 = vmatprep.mubr.bf16.mxu0 0
    %2718 = vmatmul.mubr.bf16.gmra.mrb[0].mxu0 %v2217
    %v2719 = vpop.f32.mrb[0].mxu0
    %v2720 = vadd.f32 %v2295, %v2719
    %v2721 = vpop.f32.mrb[0].mxu0
    %v2722 = vadd.f32 %v2299, %v2721
    %v2723 = vpop.f32.mrb[0].mxu0
    %v2724 = vpop.f32.mrb[0].mxu0
    %2725 = vdwg.mxu0
    %2726 = vmatprep.subr.bf16.mxu0 %v2521
    %2727 = vmatpush1.bf16.msra.mxu0 %v2520
    %2728 = vmatprep.subr.bf16.mxu0 %v2529
    %2729 = vmatpush1.bf16.msra.mxu0 %v2528
    %2730 = vmatprep.subr.bf16.mxu0 %v2537
    %2731 = vmatpush1.bf16.msra.mxu0 %v2536
    %2732 = vmatprep.subr.bf16.mxu0 %v2545
    %2733 = vmatpush1.bf16.msra.mxu0 %v2544
    %2734 = vmatprep.subr.bf16.mxu0 %v2553
    %2735 = vmatpush1.bf16.msra.mxu0 %v2552
    %2736 = vmatprep.subr.bf16.mxu0 %v2561
    %2737 = vmatpush1.bf16.msra.mxu0 %v2560
    %2738 = vmatprep.subr.bf16.mxu0 %v2569
    %2739 = vmatpush1.bf16.msra.mxu0 %v2568
    %2740 = vmatprep.subr.bf16.mxu0 %v2577
    %2741 = vmatpush1.bf16.msra.mxu0 %v2576
    %2742 = vmatprep.subr.bf16.mxu0 0
    %2743 = vmatpush1.bf16.msra.mxu0 0
    %2744 = vmatprep.subr.bf16.mxu0 0
    %2745 = vmatpush1.bf16.msra.mxu0 0
    %2746 = vmatprep.subr.bf16.mxu0 0
    %2747 = vmatpush1.bf16.msra.mxu0 0
    %2748 = vmatprep.subr.bf16.mxu0 0
    %2749 = vmatpush1.bf16.msra.mxu0 0
    %2750 = vmatprep.subr.bf16.mxu0 0
    %2751 = vmatpush1.bf16.msra.mxu0 0
    %2752 = vmatprep.subr.bf16.mxu0 0
    %2753 = vmatpush1.bf16.msra.mxu0 0
    %2754 = vmatprep.subr.bf16.mxu0 0
    %2755 = vmatpush1.bf16.msra.mxu0 0
    %2756 = vmatprep.subr.bf16.mxu0 0
    %2757 = vmatpush1.bf16.msra.mxu0 0
    %2758 = vmatprep.mubr.bf16.mxu0 0
    %2759 = vmatmul.mubr.bf16.gmra.mrb[0].mxu0 %v2217
    %v2760 = vpop.f32.mrb[0].mxu0
    %v2761 = vadd.f32 %v2303, %v2760
    %v2762 = vpop.f32.mrb[0].mxu0
    %v2763 = vadd.f32 %v2307, %v2762
    %v2764 = vpop.f32.mrb[0].mxu0
    %v2765 = vpop.f32.mrb[0].mxu0
    %2766 = vdwg.mxu0
    %2767 = vmatprep.subr.bf16.mxu0 %v2523
    %2768 = vmatpush1.bf16.msra.mxu0 %v2522
    %2769 = vmatprep.subr.bf16.mxu0 %v2531
    %2770 = vmatpush1.bf16.msra.mxu0 %v2530
    %2771 = vmatprep.subr.bf16.mxu0 %v2539
    %2772 = vmatpush1.bf16.msra.mxu0 %v2538
    %2773 = vmatprep.subr.bf16.mxu0 %v2547
    %2774 = vmatpush1.bf16.msra.mxu0 %v2546
    %2775 = vmatprep.subr.bf16.mxu0 %v2555
    %2776 = vmatpush1.bf16.msra.mxu0 %v2554
    %2777 = vmatprep.subr.bf16.mxu0 %v2563
    %2778 = vmatpush1.bf16.msra.mxu0 %v2562
    %2779 = vmatprep.subr.bf16.mxu0 %v2571
    %2780 = vmatpush1.bf16.msra.mxu0 %v2570
    %2781 = vmatprep.subr.bf16.mxu0 %v2579
    %2782 = vmatpush1.bf16.msra.mxu0 %v2578
    %2783 = vmatprep.subr.bf16.mxu0 0
    %2784 = vmatpush1.bf16.msra.mxu0 0
    %2785 = vmatprep.subr.bf16.mxu0 0
    %2786 = vmatpush1.bf16.msra.mxu0 0
    %2787 = vmatprep.subr.bf16.mxu0 0
    %2788 = vmatpush1.bf16.msra.mxu0 0
    %2789 = vmatprep.subr.bf16.mxu0 0
    %2790 = vmatpush1.bf16.msra.mxu0 0
    %2791 = vmatprep.subr.bf16.mxu0 0
    %2792 = vmatpush1.bf16.msra.mxu0 0
    %2793 = vmatprep.subr.bf16.mxu0 0
    %2794 = vmatpush1.bf16.msra.mxu0 0
    %2795 = vmatprep.subr.bf16.mxu0 0
    %2796 = vmatpush1.bf16.msra.mxu0 0
    %2797 = vmatprep.subr.bf16.mxu0 0
    %2798 = vmatpush1.bf16.msra.mxu0 0
    %2799 = vmatprep.mubr.bf16.mxu0 0
    %2800 = vmatmul.mubr.bf16.gmra.mrb[0].mxu0 %v2217
    %v2801 = vpop.f32.mrb[0].mxu0
    %v2802 = vadd.f32 %v2311, %v2801
    %v2803 = vpop.f32.mrb[0].mxu0
    %v2804 = vadd.f32 %v2315, %v2803
    %v2805 = vpop.f32.mrb[0].mxu0
    %v2806 = vpop.f32.mrb[0].mxu0
    %2807 = vdwg.mxu0
    %v2808 = vadd.f32 %v2679, %v2681
    %v2809 = vadd.f32 %v2808, %v2720
    %v2810 = vadd.f32 %v2809, %v2722
    %v2811 = vadd.f32 %v2810, %v2761
    %v2812 = vadd.f32 %v2811, %v2763
    %v2813 = vadd.f32 %v2812, %v2802
    %v2814 = vadd.f32 %v2813, %v2804
    %2815 = vadd.xlane.f32.xlu0 %v2814
    %v2816 = vpop.xlane.xlu0 %2815
    %v2817 = vmul.f32 %v2679, %v2679
    %v2818 = vmul.f32 %v2681, %v2681
    %v2819 = vmul.f32 %v2720, %v2720
    %v2820 = vmul.f32 %v2722, %v2722
    %v2821 = vmul.f32 %v2761, %v2761
    %v2822 = vmul.f32 %v2763, %v2763
    %v2823 = vmul.f32 %v2802, %v2802
    %v2824 = vmul.f32 %v2804, %v2804
    %v2825 = vadd.f32 %v2817, %v2818
    %v2826 = vadd.f32 %v2825, %v2819
    %v2827 = vadd.f32 %v2826, %v2820
    %v2828 = vadd.f32 %v2827, %v2821
    %v2829 = vadd.f32 %v2828, %v2822
    %v2830 = vadd.f32 %v2829, %v2823
    %v2831 = vadd.f32 %v2830, %v2824
    %2832 = vadd.xlane.f32.xlu0 %v2831
    %v2833 = vpop.xlane.xlu0 %2832
    %v2834 = vmul.f32 %v2816, 0.0009765625
    %v2835 = vmul.f32 %v2833, 0.0009765625
    %v2836 = vmul.f32 %v2834, %v2834
    %v2837 = vsub.f32 %v2835, %v2836
    %v2838 = vmax.f32 %v2837, 0.0
    %v2839 = vld [vmem:[%s17] sm:$0xff]
    %v2840 = vadd.f32 %v2838, 1e-05
    %v2841 = vrsqrt.pop %v2840
    %v2843 = vlaneseq
    %v2844 = vshrl.u32 %v2843, 7
    %v2845 = vsub.s32 0, %v2844
    %v2846 = vrot.slane %v2839, %v2845
    %v2847 = vlaneseq
    %v2848 = vshrl.u32 %v2847, 7
    %v2849 = vsub.s32 1, %v2848
    %v2850 = vrot.slane %v2839, %v2849
    %v2851 = vlaneseq
    %v2852 = vshrl.u32 %v2851, 7
    %v2853 = vsub.s32 2, %v2852
    %v2854 = vrot.slane %v2839, %v2853
    %v2855 = vlaneseq
    %v2856 = vshrl.u32 %v2855, 7
    %v2857 = vsub.s32 3, %v2856
    %v2858 = vrot.slane %v2839, %v2857
    %v2859 = vlaneseq
    %v2860 = vshrl.u32 %v2859, 7
    %v2861 = vsub.s32 4, %v2860
    %v2862 = vrot.slane %v2839, %v2861
    %v2863 = vlaneseq
    %v2864 = vshrl.u32 %v2863, 7
    %v2865 = vsub.s32 5, %v2864
    %v2866 = vrot.slane %v2839, %v2865
    %v2867 = vlaneseq
    %v2868 = vshrl.u32 %v2867, 7
    %v2869 = vsub.s32 6, %v2868
    %v2870 = vrot.slane %v2839, %v2869
    %v2871 = vlaneseq
    %v2872 = vshrl.u32 %v2871, 7
    %v2873 = vsub.s32 7, %v2872
    %v2874 = vrot.slane %v2839, %v2873
    %v2883 = vmul.f32 %v2846, %v2841
    %v2884 = vmul.f32 %v2850, %v2841
    %v2885 = vmul.f32 %v2854, %v2841
    %v2886 = vmul.f32 %v2858, %v2841
    %v2887 = vmul.f32 %v2862, %v2841
    %v2888 = vmul.f32 %v2866, %v2841
    %v2889 = vmul.f32 %v2870, %v2841
    %v2890 = vmul.f32 %v2874, %v2841
    %v2891 = vsub.f32 %v2679, %v2834
    %v2892 = vsub.f32 %v2681, %v2834
    %v2893 = vsub.f32 %v2720, %v2834
    %v2894 = vsub.f32 %v2722, %v2834
    %v2895 = vsub.f32 %v2761, %v2834
    %v2896 = vsub.f32 %v2763, %v2834
    %v2897 = vsub.f32 %v2802, %v2834
    %v2898 = vsub.f32 %v2804, %v2834
    %v2899 = vmul.f32 %v2891, %v2883
    %v2900 = vmul.f32 %v2892, %v2884
    %v2901 = vmul.f32 %v2893, %v2885
    %v2902 = vmul.f32 %v2894, %v2886
    %v2903 = vmul.f32 %v2895, %v2887
    %v2904 = vmul.f32 %v2896, %v2888
    %v2905 = vmul.f32 %v2897, %v2889
    %v2906 = vmul.f32 %v2898, %v2890
    %v2907 = vld [vmem:[%s18] sm:$0xff]
    %v2909 = vlaneseq
    %v2910 = vshrl.u32 %v2909, 7
    %v2911 = vsub.s32 0, %v2910
    %v2912 = vrot.slane %v2907, %v2911
    %v2913 = vlaneseq
    %v2914 = vshrl.u32 %v2913, 7
    %v2915 = vsub.s32 1, %v2914
    %v2916 = vrot.slane %v2907, %v2915
    %v2917 = vlaneseq
    %v2918 = vshrl.u32 %v2917, 7
    %v2919 = vsub.s32 2, %v2918
    %v2920 = vrot.slane %v2907, %v2919
    %v2921 = vlaneseq
    %v2922 = vshrl.u32 %v2921, 7
    %v2923 = vsub.s32 3, %v2922
    %v2924 = vrot.slane %v2907, %v2923
    %v2925 = vlaneseq
    %v2926 = vshrl.u32 %v2925, 7
    %v2927 = vsub.s32 4, %v2926
    %v2928 = vrot.slane %v2907, %v2927
    %v2929 = vlaneseq
    %v2930 = vshrl.u32 %v2929, 7
    %v2931 = vsub.s32 5, %v2930
    %v2932 = vrot.slane %v2907, %v2931
    %v2933 = vlaneseq
    %v2934 = vshrl.u32 %v2933, 7
    %v2935 = vsub.s32 6, %v2934
    %v2936 = vrot.slane %v2907, %v2935
    %v2937 = vlaneseq
    %v2938 = vshrl.u32 %v2937, 7
    %v2939 = vsub.s32 7, %v2938
    %v2940 = vrot.slane %v2907, %v2939
    %v2949 = vadd.f32 %v2899, %v2912
    %v2950 = vadd.f32 %v2900, %v2916
    %v2951 = vadd.f32 %v2901, %v2920
    %v2952 = vadd.f32 %v2902, %v2924
    %v2953 = vadd.f32 %v2903, %v2928
    %v2954 = vadd.f32 %v2904, %v2932
    %v2955 = vadd.f32 %v2905, %v2936
    %v2956 = vadd.f32 %v2906, %v2940
    %v2957 = vmax.f32 %v2949, 0.0
    %v2958 = vmax.f32 %v2950, 0.0
    %v2959 = vmax.f32 %v2951, 0.0
    %v2960 = vmax.f32 %v2952, 0.0
    %v2961 = vmax.f32 %v2953, 0.0
    %v2962 = vmax.f32 %v2954, 0.0
    %v2963 = vmax.f32 %v2955, 0.0
    %v2964 = vmax.f32 %v2956, 0.0
    %v2965 = vpack.c.bf16 %v2957, %v2957
    %v2966 = vpack.c.bf16 %v2958, %v2958
    %v2967 = vpack.c.bf16 %v2959, %v2959
    %v2968 = vpack.c.bf16 %v2960, %v2960
    %v2969 = vpack.c.bf16 %v2961, %v2961
    %v2970 = vpack.c.bf16 %v2962, %v2962
    %v2971 = vpack.c.bf16 %v2963, %v2963
    %v2972 = vpack.c.bf16 %v2964, %v2964
    %v2973 = vld [vmem:[#allocation10] sm:$0xff]
    %v2974 = vld [vmem:[#allocation10 + $0x8] sm:$0xff]
    %v2975 = vld [vmem:[#allocation10 + $0x10] sm:$0xff]
    %v2976 = vld [vmem:[#allocation10 + $0x18] sm:$0xff]
    %v2977 = vld [vmem:[#allocation10 + $0x20] sm:$0xff]
    %v2978 = vld [vmem:[#allocation10 + $0x28] sm:$0xff]
    %v2979 = vld [vmem:[#allocation10 + $0x30] sm:$0xff]
    %v2980 = vld [vmem:[#allocation10 + $0x38] sm:$0xff]
    %v2981 = vld [vmem:[#allocation10 + $0x40] sm:$0xff]
    %v2982 = vld [vmem:[#allocation10 + $0x48] sm:$0xff]
    %v2983 = vld [vmem:[#allocation10 + $0x50] sm:$0xff]
    %v2984 = vld [vmem:[#allocation10 + $0x58] sm:$0xff]
    %v2985 = vld [vmem:[#allocation10 + $0x60] sm:$0xff]
    %v2986 = vld [vmem:[#allocation10 + $0x68] sm:$0xff]
    %v2987 = vld [vmem:[#allocation10 + $0x70] sm:$0xff]
    %v2988 = vld [vmem:[#allocation10 + $0x78] sm:$0xff]
    %v2989 = vld [vmem:[#allocation10 + $0x80] sm:$0xff]
    %v2990 = vld [vmem:[#allocation10 + $0x88] sm:$0xff]
    %v2991 = vld [vmem:[#allocation10 + $0x90] sm:$0xff]
    %v2992 = vld [vmem:[#allocation10 + $0x98] sm:$0xff]
    %v2993 = vld [vmem:[#allocation10 + $0xa0] sm:$0xff]
    %v2994 = vld [vmem:[#allocation10 + $0xa8] sm:$0xff]
    %v2995 = vld [vmem:[#allocation10 + $0xb0] sm:$0xff]
    %v2996 = vld [vmem:[#allocation10 + $0xb8] sm:$0xff]
    %v2997 = vld [vmem:[#allocation10 + $0xc0] sm:$0xff]
    %v2998 = vld [vmem:[#allocation10 + $0xc8] sm:$0xff]
    %v2999 = vld [vmem:[#allocation10 + $0xd0] sm:$0xff]
    %v3000 = vld [vmem:[#allocation10 + $0xd8] sm:$0xff]
    %v3001 = vld [vmem:[#allocation10 + $0xe0] sm:$0xff]
    %v3002 = vld [vmem:[#allocation10 + $0xe8] sm:$0xff]
    %v3003 = vld [vmem:[#allocation10 + $0xf0] sm:$0xff]
    %v3004 = vld [vmem:[#allocation10 + $0xf8] sm:$0xff]
    %v3005 = vld [vmem:[#allocation10 + $0x100] sm:$0xff]
    %v3006 = vld [vmem:[#allocation10 + $0x108] sm:$0xff]
    %v3007 = vld [vmem:[#allocation10 + $0x110] sm:$0xff]
    %v3008 = vld [vmem:[#allocation10 + $0x118] sm:$0xff]
    %v3009 = vld [vmem:[#allocation10 + $0x120] sm:$0xff]
    %v3010 = vld [vmem:[#allocation10 + $0x128] sm:$0xff]
    %v3011 = vld [vmem:[#allocation10 + $0x130] sm:$0xff]
    %v3012 = vld [vmem:[#allocation10 + $0x138] sm:$0xff]
    %v3013 = vld [vmem:[#allocation10 + $0x140] sm:$0xff]
    %v3014 = vld [vmem:[#allocation10 + $0x148] sm:$0xff]
    %v3015 = vld [vmem:[#allocation10 + $0x150] sm:$0xff]
    %v3016 = vld [vmem:[#allocation10 + $0x158] sm:$0xff]
    %v3017 = vld [vmem:[#allocation10 + $0x160] sm:$0xff]
    %v3018 = vld [vmem:[#allocation10 + $0x168] sm:$0xff]
    %v3019 = vld [vmem:[#allocation10 + $0x170] sm:$0xff]
    %v3020 = vld [vmem:[#allocation10 + $0x178] sm:$0xff]
    %v3021 = vld [vmem:[#allocation10 + $0x180] sm:$0xff]
    %v3022 = vld [vmem:[#allocation10 + $0x188] sm:$0xff]
    %v3023 = vld [vmem:[#allocation10 + $0x190] sm:$0xff]
    %v3024 = vld [vmem:[#allocation10 + $0x198] sm:$0xff]
    %v3025 = vld [vmem:[#allocation10 + $0x1a0] sm:$0xff]
    %v3026 = vld [vmem:[#allocation10 + $0x1a8] sm:$0xff]
    %v3027 = vld [vmem:[#allocation10 + $0x1b0] sm:$0xff]
    %v3028 = vld [vmem:[#allocation10 + $0x1b8] sm:$0xff]
    %v3029 = vld [vmem:[#allocation10 + $0x1c0] sm:$0xff]
    %v3030 = vld [vmem:[#allocation10 + $0x1c8] sm:$0xff]
    %v3031 = vld [vmem:[#allocation10 + $0x1d0] sm:$0xff]
    %v3032 = vld [vmem:[#allocation10 + $0x1d8] sm:$0xff]
    %v3033 = vld [vmem:[#allocation10 + $0x1e0] sm:$0xff]
    %v3034 = vld [vmem:[#allocation10 + $0x1e8] sm:$0xff]
    %v3035 = vld [vmem:[#allocation10 + $0x1f0] sm:$0xff]
    %v3036 = vld [vmem:[#allocation10 + $0x1f8] sm:$0xff]
    %v3037 = vld [vmem:[#allocation10 + $0x200] sm:$0xff]
    %v3038 = vld [vmem:[#allocation10 + $0x208] sm:$0xff]
    %v3039 = vld [vmem:[#allocation10 + $0x210] sm:$0xff]
    %v3040 = vld [vmem:[#allocation10 + $0x218] sm:$0xff]
    %v3041 = vld [vmem:[#allocation10 + $0x220] sm:$0xff]
    %v3042 = vld [vmem:[#allocation10 + $0x228] sm:$0xff]
    %v3043 = vld [vmem:[#allocation10 + $0x230] sm:$0xff]
    %v3044 = vld [vmem:[#allocation10 + $0x238] sm:$0xff]
    %v3045 = vld [vmem:[#allocation10 + $0x240] sm:$0xff]
    %v3046 = vld [vmem:[#allocation10 + $0x248] sm:$0xff]
    %v3047 = vld [vmem:[#allocation10 + $0x250] sm:$0xff]
    %v3048 = vld [vmem:[#allocation10 + $0x258] sm:$0xff]
    %v3049 = vld [vmem:[#allocation10 + $0x260] sm:$0xff]
    %v3050 = vld [vmem:[#allocation10 + $0x268] sm:$0xff]
    %v3051 = vld [vmem:[#allocation10 + $0x270] sm:$0xff]
    %v3052 = vld [vmem:[#allocation10 + $0x278] sm:$0xff]
    %v3053 = vld [vmem:[#allocation10 + $0x280] sm:$0xff]
    %v3054 = vld [vmem:[#allocation10 + $0x288] sm:$0xff]
    %v3055 = vld [vmem:[#allocation10 + $0x290] sm:$0xff]
    %v3056 = vld [vmem:[#allocation10 + $0x298] sm:$0xff]
    %v3057 = vld [vmem:[#allocation10 + $0x2a0] sm:$0xff]
    %v3058 = vld [vmem:[#allocation10 + $0x2a8] sm:$0xff]
    %v3059 = vld [vmem:[#allocation10 + $0x2b0] sm:$0xff]
    %v3060 = vld [vmem:[#allocation10 + $0x2b8] sm:$0xff]
    %v3061 = vld [vmem:[#allocation10 + $0x2c0] sm:$0xff]
    %v3062 = vld [vmem:[#allocation10 + $0x2c8] sm:$0xff]
    %v3063 = vld [vmem:[#allocation10 + $0x2d0] sm:$0xff]
    %v3064 = vld [vmem:[#allocation10 + $0x2d8] sm:$0xff]
    %v3065 = vld [vmem:[#allocation10 + $0x2e0] sm:$0xff]
    %v3066 = vld [vmem:[#allocation10 + $0x2e8] sm:$0xff]
    %v3067 = vld [vmem:[#allocation10 + $0x2f0] sm:$0xff]
    %v3068 = vld [vmem:[#allocation10 + $0x2f8] sm:$0xff]
    %v3069 = vld [vmem:[#allocation10 + $0x300] sm:$0xff]
    %v3070 = vld [vmem:[#allocation10 + $0x308] sm:$0xff]
    %v3071 = vld [vmem:[#allocation10 + $0x310] sm:$0xff]
    %v3072 = vld [vmem:[#allocation10 + $0x318] sm:$0xff]
    %v3073 = vld [vmem:[#allocation10 + $0x320] sm:$0xff]
    %v3074 = vld [vmem:[#allocation10 + $0x328] sm:$0xff]
    %v3075 = vld [vmem:[#allocation10 + $0x330] sm:$0xff]
    %v3076 = vld [vmem:[#allocation10 + $0x338] sm:$0xff]
    %v3077 = vld [vmem:[#allocation10 + $0x340] sm:$0xff]
    %v3078 = vld [vmem:[#allocation10 + $0x348] sm:$0xff]
    %v3079 = vld [vmem:[#allocation10 + $0x350] sm:$0xff]
    %v3080 = vld [vmem:[#allocation10 + $0x358] sm:$0xff]
    %v3081 = vld [vmem:[#allocation10 + $0x360] sm:$0xff]
    %v3082 = vld [vmem:[#allocation10 + $0x368] sm:$0xff]
    %v3083 = vld [vmem:[#allocation10 + $0x370] sm:$0xff]
    %v3084 = vld [vmem:[#allocation10 + $0x378] sm:$0xff]
    %v3085 = vld [vmem:[#allocation10 + $0x380] sm:$0xff]
    %v3086 = vld [vmem:[#allocation10 + $0x388] sm:$0xff]
    %v3087 = vld [vmem:[#allocation10 + $0x390] sm:$0xff]
    %v3088 = vld [vmem:[#allocation10 + $0x398] sm:$0xff]
    %v3089 = vld [vmem:[#allocation10 + $0x3a0] sm:$0xff]
    %v3090 = vld [vmem:[#allocation10 + $0x3a8] sm:$0xff]
    %v3091 = vld [vmem:[#allocation10 + $0x3b0] sm:$0xff]
    %v3092 = vld [vmem:[#allocation10 + $0x3b8] sm:$0xff]
    %v3093 = vld [vmem:[#allocation10 + $0x3c0] sm:$0xff]
    %v3094 = vld [vmem:[#allocation10 + $0x3c8] sm:$0xff]
    %v3095 = vld [vmem:[#allocation10 + $0x3d0] sm:$0xff]
    %v3096 = vld [vmem:[#allocation10 + $0x3d8] sm:$0xff]
    %v3097 = vld [vmem:[#allocation10 + $0x3e0] sm:$0xff]
    %v3098 = vld [vmem:[#allocation10 + $0x3e8] sm:$0xff]
    %v3099 = vld [vmem:[#allocation10 + $0x3f0] sm:$0xff]
    %v3100 = vld [vmem:[#allocation10 + $0x3f8] sm:$0xff]
    %v3101 = vld [vmem:[%s20] sm:$0x3]
    %v3103 = vlaneseq
    %v3104 = vshrl.u32 %v3103, 7
    %v3105 = vsub.s32 0, %v3104
    %v3106 = vrot.slane %v3101, %v3105
    %v3107 = vlaneseq
    %v3108 = vshrl.u32 %v3107, 7
    %v3109 = vsub.s32 1, %v3108
    %v3110 = vrot.slane %v3101, %v3109
    %v3241 = vunpack.c.l.b16 %v2973
    %v3242 = vunpack.c.h.b16 %v2973
    %v3243 = vunpack.c.l.b16 %v2974
    %v3244 = vunpack.c.h.b16 %v2974
    %v3245 = vunpack.c.l.b16 %v2975
    %v3246 = vunpack.c.h.b16 %v2975
    %v3247 = vunpack.c.l.b16 %v2976
    %v3248 = vunpack.c.h.b16 %v2976
    %v3249 = vunpack.c.l.b16 %v2977
    %v3250 = vunpack.c.h.b16 %v2977
    %v3251 = vunpack.c.l.b16 %v2978
    %v3252 = vunpack.c.h.b16 %v2978
    %v3253 = vunpack.c.l.b16 %v2979
    %v3254 = vunpack.c.h.b16 %v2979
    %v3255 = vunpack.c.l.b16 %v2980
    %v3256 = vunpack.c.h.b16 %v2980
    %v3257 = vunpack.c.l.b16 %v2981
    %v3258 = vunpack.c.h.b16 %v2981
    %v3259 = vunpack.c.l.b16 %v2982
    %v3260 = vunpack.c.h.b16 %v2982
    %v3261 = vunpack.c.l.b16 %v2983
    %v3262 = vunpack.c.h.b16 %v2983
    %v3263 = vunpack.c.l.b16 %v2984
    %v3264 = vunpack.c.h.b16 %v2984
    %v3265 = vunpack.c.l.b16 %v2985
    %v3266 = vunpack.c.h.b16 %v2985
    %v3267 = vunpack.c.l.b16 %v2986
    %v3268 = vunpack.c.h.b16 %v2986
    %v3269 = vunpack.c.l.b16 %v2987
    %v3270 = vunpack.c.h.b16 %v2987
    %v3271 = vunpack.c.l.b16 %v2988
    %v3272 = vunpack.c.h.b16 %v2988
    %v3273 = vunpack.c.l.b16 %v2989
    %v3274 = vunpack.c.h.b16 %v2989
    %v3275 = vunpack.c.l.b16 %v2990
    %v3276 = vunpack.c.h.b16 %v2990
    %v3277 = vunpack.c.l.b16 %v2991
    %v3278 = vunpack.c.h.b16 %v2991
    %v3279 = vunpack.c.l.b16 %v2992
    %v3280 = vunpack.c.h.b16 %v2992
    %v3281 = vunpack.c.l.b16 %v2993
    %v3282 = vunpack.c.h.b16 %v2993
    %v3283 = vunpack.c.l.b16 %v2994
    %v3284 = vunpack.c.h.b16 %v2994
    %v3285 = vunpack.c.l.b16 %v2995
    %v3286 = vunpack.c.h.b16 %v2995
    %v3287 = vunpack.c.l.b16 %v2996
    %v3288 = vunpack.c.h.b16 %v2996
    %v3289 = vunpack.c.l.b16 %v2997
    %v3290 = vunpack.c.h.b16 %v2997
    %v3291 = vunpack.c.l.b16 %v2998
    %v3292 = vunpack.c.h.b16 %v2998
    %v3293 = vunpack.c.l.b16 %v2999
    %v3294 = vunpack.c.h.b16 %v2999
    %v3295 = vunpack.c.l.b16 %v3000
    %v3296 = vunpack.c.h.b16 %v3000
    %v3297 = vunpack.c.l.b16 %v3001
    %v3298 = vunpack.c.h.b16 %v3001
    %v3299 = vunpack.c.l.b16 %v3002
    %v3300 = vunpack.c.h.b16 %v3002
    %v3301 = vunpack.c.l.b16 %v3003
    %v3302 = vunpack.c.h.b16 %v3003
    %v3303 = vunpack.c.l.b16 %v3004
    %v3304 = vunpack.c.h.b16 %v3004
    %v3305 = vunpack.c.l.b16 %v3005
    %v3306 = vunpack.c.h.b16 %v3005
    %v3307 = vunpack.c.l.b16 %v3006
    %v3308 = vunpack.c.h.b16 %v3006
    %v3309 = vunpack.c.l.b16 %v3007
    %v3310 = vunpack.c.h.b16 %v3007
    %v3311 = vunpack.c.l.b16 %v3008
    %v3312 = vunpack.c.h.b16 %v3008
    %v3313 = vunpack.c.l.b16 %v3009
    %v3314 = vunpack.c.h.b16 %v3009
    %v3315 = vunpack.c.l.b16 %v3010
    %v3316 = vunpack.c.h.b16 %v3010
    %v3317 = vunpack.c.l.b16 %v3011
    %v3318 = vunpack.c.h.b16 %v3011
    %v3319 = vunpack.c.l.b16 %v3012
    %v3320 = vunpack.c.h.b16 %v3012
    %v3321 = vunpack.c.l.b16 %v3013
    %v3322 = vunpack.c.h.b16 %v3013
    %v3323 = vunpack.c.l.b16 %v3014
    %v3324 = vunpack.c.h.b16 %v3014
    %v3325 = vunpack.c.l.b16 %v3015
    %v3326 = vunpack.c.h.b16 %v3015
    %v3327 = vunpack.c.l.b16 %v3016
    %v3328 = vunpack.c.h.b16 %v3016
    %v3329 = vunpack.c.l.b16 %v3017
    %v3330 = vunpack.c.h.b16 %v3017
    %v3331 = vunpack.c.l.b16 %v3018
    %v3332 = vunpack.c.h.b16 %v3018
    %v3333 = vunpack.c.l.b16 %v3019
    %v3334 = vunpack.c.h.b16 %v3019
    %v3335 = vunpack.c.l.b16 %v3020
    %v3336 = vunpack.c.h.b16 %v3020
    %v3337 = vunpack.c.l.b16 %v3021
    %v3338 = vunpack.c.h.b16 %v3021
    %v3339 = vunpack.c.l.b16 %v3022
    %v3340 = vunpack.c.h.b16 %v3022
    %v3341 = vunpack.c.l.b16 %v3023
    %v3342 = vunpack.c.h.b16 %v3023
    %v3343 = vunpack.c.l.b16 %v3024
    %v3344 = vunpack.c.h.b16 %v3024
    %v3345 = vunpack.c.l.b16 %v3025
    %v3346 = vunpack.c.h.b16 %v3025
    %v3347 = vunpack.c.l.b16 %v3026
    %v3348 = vunpack.c.h.b16 %v3026
    %v3349 = vunpack.c.l.b16 %v3027
    %v3350 = vunpack.c.h.b16 %v3027
    %v3351 = vunpack.c.l.b16 %v3028
    %v3352 = vunpack.c.h.b16 %v3028
    %v3353 = vunpack.c.l.b16 %v3029
    %v3354 = vunpack.c.h.b16 %v3029
    %v3355 = vunpack.c.l.b16 %v3030
    %v3356 = vunpack.c.h.b16 %v3030
    %v3357 = vunpack.c.l.b16 %v3031
    %v3358 = vunpack.c.h.b16 %v3031
    %v3359 = vunpack.c.l.b16 %v3032
    %v3360 = vunpack.c.h.b16 %v3032
    %v3361 = vunpack.c.l.b16 %v3033
    %v3362 = vunpack.c.h.b16 %v3033
    %v3363 = vunpack.c.l.b16 %v3034
    %v3364 = vunpack.c.h.b16 %v3034
    %v3365 = vunpack.c.l.b16 %v3035
    %v3366 = vunpack.c.h.b16 %v3035
    %v3367 = vunpack.c.l.b16 %v3036
    %v3368 = vunpack.c.h.b16 %v3036
    %v3369 = vunpack.c.l.b16 %v3037
    %v3370 = vunpack.c.h.b16 %v3037
    %v3371 = vunpack.c.l.b16 %v3038
    %v3372 = vunpack.c.h.b16 %v3038
    %v3373 = vunpack.c.l.b16 %v3039
    %v3374 = vunpack.c.h.b16 %v3039
    %v3375 = vunpack.c.l.b16 %v3040
    %v3376 = vunpack.c.h.b16 %v3040
    %v3377 = vunpack.c.l.b16 %v3041
    %v3378 = vunpack.c.h.b16 %v3041
    %v3379 = vunpack.c.l.b16 %v3042
    %v3380 = vunpack.c.h.b16 %v3042
    %v3381 = vunpack.c.l.b16 %v3043
    %v3382 = vunpack.c.h.b16 %v3043
    %v3383 = vunpack.c.l.b16 %v3044
    %v3384 = vunpack.c.h.b16 %v3044
    %v3385 = vunpack.c.l.b16 %v3045
    %v3386 = vunpack.c.h.b16 %v3045
    %v3387 = vunpack.c.l.b16 %v3046
    %v3388 = vunpack.c.h.b16 %v3046
    %v3389 = vunpack.c.l.b16 %v3047
    %v3390 = vunpack.c.h.b16 %v3047
    %v3391 = vunpack.c.l.b16 %v3048
    %v3392 = vunpack.c.h.b16 %v3048
    %v3393 = vunpack.c.l.b16 %v3049
    %v3394 = vunpack.c.h.b16 %v3049
    %v3395 = vunpack.c.l.b16 %v3050
    %v3396 = vunpack.c.h.b16 %v3050
    %v3397 = vunpack.c.l.b16 %v3051
    %v3398 = vunpack.c.h.b16 %v3051
    %v3399 = vunpack.c.l.b16 %v3052
    %v3400 = vunpack.c.h.b16 %v3052
    %v3401 = vunpack.c.l.b16 %v3053
    %v3402 = vunpack.c.h.b16 %v3053
    %v3403 = vunpack.c.l.b16 %v3054
    %v3404 = vunpack.c.h.b16 %v3054
    %v3405 = vunpack.c.l.b16 %v3055
    %v3406 = vunpack.c.h.b16 %v3055
    %v3407 = vunpack.c.l.b16 %v3056
    %v3408 = vunpack.c.h.b16 %v3056
    %v3409 = vunpack.c.l.b16 %v3057
    %v3410 = vunpack.c.h.b16 %v3057
    %v3411 = vunpack.c.l.b16 %v3058
    %v3412 = vunpack.c.h.b16 %v3058
    %v3413 = vunpack.c.l.b16 %v3059
    %v3414 = vunpack.c.h.b16 %v3059
    %v3415 = vunpack.c.l.b16 %v3060
    %v3416 = vunpack.c.h.b16 %v3060
    %v3417 = vunpack.c.l.b16 %v3061
    %v3418 = vunpack.c.h.b16 %v3061
    %v3419 = vunpack.c.l.b16 %v3062
    %v3420 = vunpack.c.h.b16 %v3062
    %v3421 = vunpack.c.l.b16 %v3063
    %v3422 = vunpack.c.h.b16 %v3063
    %v3423 = vunpack.c.l.b16 %v3064
    %v3424 = vunpack.c.h.b16 %v3064
    %v3425 = vunpack.c.l.b16 %v3065
    %v3426 = vunpack.c.h.b16 %v3065
    %v3427 = vunpack.c.l.b16 %v3066
    %v3428 = vunpack.c.h.b16 %v3066
    %v3429 = vunpack.c.l.b16 %v3067
    %v3430 = vunpack.c.h.b16 %v3067
    %v3431 = vunpack.c.l.b16 %v3068
    %v3432 = vunpack.c.h.b16 %v3068
    %v3433 = vunpack.c.l.b16 %v3069
    %v3434 = vunpack.c.h.b16 %v3069
    %v3435 = vunpack.c.l.b16 %v3070
    %v3436 = vunpack.c.h.b16 %v3070
    %v3437 = vunpack.c.l.b16 %v3071
    %v3438 = vunpack.c.h.b16 %v3071
    %v3439 = vunpack.c.l.b16 %v3072
    %v3440 = vunpack.c.h.b16 %v3072
    %v3441 = vunpack.c.l.b16 %v3073
    %v3442 = vunpack.c.h.b16 %v3073
    %v3443 = vunpack.c.l.b16 %v3074
    %v3444 = vunpack.c.h.b16 %v3074
    %v3445 = vunpack.c.l.b16 %v3075
    %v3446 = vunpack.c.h.b16 %v3075
    %v3447 = vunpack.c.l.b16 %v3076
    %v3448 = vunpack.c.h.b16 %v3076
    %v3449 = vunpack.c.l.b16 %v3077
    %v3450 = vunpack.c.h.b16 %v3077
    %v3451 = vunpack.c.l.b16 %v3078
    %v3452 = vunpack.c.h.b16 %v3078
    %v3453 = vunpack.c.l.b16 %v3079
    %v3454 = vunpack.c.h.b16 %v3079
    %v3455 = vunpack.c.l.b16 %v3080
    %v3456 = vunpack.c.h.b16 %v3080
    %v3457 = vunpack.c.l.b16 %v3081
    %v3458 = vunpack.c.h.b16 %v3081
    %v3459 = vunpack.c.l.b16 %v3082
    %v3460 = vunpack.c.h.b16 %v3082
    %v3461 = vunpack.c.l.b16 %v3083
    %v3462 = vunpack.c.h.b16 %v3083
    %v3463 = vunpack.c.l.b16 %v3084
    %v3464 = vunpack.c.h.b16 %v3084
    %v3465 = vunpack.c.l.b16 %v3085
    %v3466 = vunpack.c.h.b16 %v3085
    %v3467 = vunpack.c.l.b16 %v3086
    %v3468 = vunpack.c.h.b16 %v3086
    %v3469 = vunpack.c.l.b16 %v3087
    %v3470 = vunpack.c.h.b16 %v3087
    %v3471 = vunpack.c.l.b16 %v3088
    %v3472 = vunpack.c.h.b16 %v3088
    %v3473 = vunpack.c.l.b16 %v3089
    %v3474 = vunpack.c.h.b16 %v3089
    %v3475 = vunpack.c.l.b16 %v3090
    %v3476 = vunpack.c.h.b16 %v3090
    %v3477 = vunpack.c.l.b16 %v3091
    %v3478 = vunpack.c.h.b16 %v3091
    %v3479 = vunpack.c.l.b16 %v3092
    %v3480 = vunpack.c.h.b16 %v3092
    %v3481 = vunpack.c.l.b16 %v3093
    %v3482 = vunpack.c.h.b16 %v3093
    %v3483 = vunpack.c.l.b16 %v3094
    %v3484 = vunpack.c.h.b16 %v3094
    %v3485 = vunpack.c.l.b16 %v3095
    %v3486 = vunpack.c.h.b16 %v3095
    %v3487 = vunpack.c.l.b16 %v3096
    %v3488 = vunpack.c.h.b16 %v3096
    %v3489 = vunpack.c.l.b16 %v3097
    %v3490 = vunpack.c.h.b16 %v3097
    %v3491 = vunpack.c.l.b16 %v3098
    %v3492 = vunpack.c.h.b16 %v3098
    %v3493 = vunpack.c.l.b16 %v3099
    %v3494 = vunpack.c.h.b16 %v3099
    %v3495 = vunpack.c.l.b16 %v3100
    %v3496 = vunpack.c.h.b16 %v3100
    %v3497 = vpack.c.b16 %v3243, %v3241
    %v3498 = vpack.c.b16 %v3244, %v3242
    %v3499 = vpack.c.b16 %v3247, %v3245
    %v3500 = vpack.c.b16 %v3248, %v3246
    %v3501 = vpack.c.b16 %v3251, %v3249
    %v3502 = vpack.c.b16 %v3252, %v3250
    %v3503 = vpack.c.b16 %v3255, %v3253
    %v3504 = vpack.c.b16 %v3256, %v3254
    %v3505 = vpack.c.b16 %v3259, %v3257
    %v3506 = vpack.c.b16 %v3260, %v3258
    %v3507 = vpack.c.b16 %v3263, %v3261
    %v3508 = vpack.c.b16 %v3264, %v3262
    %v3509 = vpack.c.b16 %v3267, %v3265
    %v3510 = vpack.c.b16 %v3268, %v3266
    %v3511 = vpack.c.b16 %v3271, %v3269
    %v3512 = vpack.c.b16 %v3272, %v3270
    %v3513 = vpack.c.b16 %v3275, %v3273
    %v3514 = vpack.c.b16 %v3276, %v3274
    %v3515 = vpack.c.b16 %v3279, %v3277
    %v3516 = vpack.c.b16 %v3280, %v3278
    %v3517 = vpack.c.b16 %v3283, %v3281
    %v3518 = vpack.c.b16 %v3284, %v3282
    %v3519 = vpack.c.b16 %v3287, %v3285
    %v3520 = vpack.c.b16 %v3288, %v3286
    %v3521 = vpack.c.b16 %v3291, %v3289
    %v3522 = vpack.c.b16 %v3292, %v3290
    %v3523 = vpack.c.b16 %v3295, %v3293
    %v3524 = vpack.c.b16 %v3296, %v3294
    %v3525 = vpack.c.b16 %v3299, %v3297
    %v3526 = vpack.c.b16 %v3300, %v3298
    %v3527 = vpack.c.b16 %v3303, %v3301
    %v3528 = vpack.c.b16 %v3304, %v3302
    %v3529 = vpack.c.b16 %v3307, %v3305
    %v3530 = vpack.c.b16 %v3308, %v3306
    %v3531 = vpack.c.b16 %v3311, %v3309
    %v3532 = vpack.c.b16 %v3312, %v3310
    %v3533 = vpack.c.b16 %v3315, %v3313
    %v3534 = vpack.c.b16 %v3316, %v3314
    %v3535 = vpack.c.b16 %v3319, %v3317
    %v3536 = vpack.c.b16 %v3320, %v3318
    %v3537 = vpack.c.b16 %v3323, %v3321
    %v3538 = vpack.c.b16 %v3324, %v3322
    %v3539 = vpack.c.b16 %v3327, %v3325
    %v3540 = vpack.c.b16 %v3328, %v3326
    %v3541 = vpack.c.b16 %v3331, %v3329
    %v3542 = vpack.c.b16 %v3332, %v3330
    %v3543 = vpack.c.b16 %v3335, %v3333
    %v3544 = vpack.c.b16 %v3336, %v3334
    %v3545 = vpack.c.b16 %v3339, %v3337
    %v3546 = vpack.c.b16 %v3340, %v3338
    %v3547 = vpack.c.b16 %v3343, %v3341
    %v3548 = vpack.c.b16 %v3344, %v3342
    %v3549 = vpack.c.b16 %v3347, %v3345
    %v3550 = vpack.c.b16 %v3348, %v3346
    %v3551 = vpack.c.b16 %v3351, %v3349
    %v3552 = vpack.c.b16 %v3352, %v3350
    %v3553 = vpack.c.b16 %v3355, %v3353
    %v3554 = vpack.c.b16 %v3356, %v3354
    %v3555 = vpack.c.b16 %v3359, %v3357
    %v3556 = vpack.c.b16 %v3360, %v3358
    %v3557 = vpack.c.b16 %v3363, %v3361
    %v3558 = vpack.c.b16 %v3364, %v3362
    %v3559 = vpack.c.b16 %v3367, %v3365
    %v3560 = vpack.c.b16 %v3368, %v3366
    %v3561 = vpack.c.b16 %v3371, %v3369
    %v3562 = vpack.c.b16 %v3372, %v3370
    %v3563 = vpack.c.b16 %v3375, %v3373
    %v3564 = vpack.c.b16 %v3376, %v3374
    %v3565 = vpack.c.b16 %v3379, %v3377
    %v3566 = vpack.c.b16 %v3380, %v3378
    %v3567 = vpack.c.b16 %v3383, %v3381
    %v3568 = vpack.c.b16 %v3384, %v3382
    %v3569 = vpack.c.b16 %v3387, %v3385
    %v3570 = vpack.c.b16 %v3388, %v3386
    %v3571 = vpack.c.b16 %v3391, %v3389
    %v3572 = vpack.c.b16 %v3392, %v3390
    %v3573 = vpack.c.b16 %v3395, %v3393
    %v3574 = vpack.c.b16 %v3396, %v3394
    %v3575 = vpack.c.b16 %v3399, %v3397
    %v3576 = vpack.c.b16 %v3400, %v3398
    %v3577 = vpack.c.b16 %v3403, %v3401
    %v3578 = vpack.c.b16 %v3404, %v3402
    %v3579 = vpack.c.b16 %v3407, %v3405
    %v3580 = vpack.c.b16 %v3408, %v3406
    %v3581 = vpack.c.b16 %v3411, %v3409
    %v3582 = vpack.c.b16 %v3412, %v3410
    %v3583 = vpack.c.b16 %v3415, %v3413
    %v3584 = vpack.c.b16 %v3416, %v3414
    %v3585 = vpack.c.b16 %v3419, %v3417
    %v3586 = vpack.c.b16 %v3420, %v3418
    %v3587 = vpack.c.b16 %v3423, %v3421
    %v3588 = vpack.c.b16 %v3424, %v3422
    %v3589 = vpack.c.b16 %v3427, %v3425
    %v3590 = vpack.c.b16 %v3428, %v3426
    %v3591 = vpack.c.b16 %v3431, %v3429
    %v3592 = vpack.c.b16 %v3432, %v3430
    %v3593 = vpack.c.b16 %v3435, %v3433
    %v3594 = vpack.c.b16 %v3436, %v3434
    %v3595 = vpack.c.b16 %v3439, %v3437
    %v3596 = vpack.c.b16 %v3440, %v3438
    %v3597 = vpack.c.b16 %v3443, %v3441
    %v3598 = vpack.c.b16 %v3444, %v3442
    %v3599 = vpack.c.b16 %v3447, %v3445
    %v3600 = vpack.c.b16 %v3448, %v3446
    %v3601 = vpack.c.b16 %v3451, %v3449
    %v3602 = vpack.c.b16 %v3452, %v3450
    %v3603 = vpack.c.b16 %v3455, %v3453
    %v3604 = vpack.c.b16 %v3456, %v3454
    %v3605 = vpack.c.b16 %v3459, %v3457
    %v3606 = vpack.c.b16 %v3460, %v3458
    %v3607 = vpack.c.b16 %v3463, %v3461
    %v3608 = vpack.c.b16 %v3464, %v3462
    %v3609 = vpack.c.b16 %v3467, %v3465
    %v3610 = vpack.c.b16 %v3468, %v3466
    %v3611 = vpack.c.b16 %v3471, %v3469
    %v3612 = vpack.c.b16 %v3472, %v3470
    %v3613 = vpack.c.b16 %v3475, %v3473
    %v3614 = vpack.c.b16 %v3476, %v3474
    %v3615 = vpack.c.b16 %v3479, %v3477
    %v3616 = vpack.c.b16 %v3480, %v3478
    %v3617 = vpack.c.b16 %v3483, %v3481
    %v3618 = vpack.c.b16 %v3484, %v3482
    %v3619 = vpack.c.b16 %v3487, %v3485
    %v3620 = vpack.c.b16 %v3488, %v3486
    %v3621 = vpack.c.b16 %v3491, %v3489
    %v3622 = vpack.c.b16 %v3492, %v3490
    %v3623 = vpack.c.b16 %v3495, %v3493
    %v3624 = vpack.c.b16 %v3496, %v3494
    %3753 = vmatprep.subr.bf16.mxu0 %v3498
    %3754 = vmatpush1.bf16.msra.mxu0 %v3497
    %3755 = vmatprep.subr.bf16.mxu0 %v3500
    %3756 = vmatpush1.bf16.msra.mxu0 %v3499
    %3757 = vmatprep.subr.bf16.mxu0 %v3502
    %3758 = vmatpush1.bf16.msra.mxu0 %v3501
    %3759 = vmatprep.subr.bf16.mxu0 %v3504
    %3760 = vmatpush1.bf16.msra.mxu0 %v3503
    %3761 = vmatprep.subr.bf16.mxu0 %v3506
    %3762 = vmatpush1.bf16.msra.mxu0 %v3505
    %3763 = vmatprep.subr.bf16.mxu0 %v3508
    %3764 = vmatpush1.bf16.msra.mxu0 %v3507
    %3765 = vmatprep.subr.bf16.mxu0 %v3510
    %3766 = vmatpush1.bf16.msra.mxu0 %v3509
    %3767 = vmatprep.subr.bf16.mxu0 %v3512
    %3768 = vmatpush1.bf16.msra.mxu0 %v3511
    %3769 = vmatprep.subr.bf16.mxu0 %v3514
    %3770 = vmatpush1.bf16.msra.mxu0 %v3513
    %3771 = vmatprep.subr.bf16.mxu0 %v3516
    %3772 = vmatpush1.bf16.msra.mxu0 %v3515
    %3773 = vmatprep.subr.bf16.mxu0 %v3518
    %3774 = vmatpush1.bf16.msra.mxu0 %v3517
    %3775 = vmatprep.subr.bf16.mxu0 %v3520
    %3776 = vmatpush1.bf16.msra.mxu0 %v3519
    %3777 = vmatprep.subr.bf16.mxu0 %v3522
    %3778 = vmatpush1.bf16.msra.mxu0 %v3521
    %3779 = vmatprep.subr.bf16.mxu0 %v3524
    %3780 = vmatpush1.bf16.msra.mxu0 %v3523
    %3781 = vmatprep.subr.bf16.mxu0 %v3526
    %3782 = vmatpush1.bf16.msra.mxu0 %v3525
    %3783 = vmatprep.subr.bf16.mxu0 %v3528
    %3784 = vmatpush1.bf16.msra.mxu0 %v3527
    %3785 = vmatprep.mubr.bf16.mxu0 %v2966
    %3786 = vmatmul.mubr.bf16.gmra.mrb[0].mxu0 %v2965
    %v3787 = vpop.f32.mrb[0].mxu0
    %v3788 = vadd.f32 %v3106, %v3787
    %v3789 = vpop.f32.mrb[0].mxu0
    %v3790 = vadd.f32 %v3110, %v3789
    %v3791 = vpop.f32.mrb[0].mxu0
    %v3792 = vpop.f32.mrb[0].mxu0
    %3793 = vdwg.mxu0
    %3794 = vmatprep.subr.bf16.mxu0 %v3530
    %3795 = vmatpush1.bf16.msra.mxu0 %v3529
    %3796 = vmatprep.subr.bf16.mxu0 %v3532
    %3797 = vmatpush1.bf16.msra.mxu0 %v3531
    %3798 = vmatprep.subr.bf16.mxu0 %v3534
    %3799 = vmatpush1.bf16.msra.mxu0 %v3533
    %3800 = vmatprep.subr.bf16.mxu0 %v3536
    %3801 = vmatpush1.bf16.msra.mxu0 %v3535
    %3802 = vmatprep.subr.bf16.mxu0 %v3538
    %3803 = vmatpush1.bf16.msra.mxu0 %v3537
    %3804 = vmatprep.subr.bf16.mxu0 %v3540
    %3805 = vmatpush1.bf16.msra.mxu0 %v3539
    %3806 = vmatprep.subr.bf16.mxu0 %v3542
    %3807 = vmatpush1.bf16.msra.mxu0 %v3541
    %3808 = vmatprep.subr.bf16.mxu0 %v3544
    %3809 = vmatpush1.bf16.msra.mxu0 %v3543
    %3810 = vmatprep.subr.bf16.mxu0 %v3546
    %3811 = vmatpush1.bf16.msra.mxu0 %v3545
    %3812 = vmatprep.subr.bf16.mxu0 %v3548
    %3813 = vmatpush1.bf16.msra.mxu0 %v3547
    %3814 = vmatprep.subr.bf16.mxu0 %v3550
    %3815 = vmatpush1.bf16.msra.mxu0 %v3549
    %3816 = vmatprep.subr.bf16.mxu0 %v3552
    %3817 = vmatpush1.bf16.msra.mxu0 %v3551
    %3818 = vmatprep.subr.bf16.mxu0 %v3554
    %3819 = vmatpush1.bf16.msra.mxu0 %v3553
    %3820 = vmatprep.subr.bf16.mxu0 %v3556
    %3821 = vmatpush1.bf16.msra.mxu0 %v3555
    %3822 = vmatprep.subr.bf16.mxu0 %v3558
    %3823 = vmatpush1.bf16.msra.mxu0 %v3557
    %3824 = vmatprep.subr.bf16.mxu0 %v3560
    %3825 = vmatpush1.bf16.msra.mxu0 %v3559
    %3826 = vmatprep.mubr.bf16.mxu0 %v2968
    %3827 = vmatmul.mubr.bf16.gmra.mrb[0].mxu0 %v2967
    %v3828 = vpop.f32.mrb[0].mxu0
    %v3829 = vadd.f32 %v3788, %v3828
    %v3830 = vpop.f32.mrb[0].mxu0
    %v3831 = vadd.f32 %v3790, %v3830
    %v3832 = vpop.f32.mrb[0].mxu0
    %v3833 = vpop.f32.mrb[0].mxu0
    %3834 = vdwg.mxu0
    %3835 = vmatprep.subr.bf16.mxu0 %v3562
    %3836 = vmatpush1.bf16.msra.mxu0 %v3561
    %3837 = vmatprep.subr.bf16.mxu0 %v3564
    %3838 = vmatpush1.bf16.msra.mxu0 %v3563
    %3839 = vmatprep.subr.bf16.mxu0 %v3566
    %3840 = vmatpush1.bf16.msra.mxu0 %v3565
    %3841 = vmatprep.subr.bf16.mxu0 %v3568
    %3842 = vmatpush1.bf16.msra.mxu0 %v3567
    %3843 = vmatprep.subr.bf16.mxu0 %v3570
    %3844 = vmatpush1.bf16.msra.mxu0 %v3569
    %3845 = vmatprep.subr.bf16.mxu0 %v3572
    %3846 = vmatpush1.bf16.msra.mxu0 %v3571
    %3847 = vmatprep.subr.bf16.mxu0 %v3574
    %3848 = vmatpush1.bf16.msra.mxu0 %v3573
    %3849 = vmatprep.subr.bf16.mxu0 %v3576
    %3850 = vmatpush1.bf16.msra.mxu0 %v3575
    %3851 = vmatprep.subr.bf16.mxu0 %v3578
    %3852 = vmatpush1.bf16.msra.mxu0 %v3577
    %3853 = vmatprep.subr.bf16.mxu0 %v3580
    %3854 = vmatpush1.bf16.msra.mxu0 %v3579
    %3855 = vmatprep.subr.bf16.mxu0 %v3582
    %3856 = vmatpush1.bf16.msra.mxu0 %v3581
    %3857 = vmatprep.subr.bf16.mxu0 %v3584
    %3858 = vmatpush1.bf16.msra.mxu0 %v3583
    %3859 = vmatprep.subr.bf16.mxu0 %v3586
    %3860 = vmatpush1.bf16.msra.mxu0 %v3585
    %3861 = vmatprep.subr.bf16.mxu0 %v3588
    %3862 = vmatpush1.bf16.msra.mxu0 %v3587
    %3863 = vmatprep.subr.bf16.mxu0 %v3590
    %3864 = vmatpush1.bf16.msra.mxu0 %v3589
    %3865 = vmatprep.subr.bf16.mxu0 %v3592
    %3866 = vmatpush1.bf16.msra.mxu0 %v3591
    %3867 = vmatprep.mubr.bf16.mxu0 %v2970
    %3868 = vmatmul.mubr.bf16.gmra.mrb[0].mxu0 %v2969
    %v3869 = vpop.f32.mrb[0].mxu0
    %v3870 = vadd.f32 %v3829, %v3869
    %v3871 = vpop.f32.mrb[0].mxu0
    %v3872 = vadd.f32 %v3831, %v3871
    %v3873 = vpop.f32.mrb[0].mxu0
    %v3874 = vpop.f32.mrb[0].mxu0
    %3875 = vdwg.mxu0
    %3876 = vmatprep.subr.bf16.mxu0 %v3594
    %3877 = vmatpush1.bf16.msra.mxu0 %v3593
    %3878 = vmatprep.subr.bf16.mxu0 %v3596
    %3879 = vmatpush1.bf16.msra.mxu0 %v3595
    %3880 = vmatprep.subr.bf16.mxu0 %v3598
    %3881 = vmatpush1.bf16.msra.mxu0 %v3597
    %3882 = vmatprep.subr.bf16.mxu0 %v3600
    %3883 = vmatpush1.bf16.msra.mxu0 %v3599
    %3884 = vmatprep.subr.bf16.mxu0 %v3602
    %3885 = vmatpush1.bf16.msra.mxu0 %v3601
    %3886 = vmatprep.subr.bf16.mxu0 %v3604
    %3887 = vmatpush1.bf16.msra.mxu0 %v3603
    %3888 = vmatprep.subr.bf16.mxu0 %v3606
    %3889 = vmatpush1.bf16.msra.mxu0 %v3605
    %3890 = vmatprep.subr.bf16.mxu0 %v3608
    %3891 = vmatpush1.bf16.msra.mxu0 %v3607
    %3892 = vmatprep.subr.bf16.mxu0 %v3610
    %3893 = vmatpush1.bf16.msra.mxu0 %v3609
    %3894 = vmatprep.subr.bf16.mxu0 %v3612
    %3895 = vmatpush1.bf16.msra.mxu0 %v3611
    %3896 = vmatprep.subr.bf16.mxu0 %v3614
    %3897 = vmatpush1.bf16.msra.mxu0 %v3613
    %3898 = vmatprep.subr.bf16.mxu0 %v3616
    %3899 = vmatpush1.bf16.msra.mxu0 %v3615
    %3900 = vmatprep.subr.bf16.mxu0 %v3618
    %3901 = vmatpush1.bf16.msra.mxu0 %v3617
    %3902 = vmatprep.subr.bf16.mxu0 %v3620
    %3903 = vmatpush1.bf16.msra.mxu0 %v3619
    %3904 = vmatprep.subr.bf16.mxu0 %v3622
    %3905 = vmatpush1.bf16.msra.mxu0 %v3621
    %3906 = vmatprep.subr.bf16.mxu0 %v3624
    %3907 = vmatpush1.bf16.msra.mxu0 %v3623
    %3908 = vmatprep.mubr.bf16.mxu0 %v2972
    %3909 = vmatmul.mubr.bf16.gmra.mrb[0].mxu0 %v2971
    %v3910 = vpop.f32.mrb[0].mxu0
    %v3911 = vadd.f32 %v3870, %v3910
    %v3912 = vpop.f32.mrb[0].mxu0
    %v3913 = vadd.f32 %v3872, %v3912
    %v3914 = vpop.f32.mrb[0].mxu0
    %v3915 = vpop.f32.mrb[0].mxu0
    %3916 = vdwg.mxu0
    %v3917 = vtanh.pop %v3911
    %v3918 = vtanh.pop %v3913
    %3919 = vst [vmem:[#allocation11] sm:$0xff] %v3917
    %3920 = vst [vmem:[#allocation11 + $0x8] sm:$0xff] %v3918
    // Predicated region
    $region106: #{ae_forward.1} parent=1 // pred_check
      _
    $region107: #{ae_forward.1} parent=1 // pred_check_branch
      %3922 = sbr.rel (0) target = $region109
    $region108: #{ae_forward.1} parent=1 // pred_region
      %s3924 = ssub.s32 256, 256
      %3925 = vsyncadd [#allocation4], %s3924
      %s3927 = sshll.u32 [#allocation11], 4
      %s3928 = int_to_ptr.vmem [resolvable:$true] %s3927
      %3930 = dma.vmem_to_hbm [thread:$0]  %s3928, 256, %s21, [#allocation4]
    $region109: #{ae_forward.1} parent=1 // pred_fallthru
      _
    // Predicated region
    $region110: #{ae_forward.1} parent=1 // pred_check
      _
    $region111: #{ae_forward.1} parent=1 // pred_check_branch
      %3932 = sbr.rel (0) target = $region113
    $region112: #{ae_forward.1} parent=1 // pred_region
      %3933 = dma.done [#allocation4], 256
    $region113: #{ae_forward.1} parent=1 // pred_fallthru
      _
    %3934 = vsyncpa [#allocation3], 1
    %3935 = vsyncpa [#allocation6], 1
    %3936 = vsyncpa [#allocation9], 1
    %3937 = vsyncpa [#allocation4], 1

</llo_original>
